<compile_context>
chip_gen: v5e
topology: v5e:2x2
jax: 0.10.0
libtpu: 0.0.40
codegen_flags: <defaults>
</compile_context>

<pallas_src>
import functools
import numpy as np
import jax
import jax.numpy as jnp
from jax.experimental import pallas as pl
from jax.experimental.pallas import tpu as pltpu


def _round_up(x, m):
    return ((x + m - 1) // m) * m


# ----------------------------------------------------------------------------
# Pallas kernel: full forward pass for one batch tile
# ----------------------------------------------------------------------------
def _full_model_kernel(
    x_ref,                                   # (2, TB, G) stacked drug_a / drug_b, bf16
    # autoencoder encoder (BN folded into the first two linears)
    we1, be1, we2, be2, we3, be3,
    # autoencoder decoder
    wd1, bd1, wd2, bd2, wd3, bd3,
    # predictor: input LayerNorm (padding-aware mask carries 1/latent_true)
    lng, lnb, ln_mask,
    # predictor: self-attention V projection (Q/K removed: seq_len == 1)
    wv, bv,
    # predictor MLP (BN folded) + final linear
    wp1, bp1, wp2, bp2, wp3, bp3, wp4, bp4,
    # residual gate (row-vector form for a VPU dot)
    wg, bg,
    out_ref,
):
    def linear(x, w_ref, b_ref):
        # bf16 MXU inputs/weights, f32 accumulation, f32 bias add.
        return (jnp.dot(x.astype(w_ref.dtype), w_ref[...],
                        preferred_element_type=jnp.float32) + b_ref[...])

    relu = lambda v: jnp.maximum(v, 0.0)

    two, tb, g = x_ref.shape
    # Layout-free flatten (tb % 8 == 0): both drugs share every MXU pass below.
    x = x_ref[...].reshape(two * tb, g)                          # (2*TB, G)

    # --- autoencoder encode ---------------------------------------------------
    h = relu(linear(x, we1, be1))
    h = relu(linear(h, we2, be2))
    z = linear(h, we3, be3)                                      # (2*TB, L_pad)

    # --- predictor: input LayerNorm over the TRUE latent lanes ----------------
    mu = jnp.sum(z * ln_mask[...], axis=-1, keepdims=True)
    var = jnp.sum(z * z * ln_mask[...], axis=-1, keepdims=True) - mu * mu
    zn = (z - mu) * jax.lax.rsqrt(var + 1e-5) * lng[...] + lnb[...]

    # --- self-attention at seq_len == 1: softmax over one key == 1 ------------
    att = linear(zn, wv, bv)                                     # (2*TB, L_pad)

    a_att = att[:tb]
    b_att = att[tb:]
    fused = a_att + b_att        # 'add' fusion; also the additive residual baseline

    # --- predictor MLP (BN folded, dropout identity in eval) ------------------
    p = relu(linear(fused, wp1, bp1))
    p = relu(linear(p, wp2, bp2))
    p = relu(linear(p, wp3, bp3))
    prediction = linear(p, wp4, bp4)

    # --- residual gate: N == 1, so do a VPU cross-lane dot, not an MXU matmul -
    gate = jax.nn.sigmoid(
        jnp.sum(fused * wg[...], axis=-1, keepdims=True) + bg[...])
    combination_latent = gate * prediction + (1.0 - gate) * fused

    # --- autoencoder decode ----------------------------------------------------
    d = relu(linear(combination_latent, wd1, bd1))
    d = relu(linear(d, wd2, bd2))
    out_ref[...] = linear(d, wd3, bd3).astype(out_ref.dtype)


# ----------------------------------------------------------------------------
# Wrapper: batch-tiled, parallel grid, single-buffered VMEM-resident weights
# ----------------------------------------------------------------------------
@functools.partial(jax.jit, static_argnames=("batch_tile", "out_dtype"))
def full_model_forward(drug_a, drug_b, params, *, batch_tile=None,
                       out_dtype=jnp.bfloat16):
    batch, gene_dim = drug_a.shape
    g_pad = int(params[0].shape[0])          # we1 rows == lane-padded gene dim

    # Lane-pad inputs to the padded gene dim and pre-cast to bf16 (MXU dtype).
    if gene_dim < g_pad:
        drug_a = jnp.pad(drug_a, ((0, 0), (0, g_pad - gene_dim)))
        drug_b = jnp.pad(drug_b, ((0, 0), (0, g_pad - gene_dim)))
    x = jnp.stack([drug_a, drug_b], axis=0).astype(jnp.bfloat16)   # (2, batch, G)

    # ---------------- VMEM budget (chip-derived) & tile selection --------------
    param_bytes = sum(int(np.prod(p.shape)) * p.dtype.itemsize for p in params)
    widest = max(g_pad, *(int(p.shape[-1]) for p in params))
    in_isz = jnp.dtype(jnp.bfloat16).itemsize
    out_isz = jnp.dtype(out_dtype).itemsize

    def footprint(t):
        io_in = 2 * (2 * t * g_pad) * in_isz       # stacked input, double-buffered
        io_out = 2 * (t * g_pad) * out_isz         # output, double-buffered
        work = 8 * (2 * t) * widest * 4            # live f32 intermediates (rough)
        return param_bytes + io_in + io_out + work # weights single-buffered

    try:
        vmem_cap = int(pltpu.get_tpu_info().vmem_capacity_bytes)
    except Exception:                              # pragma: no cover
        vmem_cap = 64 << 20                        # conservative (v7x per-core VMEM)
    budget = vmem_cap - (8 << 20)                  # leave headroom for Mosaic scratch

    full_tb = _round_up(batch, 8)
    if batch_tile is None:
        # Fast path: whole batch in one grid step when it fits; else start at 256.
        tb = full_tb if footprint(full_tb) <= budget else 256
    else:
        tb = batch_tile
    tb = max(8, (min(tb, full_tb) // 8) * 8)
    while footprint(tb) > budget and tb > 8:
        tb = max(8, (tb // 2 // 8) * 8)

    pb = _round_up(batch, tb)
    if pb > batch:
        x = jnp.pad(x, ((0, 0), (0, pb - batch), (0, 0)))
    grid = (pb // tb,)

    vmem_limit = int(min(max(footprint(tb) + (8 << 20), 32 << 20), budget))

    # ---------------- BlockSpecs ------------------------------------------------
    x_spec = pl.BlockSpec((2, tb, g_pad), lambda i: (0, i, 0))
    # Constant index_map + single buffer: weights stay VMEM-resident, no re-DMA.
    param_specs = [pl.BlockSpec(p.shape, lambda i, n=p.ndim: (0,) * n,
                                pipeline_mode=pl.Buffered(1))
                   for p in params]
    out_spec = pl.BlockSpec((tb, g_pad), lambda i: (i, 0))

    out = pl.pallas_call(
        _full_model_kernel,
        out_shape=jax.ShapeDtypeStruct((pb, g_pad), out_dtype),
        grid=grid,
        in_specs=[x_spec] + param_specs,
        out_specs=out_spec,
        compiler_params=pltpu.CompilerParams(
            dimension_semantics=("parallel",),
            vmem_limit_bytes=vmem_limit),
    )(x, *params)

    return out[:batch, :gene_dim]


# ----------------------------------------------------------------------------
# Parameter init (unpadded, f32) + BN folding
# ----------------------------------------------------------------------------
def init_raw_params(key, gene_dim, latent_dim, ae_hidden, pred_hidden):
    keys = iter(jax.random.split(key, 64))

    def linear_init(fan_in, fan_out):
        bound = 1.0 / np.sqrt(fan_in)
        w = jax.random.uniform(next(keys), (fan_in, fan_out), jnp.float32, -bound, bound)
        b = jax.random.uniform(next(keys), (1, fan_out), jnp.float32, -bound, bound)
        return w, b

    def bn_init(dim):
        gamma = 1.0 + 0.1 * jax.random.normal(next(keys), (1, dim), jnp.float32)
        beta = 0.1 * jax.random.normal(next(keys), (1, dim), jnp.float32)
        rmean = 0.1 * jax.random.normal(next(keys), (1, dim), jnp.float32)
        rvar = 1.0 + 0.1 * jnp.abs(jax.random.normal(next(keys), (1, dim), jnp.float32))
        return gamma, beta, rmean, rvar

    def fold_bn(w, b, gamma, beta, rmean, rvar, eps=1e-5):
        scale = gamma / jnp.sqrt(rvar + eps)
        return w * scale, (b - rmean) * scale + beta

    h1, h2 = ae_hidden
    p1, p2, p3 = pred_hidden

    raw = {}
    # autoencoder encoder: Linear+BN+ReLU, Linear+BN+ReLU, Linear
    raw["we1"] = fold_bn(*linear_init(gene_dim, h1), *bn_init(h1))
    raw["we2"] = fold_bn(*linear_init(h1, h2), *bn_init(h2))
    raw["we3"] = linear_init(h2, latent_dim)
    # autoencoder decoder: mirrored Linear+ReLU stack
    raw["wd1"] = linear_init(latent_dim, h2)
    raw["wd2"] = linear_init(h2, h1)
    raw["wd3"] = linear_init(h1, gene_dim)
    # predictor: input LayerNorm
    raw["lng"] = (jnp.ones((1, latent_dim), jnp.float32),
                  jnp.zeros((1, latent_dim), jnp.float32))
    # predictor: self-attention V projection (Q/K mathematically dead at seq_len==1)
    raw["wv"] = linear_init(latent_dim, latent_dim)
    # predictor MLP: [Linear+BN+ReLU] x3 + Linear
    raw["wp1"] = fold_bn(*linear_init(latent_dim, p1), *bn_init(p1))
    raw["wp2"] = fold_bn(*linear_init(p1, p2), *bn_init(p2))
    raw["wp3"] = fold_bn(*linear_init(p2, p3), *bn_init(p3))
    raw["wp4"] = linear_init(p3, latent_dim)
    # residual gate (stored as a row vector for the VPU dot)
    wg, bg = linear_init(latent_dim, 1)
    raw["wg"] = (wg.reshape(1, latent_dim), bg.reshape(1, 1))
    return raw


# ----------------------------------------------------------------------------
# Prep for the kernel: lane-pad every dim to a multiple of 128, cast weights bf16
# ----------------------------------------------------------------------------
def prepare_params(raw, gene_dim, latent_dim, ae_hidden, pred_hidden,
                   weight_dtype=jnp.bfloat16, lane=128):
    h1, h2 = ae_hidden
    p1, p2, p3 = pred_hidden
    G = _round_up(gene_dim, lane)
    L = _round_up(latent_dim, lane)
    H1, H2 = _round_up(h1, lane), _round_up(h2, lane)
    P1, P2, P3 = (_round_up(p1, lane), _round_up(p2, lane), _round_up(p3, lane))

    def pad_pair(pair, rows, cols):
        w, b = pair
        w = jnp.pad(w, ((0, rows - w.shape[0]), (0, cols - w.shape[1])))
        b = jnp.pad(b, ((0, 0), (0, cols - b.shape[1])))
        return w.astype(weight_dtype), b            # weights bf16; biases stay f32

    we1, be1 = pad_pair(raw["we1"], G, H1)
    we2, be2 = pad_pair(raw["we2"], H1, H2)
    we3, be3 = pad_pair(raw["we3"], H2, L)
    wd1, bd1 = pad_pair(raw["wd1"], L, H2)
    wd2, bd2 = pad_pair(raw["wd2"], H2, H1)
    wd3, bd3 = pad_pair(raw["wd3"], H1, G)
    wv, bv = pad_pair(raw["wv"], L, L)
    wp1, bp1 = pad_pair(raw["wp1"], L, P1)
    wp2, bp2 = pad_pair(raw["wp2"], P1, P2)
    wp3, bp3 = pad_pair(raw["wp3"], P2, P3)
    wp4, bp4 = pad_pair(raw["wp4"], P3, L)

    g, b = raw["lng"]
    lng = jnp.pad(g, ((0, 0), (0, L - latent_dim)))
    lnb = jnp.pad(b, ((0, 0), (0, L - latent_dim)))
    # Mask carries 1/latent_true on real lanes, 0 on padded lanes -> exact LayerNorm.
    ln_mask = jnp.pad(jnp.full((1, latent_dim), 1.0 / latent_dim, jnp.float32),
                      ((0, 0), (0, L - latent_dim)))

    wg_row, bg = raw["wg"]
    wg = jnp.pad(wg_row, ((0, 0), (0, L - latent_dim)))          # f32 (VPU path)

    return (we1, be1, we2, be2, we3, be3,
            wd1, bd1, wd2, bd2, wd3, bd3,
            lng, lnb, ln_mask,
            wv, bv,
            wp1, bp1, wp2, bp2, wp3, bp3, wp4, bp4,
            wg, bg)


# ----------------------------------------------------------------------------
# Pure-JAX reference on the UNPADDED params (validates padding + kernel machinery)
# ----------------------------------------------------------------------------
def reference_forward(drug_a, drug_b, raw, weight_dtype=jnp.bfloat16):
    def lin(x, pair):
        w, b = pair
        return jnp.dot(x.astype(weight_dtype), w.astype(weight_dtype),
                       preferred_element_type=jnp.float32) + b

    relu = lambda v: jnp.maximum(v, 0.0)

    def encode(x):
        h = relu(lin(x, raw["we1"]))
        h = relu(lin(h, raw["we2"]))
        return lin(h, raw["we3"])

    lng, lnb = raw["lng"]

    def layer_norm(x):
        mu = jnp.mean(x, -1, keepdims=True)
        var = jnp.mean((x - mu) ** 2, -1, keepdims=True)
        return (x - mu) * jax.lax.rsqrt(var + 1e-5) * lng + lnb

    za, zb = encode(drug_a), encode(drug_b)
    a_att = lin(layer_norm(za), raw["wv"])      # seq_len == 1 => softmax weight == 1
    b_att = lin(layer_norm(zb), raw["wv"])
    fused = a_att + b_att
    h = relu(lin(fused, raw["wp1"]))
    h = relu(lin(h, raw["wp2"]))
    h = relu(lin(h, raw["wp3"]))
    pred = lin(h, raw["wp4"])
    wg_row, bg = raw["wg"]
    gate = jax.nn.sigmoid(jnp.sum(fused * wg_row, -1, keepdims=True) + bg)
    comb = gate * pred + (1.0 - gate) * fused
    d = relu(lin(comb, raw["wd1"]))
    d = relu(lin(d, raw["wd2"]))
    return lin(d, raw["wd3"])


# ----------------------------------------------------------------------------
if __name__ == "__main__":
    # Small, TPU-friendly shapes consistent with the module's forward pass.
    BATCH = 256
    GENE_DIM = 256              # module default 5000; scaled down for the demo
    LATENT_DIM = 20
    AE_HIDDEN = [128, 64]       # module default [1000, 200]; scaled down
    PRED_HIDDEN = [64, 128, 64]

    root = jax.random.PRNGKey(0)
    k_params, k_a, k_b = jax.random.split(root, 3)

    raw = init_raw_params(k_params, GENE_DIM, LATENT_DIM, AE_HIDDEN, PRED_HIDDEN)
    params = prepare_params(raw, GENE_DIM, LATENT_DIM, AE_HIDDEN, PRED_HIDDEN)

    drug_a = jax.random.normal(k_a, (BATCH, GENE_DIM), jnp.float32)
    drug_b = jax.random.normal(k_b, (BATCH, GENE_DIM), jnp.float32)

    ref = np.asarray(reference_forward(drug_a, drug_b, raw))

    # Fast path: whole (padded) batch fits the VMEM budget -> grid=(1,), no pipeline.
    out_fast = jax.block_until_ready(full_model_forward(drug_a, drug_b, params))
    assert out_fast.shape == (BATCH, GENE_DIM), out_fast.shape
    np.testing.assert_allclose(np.asarray(out_fast.astype(jnp.float32)), ref,
                               rtol=2e-2, atol=2e-2)

    # Tiled path: explicit batch tile exercises the pipelined "parallel" grid.
    out_tiled = jax.block_until_ready(
        full_model_forward(drug_a, drug_b, params, batch_tile=128))
    np.testing.assert_allclose(np.asarray(out_tiled.astype(jnp.float32)), ref,
                               rtol=2e-2, atol=2e-2)

    print("KERNEL_OK")
</pallas_src>

<mosaic_0001>
module attributes {stable_mosaic.version = 11 : i64} {
  func.func @_full_model_kernel(%arg0: i32, %arg1: memref<2x256x256xbf16, #tpu.memory_space<vmem>>, %arg2: memref<256x128xbf16, #tpu.memory_space<vmem>>, %arg3: memref<1x128xf32, #tpu.memory_space<vmem>>, %arg4: memref<128x128xbf16, #tpu.memory_space<vmem>>, %arg5: memref<1x128xf32, #tpu.memory_space<vmem>>, %arg6: memref<128x128xbf16, #tpu.memory_space<vmem>>, %arg7: memref<1x128xf32, #tpu.memory_space<vmem>>, %arg8: memref<128x128xbf16, #tpu.memory_space<vmem>>, %arg9: memref<1x128xf32, #tpu.memory_space<vmem>>, %arg10: memref<128x128xbf16, #tpu.memory_space<vmem>>, %arg11: memref<1x128xf32, #tpu.memory_space<vmem>>, %arg12: memref<128x256xbf16, #tpu.memory_space<vmem>>, %arg13: memref<1x256xf32, #tpu.memory_space<vmem>>, %arg14: memref<1x128xf32, #tpu.memory_space<vmem>>, %arg15: memref<1x128xf32, #tpu.memory_space<vmem>>, %arg16: memref<1x128xf32, #tpu.memory_space<vmem>>, %arg17: memref<128x128xbf16, #tpu.memory_space<vmem>>, %arg18: memref<1x128xf32, #tpu.memory_space<vmem>>, %arg19: memref<128x128xbf16, #tpu.memory_space<vmem>>, %arg20: memref<1x128xf32, #tpu.memory_space<vmem>>, %arg21: memref<128x128xbf16, #tpu.memory_space<vmem>>, %arg22: memref<1x128xf32, #tpu.memory_space<vmem>>, %arg23: memref<128x128xbf16, #tpu.memory_space<vmem>>, %arg24: memref<1x128xf32, #tpu.memory_space<vmem>>, %arg25: memref<128x128xbf16, #tpu.memory_space<vmem>>, %arg26: memref<1x128xf32, #tpu.memory_space<vmem>>, %arg27: memref<1x128xf32, #tpu.memory_space<vmem>>, %arg28: memref<1x1xf32, #tpu.memory_space<vmem>>, %arg29: memref<256x256xbf16, #tpu.memory_space<vmem>>) attributes {dimension_semantics = [#tpu.dimension_semantics<parallel>], iteration_bounds = array<i64: 1>, scalar_prefetch = 0 : i64, scratch_operands = 0 : i64, tpu.core_type = #tpu.core_type<tc>, window_params = [{transform_indices = @transform_0, window_bounds = array<i64: 2, 256, 256>}, {pipeline_mode = #tpu.pipeline_mode<synchronous>, transform_indices = @transform_1, window_bounds = array<i64: 256, 128>}, {pipeline_mode = #tpu.pipeline_mode<synchronous>, transform_indices = @transform_2, window_bounds = array<i64: 1, 128>}, {pipeline_mode = #tpu.pipeline_mode<synchronous>, transform_indices = @transform_3, window_bounds = array<i64: 128, 128>}, {pipeline_mode = #tpu.pipeline_mode<synchronous>, transform_indices = @transform_4, window_bounds = array<i64: 1, 128>}, {pipeline_mode = #tpu.pipeline_mode<synchronous>, transform_indices = @transform_5, window_bounds = array<i64: 128, 128>}, {pipeline_mode = #tpu.pipeline_mode<synchronous>, transform_indices = @transform_6, window_bounds = array<i64: 1, 128>}, {pipeline_mode = #tpu.pipeline_mode<synchronous>, transform_indices = @transform_7, window_bounds = array<i64: 128, 128>}, {pipeline_mode = #tpu.pipeline_mode<synchronous>, transform_indices = @transform_8, window_bounds = array<i64: 1, 128>}, {pipeline_mode = #tpu.pipeline_mode<synchronous>, transform_indices = @transform_9, window_bounds = array<i64: 128, 128>}, {pipeline_mode = #tpu.pipeline_mode<synchronous>, transform_indices = @transform_10, window_bounds = array<i64: 1, 128>}, {pipeline_mode = #tpu.pipeline_mode<synchronous>, transform_indices = @transform_11, window_bounds = array<i64: 128, 256>}, {pipeline_mode = #tpu.pipeline_mode<synchronous>, transform_indices = @transform_12, window_bounds = array<i64: 1, 256>}, {pipeline_mode = #tpu.pipeline_mode<synchronous>, transform_indices = @transform_13, window_bounds = array<i64: 1, 128>}, {pipeline_mode = #tpu.pipeline_mode<synchronous>, transform_indices = @transform_14, window_bounds = array<i64: 1, 128>}, {pipeline_mode = #tpu.pipeline_mode<synchronous>, transform_indices = @transform_15, window_bounds = array<i64: 1, 128>}, {pipeline_mode = #tpu.pipeline_mode<synchronous>, transform_indices = @transform_16, window_bounds = array<i64: 128, 128>}, {pipeline_mode = #tpu.pipeline_mode<synchronous>, transform_indices = @transform_17, window_bounds = array<i64: 1, 128>}, {pipeline_mode = #tpu.pipeline_mode<synchronous>, transform_indices = @transform_18, window_bounds = array<i64: 128, 128>}, {pipeline_mode = #tpu.pipeline_mode<synchronous>, transform_indices = @transform_19, window_bounds = array<i64: 1, 128>}, {pipeline_mode = #tpu.pipeline_mode<synchronous>, transform_indices = @transform_20, window_bounds = array<i64: 128, 128>}, {pipeline_mode = #tpu.pipeline_mode<synchronous>, transform_indices = @transform_21, window_bounds = array<i64: 1, 128>}, {pipeline_mode = #tpu.pipeline_mode<synchronous>, transform_indices = @transform_22, window_bounds = array<i64: 128, 128>}, {pipeline_mode = #tpu.pipeline_mode<synchronous>, transform_indices = @transform_23, window_bounds = array<i64: 1, 128>}, {pipeline_mode = #tpu.pipeline_mode<synchronous>, transform_indices = @transform_24, window_bounds = array<i64: 128, 128>}, {pipeline_mode = #tpu.pipeline_mode<synchronous>, transform_indices = @transform_25, window_bounds = array<i64: 1, 128>}, {pipeline_mode = #tpu.pipeline_mode<synchronous>, transform_indices = @transform_26, window_bounds = array<i64: 1, 128>}, {pipeline_mode = #tpu.pipeline_mode<synchronous>, transform_indices = @transform_27, window_bounds = array<i64: 1, 1>}, {transform_indices = @transform_28, window_bounds = array<i64: 256, 256>}]} {
    %c0 = arith.constant 0 : index
    %c0_0 = arith.constant 0 : index
    %c0_1 = arith.constant 0 : index
    %0 = vector.load %arg1[%c0, %c0_0, %c0_1] : memref<2x256x256xbf16, #tpu.memory_space<vmem>>, vector<2x256x256xbf16>
    %1 = vector.shape_cast %0 : vector<2x256x256xbf16> to vector<512x256xbf16>
    %c0_2 = arith.constant 0 : index
    %c0_3 = arith.constant 0 : index
    %2 = vector.load %arg2[%c0_2, %c0_3] : memref<256x128xbf16, #tpu.memory_space<vmem>>, vector<256x128xbf16>
    %cst = arith.constant dense<0.000000e+00> : vector<512x128xf32>
    %3 = tpu.matmul %1, %2, %cst {dimension_numbers = #tpu.dot_dimension_numbers<[1], [0], [0], [1], [0, 0, 1, 1], [], []>} : vector<512x256xbf16>, vector<256x128xbf16>, vector<512x128xf32> -> vector<512x128xf32>
    %c0_4 = arith.constant 0 : index
    %c0_5 = arith.constant 0 : index
    %4 = vector.load %arg3[%c0_4, %c0_5] : memref<1x128xf32, #tpu.memory_space<vmem>>, vector<1x128xf32>
    %5 = vector.broadcast %4 : vector<1x128xf32> to vector<512x128xf32>
    %6 = arith.addf %3, %5 : vector<512x128xf32>
    %cst_6 = arith.constant 0.000000e+00 : f32
    %7 = vector.broadcast %cst_6 : f32 to vector<512x128xf32>
    %8 = arith.maximumf %6, %7 : vector<512x128xf32>
    %9 = arith.truncf %8 : vector<512x128xf32> to vector<512x128xbf16>
    %c0_7 = arith.constant 0 : index
    %c0_8 = arith.constant 0 : index
    %10 = vector.load %arg4[%c0_7, %c0_8] : memref<128x128xbf16, #tpu.memory_space<vmem>>, vector<128x128xbf16>
    %cst_9 = arith.constant dense<0.000000e+00> : vector<512x128xf32>
    %11 = tpu.matmul %9, %10, %cst_9 {dimension_numbers = #tpu.dot_dimension_numbers<[1], [0], [0], [1], [0, 0, 1, 1], [], []>} : vector<512x128xbf16>, vector<128x128xbf16>, vector<512x128xf32> -> vector<512x128xf32>
    %c0_10 = arith.constant 0 : index
    %c0_11 = arith.constant 0 : index
    %12 = vector.load %arg5[%c0_10, %c0_11] : memref<1x128xf32, #tpu.memory_space<vmem>>, vector<1x128xf32>
    %13 = vector.broadcast %12 : vector<1x128xf32> to vector<512x128xf32>
    %14 = arith.addf %11, %13 : vector<512x128xf32>
    %cst_12 = arith.constant 0.000000e+00 : f32
    %15 = vector.broadcast %cst_12 : f32 to vector<512x128xf32>
    %16 = arith.maximumf %14, %15 : vector<512x128xf32>
    %17 = arith.truncf %16 : vector<512x128xf32> to vector<512x128xbf16>
    %c0_13 = arith.constant 0 : index
    %c0_14 = arith.constant 0 : index
    %18 = vector.load %arg6[%c0_13, %c0_14] : memref<128x128xbf16, #tpu.memory_space<vmem>>, vector<128x128xbf16>
    %cst_15 = arith.constant dense<0.000000e+00> : vector<512x128xf32>
    %19 = tpu.matmul %17, %18, %cst_15 {dimension_numbers = #tpu.dot_dimension_numbers<[1], [0], [0], [1], [0, 0, 1, 1], [], []>} : vector<512x128xbf16>, vector<128x128xbf16>, vector<512x128xf32> -> vector<512x128xf32>
    %c0_16 = arith.constant 0 : index
    %c0_17 = arith.constant 0 : index
    %20 = vector.load %arg7[%c0_16, %c0_17] : memref<1x128xf32, #tpu.memory_space<vmem>>, vector<1x128xf32>
    %21 = vector.broadcast %20 : vector<1x128xf32> to vector<512x128xf32>
    %22 = arith.addf %19, %21 : vector<512x128xf32>
    %c0_18 = arith.constant 0 : index
    %c0_19 = arith.constant 0 : index
    %23 = vector.load %arg16[%c0_18, %c0_19] : memref<1x128xf32, #tpu.memory_space<vmem>>, vector<1x128xf32>
    %24 = vector.broadcast %23 : vector<1x128xf32> to vector<512x128xf32>
    %25 = arith.mulf %22, %24 : vector<512x128xf32>
    %cst_20 = arith.constant dense<0.000000e+00> : vector<512xf32>
    %26 = vector.multi_reduction <add>, %25, %cst_20 [1] : vector<512x128xf32> to vector<512xf32>
    %27 = vector.shape_cast %26 : vector<512xf32> to vector<512x1xf32>
    %28 = arith.mulf %22, %22 : vector<512x128xf32>
    %c0_21 = arith.constant 0 : index
    %c0_22 = arith.constant 0 : index
    %29 = vector.load %arg16[%c0_21, %c0_22] : memref<1x128xf32, #tpu.memory_space<vmem>>, vector<1x128xf32>
    %30 = vector.broadcast %29 : vector<1x128xf32> to vector<512x128xf32>
    %31 = arith.mulf %28, %30 : vector<512x128xf32>
    %cst_23 = arith.constant dense<0.000000e+00> : vector<512xf32>
    %32 = vector.multi_reduction <add>, %31, %cst_23 [1] : vector<512x128xf32> to vector<512xf32>
    %33 = vector.shape_cast %32 : vector<512xf32> to vector<512x1xf32>
    %34 = arith.mulf %27, %27 : vector<512x1xf32>
    %35 = arith.subf %33, %34 : vector<512x1xf32>
    %36 = vector.broadcast %27 : vector<512x1xf32> to vector<512x128xf32>
    %37 = arith.subf %22, %36 : vector<512x128xf32>
    %cst_24 = arith.constant 9.99999974E-6 : f32
    %38 = vector.broadcast %cst_24 : f32 to vector<512x1xf32>
    %39 = arith.addf %35, %38 : vector<512x1xf32>
    %40 = math.rsqrt %39 : vector<512x1xf32>
    %41 = vector.broadcast %40 : vector<512x1xf32> to vector<512x128xf32>
    %42 = arith.mulf %37, %41 : vector<512x128xf32>
    %c0_25 = arith.constant 0 : index
    %c0_26 = arith.constant 0 : index
    %43 = vector.load %arg14[%c0_25, %c0_26] : memref<1x128xf32, #tpu.memory_space<vmem>>, vector<1x128xf32>
    %44 = vector.broadcast %43 : vector<1x128xf32> to vector<512x128xf32>
    %45 = arith.mulf %42, %44 : vector<512x128xf32>
    %c0_27 = arith.constant 0 : index
    %c0_28 = arith.constant 0 : index
    %46 = vector.load %arg15[%c0_27, %c0_28] : memref<1x128xf32, #tpu.memory_space<vmem>>, vector<1x128xf32>
    %47 = vector.broadcast %46 : vector<1x128xf32> to vector<512x128xf32>
    %48 = arith.addf %45, %47 : vector<512x128xf32>
    %49 = arith.truncf %48 : vector<512x128xf32> to vector<512x128xbf16>
    %c0_29 = arith.constant 0 : index
    %c0_30 = arith.constant 0 : index
    %50 = vector.load %arg17[%c0_29, %c0_30] : memref<128x128xbf16, #tpu.memory_space<vmem>>, vector<128x128xbf16>
    %cst_31 = arith.constant dense<0.000000e+00> : vector<512x128xf32>
    %51 = tpu.matmul %49, %50, %cst_31 {dimension_numbers = #tpu.dot_dimension_numbers<[1], [0], [0], [1], [0, 0, 1, 1], [], []>} : vector<512x128xbf16>, vector<128x128xbf16>, vector<512x128xf32> -> vector<512x128xf32>
    %c0_32 = arith.constant 0 : index
    %c0_33 = arith.constant 0 : index
    %52 = vector.load %arg18[%c0_32, %c0_33] : memref<1x128xf32, #tpu.memory_space<vmem>>, vector<1x128xf32>
    %53 = vector.broadcast %52 : vector<1x128xf32> to vector<512x128xf32>
    %54 = arith.addf %51, %53 : vector<512x128xf32>
    %55 = vector.extract_strided_slice %54 {offsets = [0, 0], sizes = [256, 128], strides = [1, 1]} : vector<512x128xf32> to vector<256x128xf32>
    %56 = vector.extract_strided_slice %54 {offsets = [256, 0], sizes = [256, 128], strides = [1, 1]} : vector<512x128xf32> to vector<256x128xf32>
    %57 = arith.addf %55, %56 : vector<256x128xf32>
    %58 = arith.truncf %57 : vector<256x128xf32> to vector<256x128xbf16>
    %c0_34 = arith.constant 0 : index
    %c0_35 = arith.constant 0 : index
    %59 = vector.load %arg19[%c0_34, %c0_35] : memref<128x128xbf16, #tpu.memory_space<vmem>>, vector<128x128xbf16>
    %cst_36 = arith.constant dense<0.000000e+00> : vector<256x128xf32>
    %60 = tpu.matmul %58, %59, %cst_36 {dimension_numbers = #tpu.dot_dimension_numbers<[1], [0], [0], [1], [0, 0, 1, 1], [], []>} : vector<256x128xbf16>, vector<128x128xbf16>, vector<256x128xf32> -> vector<256x128xf32>
    %c0_37 = arith.constant 0 : index
    %c0_38 = arith.constant 0 : index
    %61 = vector.load %arg20[%c0_37, %c0_38] : memref<1x128xf32, #tpu.memory_space<vmem>>, vector<1x128xf32>
    %62 = vector.broadcast %61 : vector<1x128xf32> to vector<256x128xf32>
    %63 = arith.addf %60, %62 : vector<256x128xf32>
    %cst_39 = arith.constant 0.000000e+00 : f32
    %64 = vector.broadcast %cst_39 : f32 to vector<256x128xf32>
    %65 = arith.maximumf %63, %64 : vector<256x128xf32>
    %66 = arith.truncf %65 : vector<256x128xf32> to vector<256x128xbf16>
    %c0_40 = arith.constant 0 : index
    %c0_41 = arith.constant 0 : index
    %67 = vector.load %arg21[%c0_40, %c0_41] : memref<128x128xbf16, #tpu.memory_space<vmem>>, vector<128x128xbf16>
    %cst_42 = arith.constant dense<0.000000e+00> : vector<256x128xf32>
    %68 = tpu.matmul %66, %67, %cst_42 {dimension_numbers = #tpu.dot_dimension_numbers<[1], [0], [0], [1], [0, 0, 1, 1], [], []>} : vector<256x128xbf16>, vector<128x128xbf16>, vector<256x128xf32> -> vector<256x128xf32>
    %c0_43 = arith.constant 0 : index
    %c0_44 = arith.constant 0 : index
    %69 = vector.load %arg22[%c0_43, %c0_44] : memref<1x128xf32, #tpu.memory_space<vmem>>, vector<1x128xf32>
    %70 = vector.broadcast %69 : vector<1x128xf32> to vector<256x128xf32>
    %71 = arith.addf %68, %70 : vector<256x128xf32>
    %cst_45 = arith.constant 0.000000e+00 : f32
    %72 = vector.broadcast %cst_45 : f32 to vector<256x128xf32>
    %73 = arith.maximumf %71, %72 : vector<256x128xf32>
    %74 = arith.truncf %73 : vector<256x128xf32> to vector<256x128xbf16>
    %c0_46 = arith.constant 0 : index
    %c0_47 = arith.constant 0 : index
    %75 = vector.load %arg23[%c0_46, %c0_47] : memref<128x128xbf16, #tpu.memory_space<vmem>>, vector<128x128xbf16>
    %cst_48 = arith.constant dense<0.000000e+00> : vector<256x128xf32>
    %76 = tpu.matmul %74, %75, %cst_48 {dimension_numbers = #tpu.dot_dimension_numbers<[1], [0], [0], [1], [0, 0, 1, 1], [], []>} : vector<256x128xbf16>, vector<128x128xbf16>, vector<256x128xf32> -> vector<256x128xf32>
    %c0_49 = arith.constant 0 : index
    %c0_50 = arith.constant 0 : index
    %77 = vector.load %arg24[%c0_49, %c0_50] : memref<1x128xf32, #tpu.memory_space<vmem>>, vector<1x128xf32>
    %78 = vector.broadcast %77 : vector<1x128xf32> to vector<256x128xf32>
    %79 = arith.addf %76, %78 : vector<256x128xf32>
    %cst_51 = arith.constant 0.000000e+00 : f32
    %80 = vector.broadcast %cst_51 : f32 to vector<256x128xf32>
    %81 = arith.maximumf %79, %80 : vector<256x128xf32>
    %82 = arith.truncf %81 : vector<256x128xf32> to vector<256x128xbf16>
    %c0_52 = arith.constant 0 : index
    %c0_53 = arith.constant 0 : index
    %83 = vector.load %arg25[%c0_52, %c0_53] : memref<128x128xbf16, #tpu.memory_space<vmem>>, vector<128x128xbf16>
    %cst_54 = arith.constant dense<0.000000e+00> : vector<256x128xf32>
    %84 = tpu.matmul %82, %83, %cst_54 {dimension_numbers = #tpu.dot_dimension_numbers<[1], [0], [0], [1], [0, 0, 1, 1], [], []>} : vector<256x128xbf16>, vector<128x128xbf16>, vector<256x128xf32> -> vector<256x128xf32>
    %c0_55 = arith.constant 0 : index
    %c0_56 = arith.constant 0 : index
    %85 = vector.load %arg26[%c0_55, %c0_56] : memref<1x128xf32, #tpu.memory_space<vmem>>, vector<1x128xf32>
    %86 = vector.broadcast %85 : vector<1x128xf32> to vector<256x128xf32>
    %87 = arith.addf %84, %86 : vector<256x128xf32>
    %c0_57 = arith.constant 0 : index
    %c0_58 = arith.constant 0 : index
    %88 = vector.load %arg27[%c0_57, %c0_58] : memref<1x128xf32, #tpu.memory_space<vmem>>, vector<1x128xf32>
    %89 = vector.broadcast %88 : vector<1x128xf32> to vector<256x128xf32>
    %90 = arith.mulf %57, %89 : vector<256x128xf32>
    %cst_59 = arith.constant dense<0.000000e+00> : vector<256xf32>
    %91 = vector.multi_reduction <add>, %90, %cst_59 [1] : vector<256x128xf32> to vector<256xf32>
    %92 = vector.shape_cast %91 : vector<256xf32> to vector<256x1xf32>
    %c0_60 = arith.constant 0 : index
    %c0_61 = arith.constant 0 : index
    %93 = vector.load %arg28[%c0_60, %c0_61] : memref<1x1xf32, #tpu.memory_space<vmem>>, vector<1x1xf32>
    %94 = vector.broadcast %93 : vector<1x1xf32> to vector<256x1xf32>
    %95 = arith.addf %92, %94 : vector<256x1xf32>
    %96 = arith.negf %95 : vector<256x1xf32>
    %97 = math.exp %96 : vector<256x1xf32>
    %cst_62 = arith.constant 1.000000e+00 : f32
    %98 = vector.broadcast %cst_62 : f32 to vector<256x1xf32>
    %99 = arith.addf %98, %97 : vector<256x1xf32>
    %100 = arith.divf %98, %99 : vector<256x1xf32>
    %101 = vector.broadcast %100 : vector<256x1xf32> to vector<256x128xf32>
    %102 = arith.mulf %101, %87 : vector<256x128xf32>
    %cst_63 = arith.constant 1.000000e+00 : f32
    %103 = vector.broadcast %cst_63 : f32 to vector<256x1xf32>
    %104 = arith.subf %103, %100 : vector<256x1xf32>
    %105 = vector.broadcast %104 : vector<256x1xf32> to vector<256x128xf32>
    %106 = arith.mulf %105, %57 : vector<256x128xf32>
    %107 = arith.addf %102, %106 : vector<256x128xf32>
    %108 = arith.truncf %107 : vector<256x128xf32> to vector<256x128xbf16>
    %c0_64 = arith.constant 0 : index
    %c0_65 = arith.constant 0 : index
    %109 = vector.load %arg8[%c0_64, %c0_65] : memref<128x128xbf16, #tpu.memory_space<vmem>>, vector<128x128xbf16>
    %cst_66 = arith.constant dense<0.000000e+00> : vector<256x128xf32>
    %110 = tpu.matmul %108, %109, %cst_66 {dimension_numbers = #tpu.dot_dimension_numbers<[1], [0], [0], [1], [0, 0, 1, 1], [], []>} : vector<256x128xbf16>, vector<128x128xbf16>, vector<256x128xf32> -> vector<256x128xf32>
    %c0_67 = arith.constant 0 : index
    %c0_68 = arith.constant 0 : index
    %111 = vector.load %arg9[%c0_67, %c0_68] : memref<1x128xf32, #tpu.memory_space<vmem>>, vector<1x128xf32>
    %112 = vector.broadcast %111 : vector<1x128xf32> to vector<256x128xf32>
    %113 = arith.addf %110, %112 : vector<256x128xf32>
    %cst_69 = arith.constant 0.000000e+00 : f32
    %114 = vector.broadcast %cst_69 : f32 to vector<256x128xf32>
    %115 = arith.maximumf %113, %114 : vector<256x128xf32>
    %116 = arith.truncf %115 : vector<256x128xf32> to vector<256x128xbf16>
    %c0_70 = arith.constant 0 : index
    %c0_71 = arith.constant 0 : index
    %117 = vector.load %arg10[%c0_70, %c0_71] : memref<128x128xbf16, #tpu.memory_space<vmem>>, vector<128x128xbf16>
    %cst_72 = arith.constant dense<0.000000e+00> : vector<256x128xf32>
    %118 = tpu.matmul %116, %117, %cst_72 {dimension_numbers = #tpu.dot_dimension_numbers<[1], [0], [0], [1], [0, 0, 1, 1], [], []>} : vector<256x128xbf16>, vector<128x128xbf16>, vector<256x128xf32> -> vector<256x128xf32>
    %c0_73 = arith.constant 0 : index
    %c0_74 = arith.constant 0 : index
    %119 = vector.load %arg11[%c0_73, %c0_74] : memref<1x128xf32, #tpu.memory_space<vmem>>, vector<1x128xf32>
    %120 = vector.broadcast %119 : vector<1x128xf32> to vector<256x128xf32>
    %121 = arith.addf %118, %120 : vector<256x128xf32>
    %cst_75 = arith.constant 0.000000e+00 : f32
    %122 = vector.broadcast %cst_75 : f32 to vector<256x128xf32>
    %123 = arith.maximumf %121, %122 : vector<256x128xf32>
    %124 = arith.truncf %123 : vector<256x128xf32> to vector<256x128xbf16>
    %c0_76 = arith.constant 0 : index
    %c0_77 = arith.constant 0 : index
    %125 = vector.load %arg12[%c0_76, %c0_77] : memref<128x256xbf16, #tpu.memory_space<vmem>>, vector<128x256xbf16>
    %cst_78 = arith.constant dense<0.000000e+00> : vector<256x256xf32>
    %126 = tpu.matmul %124, %125, %cst_78 {dimension_numbers = #tpu.dot_dimension_numbers<[1], [0], [0], [1], [0, 0, 1, 1], [], []>} : vector<256x128xbf16>, vector<128x256xbf16>, vector<256x256xf32> -> vector<256x256xf32>
    %c0_79 = arith.constant 0 : index
    %c0_80 = arith.constant 0 : index
    %127 = vector.load %arg13[%c0_79, %c0_80] : memref<1x256xf32, #tpu.memory_space<vmem>>, vector<1x256xf32>
    %128 = vector.broadcast %127 : vector<1x256xf32> to vector<256x256xf32>
    %129 = arith.addf %126, %128 : vector<256x256xf32>
    %130 = arith.truncf %129 : vector<256x256xf32> to vector<256x256xbf16>
    %c0_81 = arith.constant 0 : index
    %c0_82 = arith.constant 0 : index
    %131 = vector.load %arg29[%c0_81, %c0_82] : memref<256x256xbf16, #tpu.memory_space<vmem>>, vector<256x256xbf16>
    tpu.vector_store %arg29[%c0_81, %c0_82], %130 {strides = array<i32>} : memref<256x256xbf16, #tpu.memory_space<vmem>>, vector<256x256xbf16>,
    return
  }
  func.func @transform_0(%arg0: i32) -> (i32, i32, i32) {
    %c0_i32 = arith.constant 0 : i32
    %c0_i32_0 = arith.constant 0 : i32
    %c0_i32_1 = arith.constant 0 : i32
    return %c0_i32, %arg0, %c0_i32_0 : i32, i32, i32
  }
  func.func @transform_1(%arg0: i32) -> (i32, i32) {
    %c0_i32 = arith.constant 0 : i32
    %c0_i32_0 = arith.constant 0 : i32
    %c0_i32_1 = arith.constant 0 : i32
    return %c0_i32, %c0_i32_0 : i32, i32
  }
  func.func @transform_2(%arg0: i32) -> (i32, i32) {
    %c0_i32 = arith.constant 0 : i32
    %c0_i32_0 = arith.constant 0 : i32
    %c0_i32_1 = arith.constant 0 : i32
    return %c0_i32, %c0_i32_0 : i32, i32
  }
  func.func @transform_3(%arg0: i32) -> (i32, i32) {
    %c0_i32 = arith.constant 0 : i32
    %c0_i32_0 = arith.constant 0 : i32
    %c0_i32_1 = arith.constant 0 : i32
    return %c0_i32, %c0_i32_0 : i32, i32
  }
  func.func @transform_4(%arg0: i32) -> (i32, i32) {
    %c0_i32 = arith.constant 0 : i32
    %c0_i32_0 = arith.constant 0 : i32
    %c0_i32_1 = arith.constant 0 : i32
    return %c0_i32, %c0_i32_0 : i32, i32
  }
  func.func @transform_5(%arg0: i32) -> (i32, i32) {
    %c0_i32 = arith.constant 0 : i32
    %c0_i32_0 = arith.constant 0 : i32
    %c0_i32_1 = arith.constant 0 : i32
    return %c0_i32, %c0_i32_0 : i32, i32
  }
  func.func @transform_6(%arg0: i32) -> (i32, i32) {
    %c0_i32 = arith.constant 0 : i32
    %c0_i32_0 = arith.constant 0 : i32
    %c0_i32_1 = arith.constant 0 : i32
    return %c0_i32, %c0_i32_0 : i32, i32
  }
  func.func @transform_7(%arg0: i32) -> (i32, i32) {
    %c0_i32 = arith.constant 0 : i32
    %c0_i32_0 = arith.constant 0 : i32
    %c0_i32_1 = arith.constant 0 : i32
    return %c0_i32, %c0_i32_0 : i32, i32
  }
  func.func @transform_8(%arg0: i32) -> (i32, i32) {
    %c0_i32 = arith.constant 0 : i32
    %c0_i32_0 = arith.constant 0 : i32
    %c0_i32_1 = arith.constant 0 : i32
    return %c0_i32, %c0_i32_0 : i32, i32
  }
  func.func @transform_9(%arg0: i32) -> (i32, i32) {
    %c0_i32 = arith.constant 0 : i32
    %c0_i32_0 = arith.constant 0 : i32
    %c0_i32_1 = arith.constant 0 : i32
    return %c0_i32, %c0_i32_0 : i32, i32
  }
  func.func @transform_10(%arg0: i32) -> (i32, i32) {
    %c0_i32 = arith.constant 0 : i32
    %c0_i32_0 = arith.constant 0 : i32
    %c0_i32_1 = arith.constant 0 : i32
    return %c0_i32, %c0_i32_0 : i32, i32
  }
  func.func @transform_11(%arg0: i32) -> (i32, i32) {
    %c0_i32 = arith.constant 0 : i32
    %c0_i32_0 = arith.constant 0 : i32
    %c0_i32_1 = arith.constant 0 : i32
    return %c0_i32, %c0_i32_0 : i32, i32
  }
  func.func @transform_12(%arg0: i32) -> (i32, i32) {
    %c0_i32 = arith.constant 0 : i32
    %c0_i32_0 = arith.constant 0 : i32
    %c0_i32_1 = arith.constant 0 : i32
    return %c0_i32, %c0_i32_0 : i32, i32
  }
  func.func @transform_13(%arg0: i32) -> (i32, i32) {
    %c0_i32 = arith.constant 0 : i32
    %c0_i32_0 = arith.constant 0 : i32
    %c0_i32_1 = arith.constant 0 : i32
    return %c0_i32, %c0_i32_0 : i32, i32
  }
  func.func @transform_14(%arg0: i32) -> (i32, i32) {
    %c0_i32 = arith.constant 0 : i32
    %c0_i32_0 = arith.constant 0 : i32
    %c0_i32_1 = arith.constant 0 : i32
    return %c0_i32, %c0_i32_0 : i32, i32
  }
  func.func @transform_15(%arg0: i32) -> (i32, i32) {
    %c0_i32 = arith.constant 0 : i32
    %c0_i32_0 = arith.constant 0 : i32
    %c0_i32_1 = arith.constant 0 : i32
    return %c0_i32, %c0_i32_0 : i32, i32
  }
  func.func @transform_16(%arg0: i32) -> (i32, i32) {
    %c0_i32 = arith.constant 0 : i32
    %c0_i32_0 = arith.constant 0 : i32
    %c0_i32_1 = arith.constant 0 : i32
    return %c0_i32, %c0_i32_0 : i32, i32
  }
  func.func @transform_17(%arg0: i32) -> (i32, i32) {
    %c0_i32 = arith.constant 0 : i32
    %c0_i32_0 = arith.constant 0 : i32
    %c0_i32_1 = arith.constant 0 : i32
    return %c0_i32, %c0_i32_0 : i32, i32
  }
  func.func @transform_18(%arg0: i32) -> (i32, i32) {
    %c0_i32 = arith.constant 0 : i32
    %c0_i32_0 = arith.constant 0 : i32
    %c0_i32_1 = arith.constant 0 : i32
    return %c0_i32, %c0_i32_0 : i32, i32
  }
  func.func @transform_19(%arg0: i32) -> (i32, i32) {
    %c0_i32 = arith.constant 0 : i32
    %c0_i32_0 = arith.constant 0 : i32
    %c0_i32_1 = arith.constant 0 : i32
    return %c0_i32, %c0_i32_0 : i32, i32
  }
  func.func @transform_20(%arg0: i32) -> (i32, i32) {
    %c0_i32 = arith.constant 0 : i32
    %c0_i32_0 = arith.constant 0 : i32
    %c0_i32_1 = arith.constant 0 : i32
    return %c0_i32, %c0_i32_0 : i32, i32
  }
  func.func @transform_21(%arg0: i32) -> (i32, i32) {
    %c0_i32 = arith.constant 0 : i32
    %c0_i32_0 = arith.constant 0 : i32
    %c0_i32_1 = arith.constant 0 : i32
    return %c0_i32, %c0_i32_0 : i32, i32
  }
  func.func @transform_22(%arg0: i32) -> (i32, i32) {
    %c0_i32 = arith.constant 0 : i32
    %c0_i32_0 = arith.constant 0 : i32
    %c0_i32_1 = arith.constant 0 : i32
    return %c0_i32, %c0_i32_0 : i32, i32
  }
  func.func @transform_23(%arg0: i32) -> (i32, i32) {
    %c0_i32 = arith.constant 0 : i32
    %c0_i32_0 = arith.constant 0 : i32
    %c0_i32_1 = arith.constant 0 : i32
    return %c0_i32, %c0_i32_0 : i32, i32
  }
  func.func @transform_24(%arg0: i32) -> (i32, i32) {
    %c0_i32 = arith.constant 0 : i32
    %c0_i32_0 = arith.constant 0 : i32
    %c0_i32_1 = arith.constant 0 : i32
    return %c0_i32, %c0_i32_0 : i32, i32
  }
  func.func @transform_25(%arg0: i32) -> (i32, i32) {
    %c0_i32 = arith.constant 0 : i32
    %c0_i32_0 = arith.constant 0 : i32
    %c0_i32_1 = arith.constant 0 : i32
    return %c0_i32, %c0_i32_0 : i32, i32
  }
  func.func @transform_26(%arg0: i32) -> (i32, i32) {
    %c0_i32 = arith.constant 0 : i32
    %c0_i32_0 = arith.constant 0 : i32
    %c0_i32_1 = arith.constant 0 : i32
    return %c0_i32, %c0_i32_0 : i32, i32
  }
  func.func @transform_27(%arg0: i32) -> (i32, i32) {
    %c0_i32 = arith.constant 0 : i32
    %c0_i32_0 = arith.constant 0 : i32
    %c0_i32_1 = arith.constant 0 : i32
    return %c0_i32, %c0_i32_0 : i32, i32
  }
  func.func @transform_28(%arg0: i32) -> (i32, i32) {
    %c0_i32 = arith.constant 0 : i32
    %c0_i32_0 = arith.constant 0 : i32
    return %arg0, %c0_i32 : i32, i32
  }
}

</mosaic_0001>

<llo_original>
// kernel: full_model_forward.1
$region0: #{full_model_forward.1}
  #allocation0 [shape = 'u32[]', space=smem, size = 0x4, offset = 0x4, fixed_abs, tag = 'smem constant byte address 0x4 - core index']
  #allocation1 [shape = 'u32[72,128]{1,0:T(1,128)}', space=vmem, size = 0x9000, scoped, tag = 'internal scratch']
  #allocation2 [shape = 'f32[1,1]{1,0:T(1,128)S(1)}', space=vmem, size = 0x200, scoped, tag = 'scoped memory for full_model_forward.1']
  %s0 = inlined_call_operand.vmem [shape: bf16[2,256,256], index: 0, kind: input, shape index: {}]
  %s1 = inlined_call_operand.vmem [shape: bf16[256,128], index: 1, kind: input, shape index: {}]
  %s2 = inlined_call_operand.vmem [shape: f32[1,128], index: 2, kind: input, shape index: {}]
  %s3 = inlined_call_operand.vmem [shape: bf16[128,128], index: 3, kind: input, shape index: {}]
  %s4 = inlined_call_operand.vmem [shape: f32[1,128], index: 4, kind: input, shape index: {}]
  %s5 = inlined_call_operand.vmem [shape: bf16[128,128], index: 5, kind: input, shape index: {}]
  %s6 = inlined_call_operand.vmem [shape: f32[1,128], index: 6, kind: input, shape index: {}]
  %s7 = inlined_call_operand.vmem [shape: bf16[128,128], index: 7, kind: input, shape index: {}]
  %s8 = inlined_call_operand.vmem [shape: f32[1,128], index: 8, kind: input, shape index: {}]
  %s9 = inlined_call_operand.vmem [shape: bf16[128,128], index: 9, kind: input, shape index: {}]
  %s10 = inlined_call_operand.vmem [shape: f32[1,128], index: 10, kind: input, shape index: {}]
  %s11 = inlined_call_operand.vmem [shape: bf16[128,256], index: 11, kind: input, shape index: {}]
  %s12 = inlined_call_operand.vmem [shape: f32[1,256], index: 12, kind: input, shape index: {}]
  %s13 = inlined_call_operand.vmem [shape: f32[1,128], index: 13, kind: input, shape index: {}]
  %s14 = inlined_call_operand.vmem [shape: f32[1,128], index: 14, kind: input, shape index: {}]
  %s15 = inlined_call_operand.vmem [shape: f32[1,128], index: 15, kind: input, shape index: {}]
  %s16 = inlined_call_operand.vmem [shape: bf16[128,128], index: 16, kind: input, shape index: {}]
  %s17 = inlined_call_operand.vmem [shape: f32[1,128], index: 17, kind: input, shape index: {}]
  %s18 = inlined_call_operand.vmem [shape: bf16[128,128], index: 18, kind: input, shape index: {}]
  %s19 = inlined_call_operand.vmem [shape: f32[1,128], index: 19, kind: input, shape index: {}]
  %s20 = inlined_call_operand.vmem [shape: bf16[128,128], index: 20, kind: input, shape index: {}]
  %s21 = inlined_call_operand.vmem [shape: f32[1,128], index: 21, kind: input, shape index: {}]
  %s22 = inlined_call_operand.vmem [shape: bf16[128,128], index: 22, kind: input, shape index: {}]
  %s23 = inlined_call_operand.vmem [shape: f32[1,128], index: 23, kind: input, shape index: {}]
  %s24 = inlined_call_operand.vmem [shape: bf16[128,128], index: 24, kind: input, shape index: {}]
  %s25 = inlined_call_operand.vmem [shape: f32[1,128], index: 25, kind: input, shape index: {}]
  %s26 = inlined_call_operand.vmem [shape: f32[1,128], index: 26, kind: input, shape index: {}]
  %s27 = inlined_call_operand.<no memory space> [shape: f32[1,1], index: 27, kind: input, shape index: {}]
  %s28 = inlined_call_operand.hbm [shape: bf16[256,256], index: 28, kind: output, shape index: {}]
  %s29 = sld [smem:[#allocation0]]
  $region122: #{full_model_forward.1} parent=0
    _
  %s31 = ssub.s32 1, %s29
  %s32 = scalar_select 0, %s31, %s29
  %v33 = vstv %s27
  %34 = vst [vmem:[#allocation2] sm:$0x1] %v33
  $region1: #{full_model_forward.1} parent=0
    #allocation3 [shape = 'u8[131072]{0}', space=vmem, size = 0x20000, scoped, tag = 'output window, operand 0, single buffered']
    #allocation4 [shape = 's32[1]{0}', space=sflag, size = 0x4, scoped, tag = 'scoped memory for full_model_forward.1']
    %35 = vsyncpa [#allocation4], 0
    // Predicated region
    $region2: #{full_model_forward.1} parent=1 // pred_check
      _
    $region3: #{full_model_forward.1} parent=1 // pred_check_branch
      %37 = sbr.rel (0) target = $region5
    $region4: #{full_model_forward.1} parent=1 // pred_region
      _
    $region5: #{full_model_forward.1} parent=1 // pred_fallthru
      _
    // Predicated region
    $region6: #{full_model_forward.1} parent=1 // pred_check
      _
    $region7: #{full_model_forward.1} parent=1 // pred_check_branch
      %39 = sbr.rel (0) target = $region9
    $region8: #{full_model_forward.1} parent=1 // pred_region
      _
    $region9: #{full_model_forward.1} parent=1 // pred_fallthru
      _
    // Predicated region
    $region10: #{full_model_forward.1} parent=1 // pred_check
      _
    $region11: #{full_model_forward.1} parent=1 // pred_check_branch
      %41 = sbr.rel (0) target = $region13
    $region12: #{full_model_forward.1} parent=1 // pred_region
      _
    $region13: #{full_model_forward.1} parent=1 // pred_fallthru
      _
    // Predicated region
    $region14: #{full_model_forward.1} parent=1 // pred_check
      _
    $region15: #{full_model_forward.1} parent=1 // pred_check_branch
      %43 = sbr.rel (0) target = $region17
    $region16: #{full_model_forward.1} parent=1 // pred_region
      _
    $region17: #{full_model_forward.1} parent=1 // pred_fallthru
      _
    // Predicated region
    $region18: #{full_model_forward.1} parent=1 // pred_check
      _
    $region19: #{full_model_forward.1} parent=1 // pred_check_branch
      %45 = sbr.rel (0) target = $region21
    $region20: #{full_model_forward.1} parent=1 // pred_region
      _
    $region21: #{full_model_forward.1} parent=1 // pred_fallthru
      _
    // Predicated region
    $region22: #{full_model_forward.1} parent=1 // pred_check
      _
    $region23: #{full_model_forward.1} parent=1 // pred_check_branch
      %47 = sbr.rel (0) target = $region25
    $region24: #{full_model_forward.1} parent=1 // pred_region
      _
    $region25: #{full_model_forward.1} parent=1 // pred_fallthru
      _
    // Predicated region
    $region26: #{full_model_forward.1} parent=1 // pred_check
      _
    $region27: #{full_model_forward.1} parent=1 // pred_check_branch
      %49 = sbr.rel (0) target = $region29
    $region28: #{full_model_forward.1} parent=1 // pred_region
      _
    $region29: #{full_model_forward.1} parent=1 // pred_fallthru
      _
    // Predicated region
    $region30: #{full_model_forward.1} parent=1 // pred_check
      _
    $region31: #{full_model_forward.1} parent=1 // pred_check_branch
      %51 = sbr.rel (0) target = $region33
    $region32: #{full_model_forward.1} parent=1 // pred_region
      _
    $region33: #{full_model_forward.1} parent=1 // pred_fallthru
      _
    // Predicated region
    $region34: #{full_model_forward.1} parent=1 // pred_check
      _
    $region35: #{full_model_forward.1} parent=1 // pred_check_branch
      %53 = sbr.rel (0) target = $region37
    $region36: #{full_model_forward.1} parent=1 // pred_region
      _
    $region37: #{full_model_forward.1} parent=1 // pred_fallthru
      _
    // Predicated region
    $region38: #{full_model_forward.1} parent=1 // pred_check
      _
    $region39: #{full_model_forward.1} parent=1 // pred_check_branch
      %55 = sbr.rel (0) target = $region41
    $region40: #{full_model_forward.1} parent=1 // pred_region
      _
    $region41: #{full_model_forward.1} parent=1 // pred_fallthru
      _
    // Predicated region
    $region42: #{full_model_forward.1} parent=1 // pred_check
      _
    $region43: #{full_model_forward.1} parent=1 // pred_check_branch
      %57 = sbr.rel (0) target = $region45
    $region44: #{full_model_forward.1} parent=1 // pred_region
      _
    $region45: #{full_model_forward.1} parent=1 // pred_fallthru
      _
    // Predicated region
    $region46: #{full_model_forward.1} parent=1 // pred_check
      _
    $region47: #{full_model_forward.1} parent=1 // pred_check_branch
      %59 = sbr.rel (0) target = $region49
    $region48: #{full_model_forward.1} parent=1 // pred_region
      _
    $region49: #{full_model_forward.1} parent=1 // pred_fallthru
      _
    // Predicated region
    $region50: #{full_model_forward.1} parent=1 // pred_check
      _
    $region51: #{full_model_forward.1} parent=1 // pred_check_branch
      %61 = sbr.rel (0) target = $region53
    $region52: #{full_model_forward.1} parent=1 // pred_region
      _
    $region53: #{full_model_forward.1} parent=1 // pred_fallthru
      _
    // Predicated region
    $region54: #{full_model_forward.1} parent=1 // pred_check
      _
    $region55: #{full_model_forward.1} parent=1 // pred_check_branch
      %63 = sbr.rel (0) target = $region57
    $region56: #{full_model_forward.1} parent=1 // pred_region
      _
    $region57: #{full_model_forward.1} parent=1 // pred_fallthru
      _
    // Predicated region
    $region58: #{full_model_forward.1} parent=1 // pred_check
      _
    $region59: #{full_model_forward.1} parent=1 // pred_check_branch
      %65 = sbr.rel (0) target = $region61
    $region60: #{full_model_forward.1} parent=1 // pred_region
      _
    $region61: #{full_model_forward.1} parent=1 // pred_fallthru
      _
    // Predicated region
    $region62: #{full_model_forward.1} parent=1 // pred_check
      _
    $region63: #{full_model_forward.1} parent=1 // pred_check_branch
      %67 = sbr.rel (0) target = $region65
    $region64: #{full_model_forward.1} parent=1 // pred_region
      _
    $region65: #{full_model_forward.1} parent=1 // pred_fallthru
      _
    // Predicated region
    $region66: #{full_model_forward.1} parent=1 // pred_check
      _
    $region67: #{full_model_forward.1} parent=1 // pred_check_branch
      %69 = sbr.rel (0) target = $region69
    $region68: #{full_model_forward.1} parent=1 // pred_region
      _
    $region69: #{full_model_forward.1} parent=1 // pred_fallthru
      _
    // Predicated region
    $region70: #{full_model_forward.1} parent=1 // pred_check
      _
    $region71: #{full_model_forward.1} parent=1 // pred_check_branch
      %71 = sbr.rel (0) target = $region73
    $region72: #{full_model_forward.1} parent=1 // pred_region
      _
    $region73: #{full_model_forward.1} parent=1 // pred_fallthru
      _
    // Predicated region
    $region74: #{full_model_forward.1} parent=1 // pred_check
      _
    $region75: #{full_model_forward.1} parent=1 // pred_check_branch
      %73 = sbr.rel (0) target = $region77
    $region76: #{full_model_forward.1} parent=1 // pred_region
      _
    $region77: #{full_model_forward.1} parent=1 // pred_fallthru
      _
    // Predicated region
    $region78: #{full_model_forward.1} parent=1 // pred_check
      _
    $region79: #{full_model_forward.1} parent=1 // pred_check_branch
      %75 = sbr.rel (0) target = $region81
    $region80: #{full_model_forward.1} parent=1 // pred_region
      _
    $region81: #{full_model_forward.1} parent=1 // pred_fallthru
      _
    // Predicated region
    $region82: #{full_model_forward.1} parent=1 // pred_check
      _
    $region83: #{full_model_forward.1} parent=1 // pred_check_branch
      %77 = sbr.rel (0) target = $region85
    $region84: #{full_model_forward.1} parent=1 // pred_region
      _
    $region85: #{full_model_forward.1} parent=1 // pred_fallthru
      _
    // Predicated region
    $region86: #{full_model_forward.1} parent=1 // pred_check
      _
    $region87: #{full_model_forward.1} parent=1 // pred_check_branch
      %79 = sbr.rel (0) target = $region89
    $region88: #{full_model_forward.1} parent=1 // pred_region
      _
    $region89: #{full_model_forward.1} parent=1 // pred_fallthru
      _
    // Predicated region
    $region90: #{full_model_forward.1} parent=1 // pred_check
      _
    $region91: #{full_model_forward.1} parent=1 // pred_check_branch
      %81 = sbr.rel (0) target = $region93
    $region92: #{full_model_forward.1} parent=1 // pred_region
      _
    $region93: #{full_model_forward.1} parent=1 // pred_fallthru
      _
    // Predicated region
    $region94: #{full_model_forward.1} parent=1 // pred_check
      _
    $region95: #{full_model_forward.1} parent=1 // pred_check_branch
      %83 = sbr.rel (0) target = $region97
    $region96: #{full_model_forward.1} parent=1 // pred_region
      _
    $region97: #{full_model_forward.1} parent=1 // pred_fallthru
      _
    // Predicated region
    $region98: #{full_model_forward.1} parent=1 // pred_check
      _
    $region99: #{full_model_forward.1} parent=1 // pred_check_branch
      %85 = sbr.rel (0) target = $region101
    $region100: #{full_model_forward.1} parent=1 // pred_region
      _
    $region101: #{full_model_forward.1} parent=1 // pred_fallthru
      _
    // Predicated region
    $region102: #{full_model_forward.1} parent=1 // pred_check
      _
    $region103: #{full_model_forward.1} parent=1 // pred_check_branch
      %87 = sbr.rel (0) target = $region105
    $region104: #{full_model_forward.1} parent=1 // pred_region
      _
    $region105: #{full_model_forward.1} parent=1 // pred_fallthru
      _
    // Predicated region
    $region106: #{full_model_forward.1} parent=1 // pred_check
      _
    $region107: #{full_model_forward.1} parent=1 // pred_check_branch
      %89 = sbr.rel (0) target = $region109
    $region108: #{full_model_forward.1} parent=1 // pred_region
      _
    $region109: #{full_model_forward.1} parent=1 // pred_fallthru
      _
    // Predicated region
    $region110: #{full_model_forward.1} parent=1 // pred_check
      _
    $region111: #{full_model_forward.1} parent=1 // pred_check_branch
      %91 = sbr.rel (0) target = $region113
    $region112: #{full_model_forward.1} parent=1 // pred_region
      _
    $region113: #{full_model_forward.1} parent=1 // pred_fallthru
      _
    %v92 = vld [vmem:[%s0] sm:$0xff]
    %v93 = vld [vmem:[%s0 + $0x8] sm:$0xff]
    %v94 = vld [vmem:[%s0 + $0x10] sm:$0xff]
    %v95 = vld [vmem:[%s0 + $0x18] sm:$0xff]
    %v96 = vld [vmem:[%s0 + $0x20] sm:$0xff]
    %v97 = vld [vmem:[%s0 + $0x28] sm:$0xff]
    %v98 = vld [vmem:[%s0 + $0x30] sm:$0xff]
    %v99 = vld [vmem:[%s0 + $0x38] sm:$0xff]
    %v100 = vld [vmem:[%s0 + $0x40] sm:$0xff]
    %v101 = vld [vmem:[%s0 + $0x48] sm:$0xff]
    %v102 = vld [vmem:[%s0 + $0x50] sm:$0xff]
    %v103 = vld [vmem:[%s0 + $0x58] sm:$0xff]
    %v104 = vld [vmem:[%s0 + $0x60] sm:$0xff]
    %v105 = vld [vmem:[%s0 + $0x68] sm:$0xff]
    %v106 = vld [vmem:[%s0 + $0x70] sm:$0xff]
    %v107 = vld [vmem:[%s0 + $0x78] sm:$0xff]
    %v108 = vld [vmem:[%s0 + $0x80] sm:$0xff]
    %v109 = vld [vmem:[%s0 + $0x88] sm:$0xff]
    %v110 = vld [vmem:[%s0 + $0x90] sm:$0xff]
    %v111 = vld [vmem:[%s0 + $0x98] sm:$0xff]
    %v112 = vld [vmem:[%s0 + $0xa0] sm:$0xff]
    %v113 = vld [vmem:[%s0 + $0xa8] sm:$0xff]
    %v114 = vld [vmem:[%s0 + $0xb0] sm:$0xff]
    %v115 = vld [vmem:[%s0 + $0xb8] sm:$0xff]
    %v116 = vld [vmem:[%s0 + $0xc0] sm:$0xff]
    %v117 = vld [vmem:[%s0 + $0xc8] sm:$0xff]
    %v118 = vld [vmem:[%s0 + $0xd0] sm:$0xff]
    %v119 = vld [vmem:[%s0 + $0xd8] sm:$0xff]
    %v120 = vld [vmem:[%s0 + $0xe0] sm:$0xff]
    %v121 = vld [vmem:[%s0 + $0xe8] sm:$0xff]
    %v122 = vld [vmem:[%s0 + $0xf0] sm:$0xff]
    %v123 = vld [vmem:[%s0 + $0xf8] sm:$0xff]
    %v124 = vld [vmem:[%s0 + $0x100] sm:$0xff]
    %v125 = vld [vmem:[%s0 + $0x108] sm:$0xff]
    %v126 = vld [vmem:[%s0 + $0x110] sm:$0xff]
    %v127 = vld [vmem:[%s0 + $0x118] sm:$0xff]
    %v128 = vld [vmem:[%s0 + $0x120] sm:$0xff]
    %v129 = vld [vmem:[%s0 + $0x128] sm:$0xff]
    %v130 = vld [vmem:[%s0 + $0x130] sm:$0xff]
    %v131 = vld [vmem:[%s0 + $0x138] sm:$0xff]
    %v132 = vld [vmem:[%s0 + $0x140] sm:$0xff]
    %v133 = vld [vmem:[%s0 + $0x148] sm:$0xff]
    %v134 = vld [vmem:[%s0 + $0x150] sm:$0xff]
    %v135 = vld [vmem:[%s0 + $0x158] sm:$0xff]
    %v136 = vld [vmem:[%s0 + $0x160] sm:$0xff]
    %v137 = vld [vmem:[%s0 + $0x168] sm:$0xff]
    %v138 = vld [vmem:[%s0 + $0x170] sm:$0xff]
    %v139 = vld [vmem:[%s0 + $0x178] sm:$0xff]
    %v140 = vld [vmem:[%s0 + $0x180] sm:$0xff]
    %v141 = vld [vmem:[%s0 + $0x188] sm:$0xff]
    %v142 = vld [vmem:[%s0 + $0x190] sm:$0xff]
    %v143 = vld [vmem:[%s0 + $0x198] sm:$0xff]
    %v144 = vld [vmem:[%s0 + $0x1a0] sm:$0xff]
    %v145 = vld [vmem:[%s0 + $0x1a8] sm:$0xff]
    %v146 = vld [vmem:[%s0 + $0x1b0] sm:$0xff]
    %v147 = vld [vmem:[%s0 + $0x1b8] sm:$0xff]
    %v148 = vld [vmem:[%s0 + $0x1c0] sm:$0xff]
    %v149 = vld [vmem:[%s0 + $0x1c8] sm:$0xff]
    %v150 = vld [vmem:[%s0 + $0x1d0] sm:$0xff]
    %v151 = vld [vmem:[%s0 + $0x1d8] sm:$0xff]
    %v152 = vld [vmem:[%s0 + $0x1e0] sm:$0xff]
    %v153 = vld [vmem:[%s0 + $0x1e8] sm:$0xff]
    %v154 = vld [vmem:[%s0 + $0x1f0] sm:$0xff]
    %v155 = vld [vmem:[%s0 + $0x1f8] sm:$0xff]
    %v156 = vld [vmem:[%s1] sm:$0xf]
    %v157 = vld [vmem:[%s1 + $0x4] sm:$0xf]
    %v158 = vld [vmem:[%s1 + $0x8] sm:$0xf]
    %v159 = vld [vmem:[%s1 + $0xc] sm:$0xf]
    %v160 = vld [vmem:[%s1 + $0x10] sm:$0xf]
    %v161 = vld [vmem:[%s1 + $0x14] sm:$0xf]
    %v162 = vld [vmem:[%s1 + $0x18] sm:$0xf]
    %v163 = vld [vmem:[%s1 + $0x1c] sm:$0xf]
    %v164 = vld [vmem:[%s1 + $0x20] sm:$0xf]
    %v165 = vld [vmem:[%s1 + $0x24] sm:$0xf]
    %v166 = vld [vmem:[%s1 + $0x28] sm:$0xf]
    %v167 = vld [vmem:[%s1 + $0x2c] sm:$0xf]
    %v168 = vld [vmem:[%s1 + $0x30] sm:$0xf]
    %v169 = vld [vmem:[%s1 + $0x34] sm:$0xf]
    %v170 = vld [vmem:[%s1 + $0x38] sm:$0xf]
    %v171 = vld [vmem:[%s1 + $0x3c] sm:$0xf]
    %v172 = vld [vmem:[%s1 + $0x40] sm:$0xf]
    %v173 = vld [vmem:[%s1 + $0x44] sm:$0xf]
    %v174 = vld [vmem:[%s1 + $0x48] sm:$0xf]
    %v175 = vld [vmem:[%s1 + $0x4c] sm:$0xf]
    %v176 = vld [vmem:[%s1 + $0x50] sm:$0xf]
    %v177 = vld [vmem:[%s1 + $0x54] sm:$0xf]
    %v178 = vld [vmem:[%s1 + $0x58] sm:$0xf]
    %v179 = vld [vmem:[%s1 + $0x5c] sm:$0xf]
    %v180 = vld [vmem:[%s1 + $0x60] sm:$0xf]
    %v181 = vld [vmem:[%s1 + $0x64] sm:$0xf]
    %v182 = vld [vmem:[%s1 + $0x68] sm:$0xf]
    %v183 = vld [vmem:[%s1 + $0x6c] sm:$0xf]
    %v184 = vld [vmem:[%s1 + $0x70] sm:$0xf]
    %v185 = vld [vmem:[%s1 + $0x74] sm:$0xf]
    %v186 = vld [vmem:[%s1 + $0x78] sm:$0xf]
    %v187 = vld [vmem:[%s1 + $0x7c] sm:$0xf]
    %v188 = vld [vmem:[%s2] sm:$0x1]
    %v190 = vperm.slane %v188, 0
    %v256 = vunpack.c.l.b16 %v92
    %v257 = vunpack.c.h.b16 %v92
    %v258 = vunpack.c.l.b16 %v93
    %v259 = vunpack.c.h.b16 %v93
    %v260 = vunpack.c.l.b16 %v94
    %v261 = vunpack.c.h.b16 %v94
    %v262 = vunpack.c.l.b16 %v95
    %v263 = vunpack.c.h.b16 %v95
    %v264 = vunpack.c.l.b16 %v96
    %v265 = vunpack.c.h.b16 %v96
    %v266 = vunpack.c.l.b16 %v97
    %v267 = vunpack.c.h.b16 %v97
    %v268 = vunpack.c.l.b16 %v98
    %v269 = vunpack.c.h.b16 %v98
    %v270 = vunpack.c.l.b16 %v99
    %v271 = vunpack.c.h.b16 %v99
    %v272 = vunpack.c.l.b16 %v100
    %v273 = vunpack.c.h.b16 %v100
    %v274 = vunpack.c.l.b16 %v101
    %v275 = vunpack.c.h.b16 %v101
    %v276 = vunpack.c.l.b16 %v102
    %v277 = vunpack.c.h.b16 %v102
    %v278 = vunpack.c.l.b16 %v103
    %v279 = vunpack.c.h.b16 %v103
    %v280 = vunpack.c.l.b16 %v104
    %v281 = vunpack.c.h.b16 %v104
    %v282 = vunpack.c.l.b16 %v105
    %v283 = vunpack.c.h.b16 %v105
    %v284 = vunpack.c.l.b16 %v106
    %v285 = vunpack.c.h.b16 %v106
    %v286 = vunpack.c.l.b16 %v107
    %v287 = vunpack.c.h.b16 %v107
    %v288 = vunpack.c.l.b16 %v108
    %v289 = vunpack.c.h.b16 %v108
    %v290 = vunpack.c.l.b16 %v109
    %v291 = vunpack.c.h.b16 %v109
    %v292 = vunpack.c.l.b16 %v110
    %v293 = vunpack.c.h.b16 %v110
    %v294 = vunpack.c.l.b16 %v111
    %v295 = vunpack.c.h.b16 %v111
    %v296 = vunpack.c.l.b16 %v112
    %v297 = vunpack.c.h.b16 %v112
    %v298 = vunpack.c.l.b16 %v113
    %v299 = vunpack.c.h.b16 %v113
    %v300 = vunpack.c.l.b16 %v114
    %v301 = vunpack.c.h.b16 %v114
    %v302 = vunpack.c.l.b16 %v115
    %v303 = vunpack.c.h.b16 %v115
    %v304 = vunpack.c.l.b16 %v116
    %v305 = vunpack.c.h.b16 %v116
    %v306 = vunpack.c.l.b16 %v117
    %v307 = vunpack.c.h.b16 %v117
    %v308 = vunpack.c.l.b16 %v118
    %v309 = vunpack.c.h.b16 %v118
    %v310 = vunpack.c.l.b16 %v119
    %v311 = vunpack.c.h.b16 %v119
    %v312 = vunpack.c.l.b16 %v120
    %v313 = vunpack.c.h.b16 %v120
    %v314 = vunpack.c.l.b16 %v121
    %v315 = vunpack.c.h.b16 %v121
    %v316 = vunpack.c.l.b16 %v122
    %v317 = vunpack.c.h.b16 %v122
    %v318 = vunpack.c.l.b16 %v123
    %v319 = vunpack.c.h.b16 %v123
    %v320 = vunpack.c.l.b16 %v124
    %v321 = vunpack.c.h.b16 %v124
    %v322 = vunpack.c.l.b16 %v125
    %v323 = vunpack.c.h.b16 %v125
    %v324 = vunpack.c.l.b16 %v126
    %v325 = vunpack.c.h.b16 %v126
    %v326 = vunpack.c.l.b16 %v127
    %v327 = vunpack.c.h.b16 %v127
    %v328 = vunpack.c.l.b16 %v128
    %v329 = vunpack.c.h.b16 %v128
    %v330 = vunpack.c.l.b16 %v129
    %v331 = vunpack.c.h.b16 %v129
    %v332 = vunpack.c.l.b16 %v130
    %v333 = vunpack.c.h.b16 %v130
    %v334 = vunpack.c.l.b16 %v131
    %v335 = vunpack.c.h.b16 %v131
    %v336 = vunpack.c.l.b16 %v132
    %v337 = vunpack.c.h.b16 %v132
    %v338 = vunpack.c.l.b16 %v133
    %v339 = vunpack.c.h.b16 %v133
    %v340 = vunpack.c.l.b16 %v134
    %v341 = vunpack.c.h.b16 %v134
    %v342 = vunpack.c.l.b16 %v135
    %v343 = vunpack.c.h.b16 %v135
    %v344 = vunpack.c.l.b16 %v136
    %v345 = vunpack.c.h.b16 %v136
    %v346 = vunpack.c.l.b16 %v137
    %v347 = vunpack.c.h.b16 %v137
    %v348 = vunpack.c.l.b16 %v138
    %v349 = vunpack.c.h.b16 %v138
    %v350 = vunpack.c.l.b16 %v139
    %v351 = vunpack.c.h.b16 %v139
    %v352 = vunpack.c.l.b16 %v140
    %v353 = vunpack.c.h.b16 %v140
    %v354 = vunpack.c.l.b16 %v141
    %v355 = vunpack.c.h.b16 %v141
    %v356 = vunpack.c.l.b16 %v142
    %v357 = vunpack.c.h.b16 %v142
    %v358 = vunpack.c.l.b16 %v143
    %v359 = vunpack.c.h.b16 %v143
    %v360 = vunpack.c.l.b16 %v144
    %v361 = vunpack.c.h.b16 %v144
    %v362 = vunpack.c.l.b16 %v145
    %v363 = vunpack.c.h.b16 %v145
    %v364 = vunpack.c.l.b16 %v146
    %v365 = vunpack.c.h.b16 %v146
    %v366 = vunpack.c.l.b16 %v147
    %v367 = vunpack.c.h.b16 %v147
    %v368 = vunpack.c.l.b16 %v148
    %v369 = vunpack.c.h.b16 %v148
    %v370 = vunpack.c.l.b16 %v149
    %v371 = vunpack.c.h.b16 %v149
    %v372 = vunpack.c.l.b16 %v150
    %v373 = vunpack.c.h.b16 %v150
    %v374 = vunpack.c.l.b16 %v151
    %v375 = vunpack.c.h.b16 %v151
    %v376 = vunpack.c.l.b16 %v152
    %v377 = vunpack.c.h.b16 %v152
    %v378 = vunpack.c.l.b16 %v153
    %v379 = vunpack.c.h.b16 %v153
    %v380 = vunpack.c.l.b16 %v154
    %v381 = vunpack.c.h.b16 %v154
    %v382 = vunpack.c.l.b16 %v155
    %v383 = vunpack.c.h.b16 %v155
    %v384 = vpack.c.b16 %v258, %v256
    %v385 = vpack.c.b16 %v259, %v257
    %v386 = vpack.c.b16 %v262, %v260
    %v387 = vpack.c.b16 %v263, %v261
    %v388 = vpack.c.b16 %v266, %v264
    %v389 = vpack.c.b16 %v267, %v265
    %v390 = vpack.c.b16 %v270, %v268
    %v391 = vpack.c.b16 %v271, %v269
    %v392 = vpack.c.b16 %v274, %v272
    %v393 = vpack.c.b16 %v275, %v273
    %v394 = vpack.c.b16 %v278, %v276
    %v395 = vpack.c.b16 %v279, %v277
    %v396 = vpack.c.b16 %v282, %v280
    %v397 = vpack.c.b16 %v283, %v281
    %v398 = vpack.c.b16 %v286, %v284
    %v399 = vpack.c.b16 %v287, %v285
    %v400 = vpack.c.b16 %v290, %v288
    %v401 = vpack.c.b16 %v291, %v289
    %v402 = vpack.c.b16 %v294, %v292
    %v403 = vpack.c.b16 %v295, %v293
    %v404 = vpack.c.b16 %v298, %v296
    %v405 = vpack.c.b16 %v299, %v297
    %v406 = vpack.c.b16 %v302, %v300
    %v407 = vpack.c.b16 %v303, %v301
    %v408 = vpack.c.b16 %v306, %v304
    %v409 = vpack.c.b16 %v307, %v305
    %v410 = vpack.c.b16 %v310, %v308
    %v411 = vpack.c.b16 %v311, %v309
    %v412 = vpack.c.b16 %v314, %v312
    %v413 = vpack.c.b16 %v315, %v313
    %v414 = vpack.c.b16 %v318, %v316
    %v415 = vpack.c.b16 %v319, %v317
    %v416 = vpack.c.b16 %v322, %v320
    %v417 = vpack.c.b16 %v323, %v321
    %v418 = vpack.c.b16 %v326, %v324
    %v419 = vpack.c.b16 %v327, %v325
    %v420 = vpack.c.b16 %v330, %v328
    %v421 = vpack.c.b16 %v331, %v329
    %v422 = vpack.c.b16 %v334, %v332
    %v423 = vpack.c.b16 %v335, %v333
    %v424 = vpack.c.b16 %v338, %v336
    %v425 = vpack.c.b16 %v339, %v337
    %v426 = vpack.c.b16 %v342, %v340
    %v427 = vpack.c.b16 %v343, %v341
    %v428 = vpack.c.b16 %v346, %v344
    %v429 = vpack.c.b16 %v347, %v345
    %v430 = vpack.c.b16 %v350, %v348
    %v431 = vpack.c.b16 %v351, %v349
    %v432 = vpack.c.b16 %v354, %v352
    %v433 = vpack.c.b16 %v355, %v353
    %v434 = vpack.c.b16 %v358, %v356
    %v435 = vpack.c.b16 %v359, %v357
    %v436 = vpack.c.b16 %v362, %v360
    %v437 = vpack.c.b16 %v363, %v361
    %v438 = vpack.c.b16 %v366, %v364
    %v439 = vpack.c.b16 %v367, %v365
    %v440 = vpack.c.b16 %v370, %v368
    %v441 = vpack.c.b16 %v371, %v369
    %v442 = vpack.c.b16 %v374, %v372
    %v443 = vpack.c.b16 %v375, %v373
    %v444 = vpack.c.b16 %v378, %v376
    %v445 = vpack.c.b16 %v379, %v377
    %v446 = vpack.c.b16 %v382, %v380
    %v447 = vpack.c.b16 %v383, %v381
    %v544 = vunpack.c.l.b16 %v156
    %v545 = vunpack.c.l.b16 %v157
    %v546 = vunpack.c.l.b16 %v158
    %v547 = vunpack.c.l.b16 %v159
    %v548 = vunpack.c.l.b16 %v160
    %v549 = vunpack.c.l.b16 %v161
    %v550 = vunpack.c.l.b16 %v162
    %v551 = vunpack.c.l.b16 %v163
    %v552 = vunpack.c.l.b16 %v164
    %v553 = vunpack.c.l.b16 %v165
    %v554 = vunpack.c.l.b16 %v166
    %v555 = vunpack.c.l.b16 %v167
    %v556 = vunpack.c.l.b16 %v168
    %v557 = vunpack.c.l.b16 %v169
    %v558 = vunpack.c.l.b16 %v170
    %v559 = vunpack.c.l.b16 %v171
    %v560 = vunpack.c.l.b16 %v172
    %v561 = vunpack.c.l.b16 %v173
    %v562 = vunpack.c.l.b16 %v174
    %v563 = vunpack.c.l.b16 %v175
    %v564 = vunpack.c.l.b16 %v176
    %v565 = vunpack.c.l.b16 %v177
    %v566 = vunpack.c.l.b16 %v178
    %v567 = vunpack.c.l.b16 %v179
    %v568 = vunpack.c.l.b16 %v180
    %v569 = vunpack.c.l.b16 %v181
    %v570 = vunpack.c.l.b16 %v182
    %v571 = vunpack.c.l.b16 %v183
    %v572 = vunpack.c.l.b16 %v184
    %v573 = vunpack.c.l.b16 %v185
    %v574 = vunpack.c.l.b16 %v186
    %v575 = vunpack.c.l.b16 %v187
    %v576 = vpack.c.b16 %v545, %v544
    %v577 = vpack.c.b16 %v547, %v546
    %v578 = vpack.c.b16 %v549, %v548
    %v579 = vpack.c.b16 %v551, %v550
    %v580 = vpack.c.b16 %v553, %v552
    %v581 = vpack.c.b16 %v555, %v554
    %v582 = vpack.c.b16 %v557, %v556
    %v583 = vpack.c.b16 %v559, %v558
    %v584 = vpack.c.b16 %v561, %v560
    %v585 = vpack.c.b16 %v563, %v562
    %v586 = vpack.c.b16 %v565, %v564
    %v587 = vpack.c.b16 %v567, %v566
    %v588 = vpack.c.b16 %v569, %v568
    %v589 = vpack.c.b16 %v571, %v570
    %v590 = vpack.c.b16 %v573, %v572
    %v591 = vpack.c.b16 %v575, %v574
    %608 = vmatpush.bf16.msra.mxu0 %v583
    %609 = vmatpush.bf16.msra.mxu0 %v582
    %610 = vmatpush.bf16.msra.mxu0 %v581
    %611 = vmatpush.bf16.msra.mxu0 %v580
    %612 = vmatpush.bf16.msra.mxu0 %v579
    %613 = vmatpush.bf16.msra.mxu0 %v578
    %614 = vmatpush.bf16.msra.mxu0 %v577
    %615 = vmatpush.bf16.msra.mxu0 %v576
    %616 = vmatmul.bf16.gmra.mxu0 %v384
    %v617 = vpop.f32.mrf.mxu0
    %v618 = vadd.f32 %v190, %v617
    %v619 = vpop.f32.mrf.mxu0
    %v620 = vadd.f32 %v190, %v619
    %621 = vmatmul.bf16.gmra.mxu0 %v386
    %v622 = vpop.f32.mrf.mxu0
    %v623 = vadd.f32 %v190, %v622
    %v624 = vpop.f32.mrf.mxu0
    %v625 = vadd.f32 %v190, %v624
    %626 = vmatmul.bf16.gmra.mxu0 %v388
    %v627 = vpop.f32.mrf.mxu0
    %v628 = vadd.f32 %v190, %v627
    %v629 = vpop.f32.mrf.mxu0
    %v630 = vadd.f32 %v190, %v629
    %631 = vmatmul.bf16.gmra.mxu0 %v390
    %v632 = vpop.f32.mrf.mxu0
    %v633 = vadd.f32 %v190, %v632
    %v634 = vpop.f32.mrf.mxu0
    %v635 = vadd.f32 %v190, %v634
    %636 = vmatmul.bf16.gmra.mxu0 %v392
    %v637 = vpop.f32.mrf.mxu0
    %v638 = vadd.f32 %v190, %v637
    %v639 = vpop.f32.mrf.mxu0
    %v640 = vadd.f32 %v190, %v639
    %641 = vmatmul.bf16.gmra.mxu0 %v394
    %v642 = vpop.f32.mrf.mxu0
    %v643 = vadd.f32 %v190, %v642
    %v644 = vpop.f32.mrf.mxu0
    %v645 = vadd.f32 %v190, %v644
    %646 = vmatmul.bf16.gmra.mxu0 %v396
    %v647 = vpop.f32.mrf.mxu0
    %v648 = vadd.f32 %v190, %v647
    %v649 = vpop.f32.mrf.mxu0
    %v650 = vadd.f32 %v190, %v649
    %651 = vmatmul.bf16.gmra.mxu0 %v398
    %v652 = vpop.f32.mrf.mxu0
    %v653 = vadd.f32 %v190, %v652
    %v654 = vpop.f32.mrf.mxu0
    %v655 = vadd.f32 %v190, %v654
    %656 = vmatmul.bf16.gmra.mxu0 %v400
    %v657 = vpop.f32.mrf.mxu0
    %v658 = vadd.f32 %v190, %v657
    %v659 = vpop.f32.mrf.mxu0
    %v660 = vadd.f32 %v190, %v659
    %661 = vmatmul.bf16.gmra.mxu0 %v402
    %v662 = vpop.f32.mrf.mxu0
    %v663 = vadd.f32 %v190, %v662
    %v664 = vpop.f32.mrf.mxu0
    %v665 = vadd.f32 %v190, %v664
    %666 = vmatmul.bf16.gmra.mxu0 %v404
    %v667 = vpop.f32.mrf.mxu0
    %v668 = vadd.f32 %v190, %v667
    %v669 = vpop.f32.mrf.mxu0
    %v670 = vadd.f32 %v190, %v669
    %671 = vmatmul.bf16.gmra.mxu0 %v406
    %v672 = vpop.f32.mrf.mxu0
    %v673 = vadd.f32 %v190, %v672
    %v674 = vpop.f32.mrf.mxu0
    %v675 = vadd.f32 %v190, %v674
    %676 = vmatmul.bf16.gmra.mxu0 %v408
    %v677 = vpop.f32.mrf.mxu0
    %v678 = vadd.f32 %v190, %v677
    %v679 = vpop.f32.mrf.mxu0
    %v680 = vadd.f32 %v190, %v679
    %681 = vmatmul.bf16.gmra.mxu0 %v410
    %v682 = vpop.f32.mrf.mxu0
    %v683 = vadd.f32 %v190, %v682
    %v684 = vpop.f32.mrf.mxu0
    %v685 = vadd.f32 %v190, %v684
    %686 = vmatmul.bf16.gmra.mxu0 %v412
    %v687 = vpop.f32.mrf.mxu0
    %v688 = vadd.f32 %v190, %v687
    %v689 = vpop.f32.mrf.mxu0
    %v690 = vadd.f32 %v190, %v689
    %691 = vmatmul.bf16.gmra.mxu0 %v414
    %v692 = vpop.f32.mrf.mxu0
    %v693 = vadd.f32 %v190, %v692
    %v694 = vpop.f32.mrf.mxu0
    %v695 = vadd.f32 %v190, %v694
    %696 = vmatmul.bf16.gmra.mxu0 %v416
    %v697 = vpop.f32.mrf.mxu0
    %v698 = vadd.f32 %v190, %v697
    %v699 = vpop.f32.mrf.mxu0
    %v700 = vadd.f32 %v190, %v699
    %701 = vmatmul.bf16.gmra.mxu0 %v418
    %v702 = vpop.f32.mrf.mxu0
    %v703 = vadd.f32 %v190, %v702
    %v704 = vpop.f32.mrf.mxu0
    %v705 = vadd.f32 %v190, %v704
    %706 = vmatmul.bf16.gmra.mxu0 %v420
    %v707 = vpop.f32.mrf.mxu0
    %v708 = vadd.f32 %v190, %v707
    %v709 = vpop.f32.mrf.mxu0
    %v710 = vadd.f32 %v190, %v709
    %711 = vmatmul.bf16.gmra.mxu0 %v422
    %v712 = vpop.f32.mrf.mxu0
    %v713 = vadd.f32 %v190, %v712
    %v714 = vpop.f32.mrf.mxu0
    %v715 = vadd.f32 %v190, %v714
    %716 = vmatmul.bf16.gmra.mxu0 %v424
    %v717 = vpop.f32.mrf.mxu0
    %v718 = vadd.f32 %v190, %v717
    %v719 = vpop.f32.mrf.mxu0
    %v720 = vadd.f32 %v190, %v719
    %721 = vmatmul.bf16.gmra.mxu0 %v426
    %v722 = vpop.f32.mrf.mxu0
    %v723 = vadd.f32 %v190, %v722
    %v724 = vpop.f32.mrf.mxu0
    %v725 = vadd.f32 %v190, %v724
    %726 = vmatmul.bf16.gmra.mxu0 %v428
    %v727 = vpop.f32.mrf.mxu0
    %v728 = vadd.f32 %v190, %v727
    %v729 = vpop.f32.mrf.mxu0
    %v730 = vadd.f32 %v190, %v729
    %731 = vmatmul.bf16.gmra.mxu0 %v430
    %v732 = vpop.f32.mrf.mxu0
    %v733 = vadd.f32 %v190, %v732
    %v734 = vpop.f32.mrf.mxu0
    %v735 = vadd.f32 %v190, %v734
    %736 = vmatmul.bf16.gmra.mxu0 %v432
    %v737 = vpop.f32.mrf.mxu0
    %v738 = vadd.f32 %v190, %v737
    %v739 = vpop.f32.mrf.mxu0
    %v740 = vadd.f32 %v190, %v739
    %741 = vmatmul.bf16.gmra.mxu0 %v434
    %v742 = vpop.f32.mrf.mxu0
    %v743 = vadd.f32 %v190, %v742
    %v744 = vpop.f32.mrf.mxu0
    %v745 = vadd.f32 %v190, %v744
    %746 = vmatmul.bf16.gmra.mxu0 %v436
    %v747 = vpop.f32.mrf.mxu0
    %v748 = vadd.f32 %v190, %v747
    %v749 = vpop.f32.mrf.mxu0
    %v750 = vadd.f32 %v190, %v749
    %751 = vmatmul.bf16.gmra.mxu0 %v438
    %v752 = vpop.f32.mrf.mxu0
    %v753 = vadd.f32 %v190, %v752
    %v754 = vpop.f32.mrf.mxu0
    %v755 = vadd.f32 %v190, %v754
    %756 = vmatmul.bf16.gmra.mxu0 %v440
    %v757 = vpop.f32.mrf.mxu0
    %v758 = vadd.f32 %v190, %v757
    %v759 = vpop.f32.mrf.mxu0
    %v760 = vadd.f32 %v190, %v759
    %761 = vmatmul.bf16.gmra.mxu0 %v442
    %v762 = vpop.f32.mrf.mxu0
    %v763 = vadd.f32 %v190, %v762
    %v764 = vpop.f32.mrf.mxu0
    %v765 = vadd.f32 %v190, %v764
    %766 = vmatmul.bf16.gmra.mxu0 %v444
    %v767 = vpop.f32.mrf.mxu0
    %v768 = vadd.f32 %v190, %v767
    %v769 = vpop.f32.mrf.mxu0
    %v770 = vadd.f32 %v190, %v769
    %771 = vmatmul.bf16.gmra.mxu0 %v446
    %v772 = vpop.f32.mrf.mxu0
    %v773 = vadd.f32 %v190, %v772
    %v774 = vpop.f32.mrf.mxu0
    %v775 = vadd.f32 %v190, %v774
    %776 = vdwg.mxu0
    %777 = vmatpush.bf16.msra.mxu0 %v591
    %778 = vmatpush.bf16.msra.mxu0 %v590
    %779 = vmatpush.bf16.msra.mxu0 %v589
    %780 = vmatpush.bf16.msra.mxu0 %v588
    %781 = vmatpush.bf16.msra.mxu0 %v587
    %782 = vmatpush.bf16.msra.mxu0 %v586
    %783 = vmatpush.bf16.msra.mxu0 %v585
    %784 = vmatpush.bf16.msra.mxu0 %v584
    %785 = vmatmul.bf16.gmra.mxu0 %v385
    %v786 = vpop.f32.mrf.mxu0
    %v787 = vadd.f32 %v618, %v786
    %v788 = vpop.f32.mrf.mxu0
    %v789 = vadd.f32 %v620, %v788
    %790 = vmatmul.bf16.gmra.mxu0 %v387
    %v791 = vpop.f32.mrf.mxu0
    %v792 = vadd.f32 %v623, %v791
    %v793 = vpop.f32.mrf.mxu0
    %v794 = vadd.f32 %v625, %v793
    %795 = vmatmul.bf16.gmra.mxu0 %v389
    %v796 = vpop.f32.mrf.mxu0
    %v797 = vadd.f32 %v628, %v796
    %v798 = vpop.f32.mrf.mxu0
    %v799 = vadd.f32 %v630, %v798
    %800 = vmatmul.bf16.gmra.mxu0 %v391
    %v801 = vpop.f32.mrf.mxu0
    %v802 = vadd.f32 %v633, %v801
    %v803 = vpop.f32.mrf.mxu0
    %v804 = vadd.f32 %v635, %v803
    %805 = vmatmul.bf16.gmra.mxu0 %v393
    %v806 = vpop.f32.mrf.mxu0
    %v807 = vadd.f32 %v638, %v806
    %v808 = vpop.f32.mrf.mxu0
    %v809 = vadd.f32 %v640, %v808
    %810 = vmatmul.bf16.gmra.mxu0 %v395
    %v811 = vpop.f32.mrf.mxu0
    %v812 = vadd.f32 %v643, %v811
    %v813 = vpop.f32.mrf.mxu0
    %v814 = vadd.f32 %v645, %v813
    %815 = vmatmul.bf16.gmra.mxu0 %v397
    %v816 = vpop.f32.mrf.mxu0
    %v817 = vadd.f32 %v648, %v816
    %v818 = vpop.f32.mrf.mxu0
    %v819 = vadd.f32 %v650, %v818
    %820 = vmatmul.bf16.gmra.mxu0 %v399
    %v821 = vpop.f32.mrf.mxu0
    %v822 = vadd.f32 %v653, %v821
    %v823 = vpop.f32.mrf.mxu0
    %v824 = vadd.f32 %v655, %v823
    %825 = vmatmul.bf16.gmra.mxu0 %v401
    %v826 = vpop.f32.mrf.mxu0
    %v827 = vadd.f32 %v658, %v826
    %v828 = vpop.f32.mrf.mxu0
    %v829 = vadd.f32 %v660, %v828
    %830 = vmatmul.bf16.gmra.mxu0 %v403
    %v831 = vpop.f32.mrf.mxu0
    %v832 = vadd.f32 %v663, %v831
    %v833 = vpop.f32.mrf.mxu0
    %v834 = vadd.f32 %v665, %v833
    %835 = vmatmul.bf16.gmra.mxu0 %v405
    %v836 = vpop.f32.mrf.mxu0
    %v837 = vadd.f32 %v668, %v836
    %v838 = vpop.f32.mrf.mxu0
    %v839 = vadd.f32 %v670, %v838
    %840 = vmatmul.bf16.gmra.mxu0 %v407
    %v841 = vpop.f32.mrf.mxu0
    %v842 = vadd.f32 %v673, %v841
    %v843 = vpop.f32.mrf.mxu0
    %v844 = vadd.f32 %v675, %v843
    %845 = vmatmul.bf16.gmra.mxu0 %v409
    %v846 = vpop.f32.mrf.mxu0
    %v847 = vadd.f32 %v678, %v846
    %v848 = vpop.f32.mrf.mxu0
    %v849 = vadd.f32 %v680, %v848
    %850 = vmatmul.bf16.gmra.mxu0 %v411
    %v851 = vpop.f32.mrf.mxu0
    %v852 = vadd.f32 %v683, %v851
    %v853 = vpop.f32.mrf.mxu0
    %v854 = vadd.f32 %v685, %v853
    %855 = vmatmul.bf16.gmra.mxu0 %v413
    %v856 = vpop.f32.mrf.mxu0
    %v857 = vadd.f32 %v688, %v856
    %v858 = vpop.f32.mrf.mxu0
    %v859 = vadd.f32 %v690, %v858
    %860 = vmatmul.bf16.gmra.mxu0 %v415
    %v861 = vpop.f32.mrf.mxu0
    %v862 = vadd.f32 %v693, %v861
    %v863 = vpop.f32.mrf.mxu0
    %v864 = vadd.f32 %v695, %v863
    %865 = vmatmul.bf16.gmra.mxu0 %v417
    %v866 = vpop.f32.mrf.mxu0
    %v867 = vadd.f32 %v698, %v866
    %v868 = vpop.f32.mrf.mxu0
    %v869 = vadd.f32 %v700, %v868
    %870 = vmatmul.bf16.gmra.mxu0 %v419
    %v871 = vpop.f32.mrf.mxu0
    %v872 = vadd.f32 %v703, %v871
    %v873 = vpop.f32.mrf.mxu0
    %v874 = vadd.f32 %v705, %v873
    %875 = vmatmul.bf16.gmra.mxu0 %v421
    %v876 = vpop.f32.mrf.mxu0
    %v877 = vadd.f32 %v708, %v876
    %v878 = vpop.f32.mrf.mxu0
    %v879 = vadd.f32 %v710, %v878
    %880 = vmatmul.bf16.gmra.mxu0 %v423
    %v881 = vpop.f32.mrf.mxu0
    %v882 = vadd.f32 %v713, %v881
    %v883 = vpop.f32.mrf.mxu0
    %v884 = vadd.f32 %v715, %v883
    %885 = vmatmul.bf16.gmra.mxu0 %v425
    %v886 = vpop.f32.mrf.mxu0
    %v887 = vadd.f32 %v718, %v886
    %v888 = vpop.f32.mrf.mxu0
    %v889 = vadd.f32 %v720, %v888
    %890 = vmatmul.bf16.gmra.mxu0 %v427
    %v891 = vpop.f32.mrf.mxu0
    %v892 = vadd.f32 %v723, %v891
    %v893 = vpop.f32.mrf.mxu0
    %v894 = vadd.f32 %v725, %v893
    %895 = vmatmul.bf16.gmra.mxu0 %v429
    %v896 = vpop.f32.mrf.mxu0
    %v897 = vadd.f32 %v728, %v896
    %v898 = vpop.f32.mrf.mxu0
    %v899 = vadd.f32 %v730, %v898
    %900 = vmatmul.bf16.gmra.mxu0 %v431
    %v901 = vpop.f32.mrf.mxu0
    %v902 = vadd.f32 %v733, %v901
    %v903 = vpop.f32.mrf.mxu0
    %v904 = vadd.f32 %v735, %v903
    %905 = vmatmul.bf16.gmra.mxu0 %v433
    %v906 = vpop.f32.mrf.mxu0
    %v907 = vadd.f32 %v738, %v906
    %v908 = vpop.f32.mrf.mxu0
    %v909 = vadd.f32 %v740, %v908
    %910 = vmatmul.bf16.gmra.mxu0 %v435
    %v911 = vpop.f32.mrf.mxu0
    %v912 = vadd.f32 %v743, %v911
    %v913 = vpop.f32.mrf.mxu0
    %v914 = vadd.f32 %v745, %v913
    %915 = vmatmul.bf16.gmra.mxu0 %v437
    %v916 = vpop.f32.mrf.mxu0
    %v917 = vadd.f32 %v748, %v916
    %v918 = vpop.f32.mrf.mxu0
    %v919 = vadd.f32 %v750, %v918
    %920 = vmatmul.bf16.gmra.mxu0 %v439
    %v921 = vpop.f32.mrf.mxu0
    %v922 = vadd.f32 %v753, %v921
    %v923 = vpop.f32.mrf.mxu0
    %v924 = vadd.f32 %v755, %v923
    %925 = vmatmul.bf16.gmra.mxu0 %v441
    %v926 = vpop.f32.mrf.mxu0
    %v927 = vadd.f32 %v758, %v926
    %v928 = vpop.f32.mrf.mxu0
    %v929 = vadd.f32 %v760, %v928
    %930 = vmatmul.bf16.gmra.mxu0 %v443
    %v931 = vpop.f32.mrf.mxu0
    %v932 = vadd.f32 %v763, %v931
    %v933 = vpop.f32.mrf.mxu0
    %v934 = vadd.f32 %v765, %v933
    %935 = vmatmul.bf16.gmra.mxu0 %v445
    %v936 = vpop.f32.mrf.mxu0
    %v937 = vadd.f32 %v768, %v936
    %v938 = vpop.f32.mrf.mxu0
    %v939 = vadd.f32 %v770, %v938
    %940 = vmatmul.bf16.gmra.mxu0 %v447
    %v941 = vpop.f32.mrf.mxu0
    %v942 = vadd.f32 %v773, %v941
    %v943 = vpop.f32.mrf.mxu0
    %v944 = vadd.f32 %v775, %v943
    %945 = vdwg.mxu0
    %v946 = vmax.f32 %v787, 0.0
    %v947 = vmax.f32 %v789, 0.0
    %v948 = vmax.f32 %v792, 0.0
    %v949 = vmax.f32 %v794, 0.0
    %v950 = vmax.f32 %v797, 0.0
    %v951 = vmax.f32 %v799, 0.0
    %v952 = vmax.f32 %v802, 0.0
    %v953 = vmax.f32 %v804, 0.0
    %v954 = vmax.f32 %v807, 0.0
    %v955 = vmax.f32 %v809, 0.0
    %v956 = vmax.f32 %v812, 0.0
    %v957 = vmax.f32 %v814, 0.0
    %v958 = vmax.f32 %v817, 0.0
    %v959 = vmax.f32 %v819, 0.0
    %v960 = vmax.f32 %v822, 0.0
    %v961 = vmax.f32 %v824, 0.0
    %v962 = vmax.f32 %v827, 0.0
    %v963 = vmax.f32 %v829, 0.0
    %v964 = vmax.f32 %v832, 0.0
    %v965 = vmax.f32 %v834, 0.0
    %v966 = vmax.f32 %v837, 0.0
    %v967 = vmax.f32 %v839, 0.0
    %v968 = vmax.f32 %v842, 0.0
    %v969 = vmax.f32 %v844, 0.0
    %v970 = vmax.f32 %v847, 0.0
    %v971 = vmax.f32 %v849, 0.0
    %v972 = vmax.f32 %v852, 0.0
    %v973 = vmax.f32 %v854, 0.0
    %v974 = vmax.f32 %v857, 0.0
    %v975 = vmax.f32 %v859, 0.0
    %v976 = vmax.f32 %v862, 0.0
    %v977 = vmax.f32 %v864, 0.0
    %v978 = vmax.f32 %v867, 0.0
    %v979 = vmax.f32 %v869, 0.0
    %v980 = vmax.f32 %v872, 0.0
    %v981 = vmax.f32 %v874, 0.0
    %v982 = vmax.f32 %v877, 0.0
    %v983 = vmax.f32 %v879, 0.0
    %v984 = vmax.f32 %v882, 0.0
    %v985 = vmax.f32 %v884, 0.0
    %v986 = vmax.f32 %v887, 0.0
    %v987 = vmax.f32 %v889, 0.0
    %v988 = vmax.f32 %v892, 0.0
    %v989 = vmax.f32 %v894, 0.0
    %v990 = vmax.f32 %v897, 0.0
    %v991 = vmax.f32 %v899, 0.0
    %v992 = vmax.f32 %v902, 0.0
    %v993 = vmax.f32 %v904, 0.0
    %v994 = vmax.f32 %v907, 0.0
    %v995 = vmax.f32 %v909, 0.0
    %v996 = vmax.f32 %v912, 0.0
    %v997 = vmax.f32 %v914, 0.0
    %v998 = vmax.f32 %v917, 0.0
    %v999 = vmax.f32 %v919, 0.0
    %v1000 = vmax.f32 %v922, 0.0
    %v1001 = vmax.f32 %v924, 0.0
    %v1002 = vmax.f32 %v927, 0.0
    %v1003 = vmax.f32 %v929, 0.0
    %v1004 = vmax.f32 %v932, 0.0
    %v1005 = vmax.f32 %v934, 0.0
    %v1006 = vmax.f32 %v937, 0.0
    %v1007 = vmax.f32 %v939, 0.0
    %v1008 = vmax.f32 %v942, 0.0
    %v1009 = vmax.f32 %v944, 0.0
    %v1010 = vpack.c.bf16 %v947, %v946
    %v1011 = vpack.c.bf16 %v949, %v948
    %v1012 = vpack.c.bf16 %v951, %v950
    %v1013 = vpack.c.bf16 %v953, %v952
    %v1014 = vpack.c.bf16 %v955, %v954
    %v1015 = vpack.c.bf16 %v957, %v956
    %v1016 = vpack.c.bf16 %v959, %v958
    %v1017 = vpack.c.bf16 %v961, %v960
    %v1018 = vpack.c.bf16 %v963, %v962
    %v1019 = vpack.c.bf16 %v965, %v964
    %v1020 = vpack.c.bf16 %v967, %v966
    %v1021 = vpack.c.bf16 %v969, %v968
    %v1022 = vpack.c.bf16 %v971, %v970
    %v1023 = vpack.c.bf16 %v973, %v972
    %v1024 = vpack.c.bf16 %v975, %v974
    %v1025 = vpack.c.bf16 %v977, %v976
    %v1026 = vpack.c.bf16 %v979, %v978
    %v1027 = vpack.c.bf16 %v981, %v980
    %v1028 = vpack.c.bf16 %v983, %v982
    %v1029 = vpack.c.bf16 %v985, %v984
    %v1030 = vpack.c.bf16 %v987, %v986
    %v1031 = vpack.c.bf16 %v989, %v988
    %v1032 = vpack.c.bf16 %v991, %v990
    %v1033 = vpack.c.bf16 %v993, %v992
    %v1034 = vpack.c.bf16 %v995, %v994
    %v1035 = vpack.c.bf16 %v997, %v996
    %v1036 = vpack.c.bf16 %v999, %v998
    %v1037 = vpack.c.bf16 %v1001, %v1000
    %v1038 = vpack.c.bf16 %v1003, %v1002
    %v1039 = vpack.c.bf16 %v1005, %v1004
    %v1040 = vpack.c.bf16 %v1007, %v1006
    %v1041 = vpack.c.bf16 %v1009, %v1008
    %v1042 = vld [vmem:[%s3] sm:$0xf]
    %v1043 = vld [vmem:[%s3 + $0x4] sm:$0xf]
    %v1044 = vld [vmem:[%s3 + $0x8] sm:$0xf]
    %v1045 = vld [vmem:[%s3 + $0xc] sm:$0xf]
    %v1046 = vld [vmem:[%s3 + $0x10] sm:$0xf]
    %v1047 = vld [vmem:[%s3 + $0x14] sm:$0xf]
    %v1048 = vld [vmem:[%s3 + $0x18] sm:$0xf]
    %v1049 = vld [vmem:[%s3 + $0x1c] sm:$0xf]
    %v1050 = vld [vmem:[%s3 + $0x20] sm:$0xf]
    %v1051 = vld [vmem:[%s3 + $0x24] sm:$0xf]
    %v1052 = vld [vmem:[%s3 + $0x28] sm:$0xf]
    %v1053 = vld [vmem:[%s3 + $0x2c] sm:$0xf]
    %v1054 = vld [vmem:[%s3 + $0x30] sm:$0xf]
    %v1055 = vld [vmem:[%s3 + $0x34] sm:$0xf]
    %v1056 = vld [vmem:[%s3 + $0x38] sm:$0xf]
    %v1057 = vld [vmem:[%s3 + $0x3c] sm:$0xf]
    %v1058 = vld [vmem:[%s4] sm:$0x1]
    %v1060 = vperm.slane %v1058, 0
    %v1078 = vunpack.c.l.b16 %v1042
    %v1079 = vunpack.c.l.b16 %v1043
    %v1080 = vunpack.c.l.b16 %v1044
    %v1081 = vunpack.c.l.b16 %v1045
    %v1082 = vunpack.c.l.b16 %v1046
    %v1083 = vunpack.c.l.b16 %v1047
    %v1084 = vunpack.c.l.b16 %v1048
    %v1085 = vunpack.c.l.b16 %v1049
    %v1086 = vunpack.c.l.b16 %v1050
    %v1087 = vunpack.c.l.b16 %v1051
    %v1088 = vunpack.c.l.b16 %v1052
    %v1089 = vunpack.c.l.b16 %v1053
    %v1090 = vunpack.c.l.b16 %v1054
    %v1091 = vunpack.c.l.b16 %v1055
    %v1092 = vunpack.c.l.b16 %v1056
    %v1093 = vunpack.c.l.b16 %v1057
    %v1094 = vpack.c.b16 %v1079, %v1078
    %v1095 = vpack.c.b16 %v1081, %v1080
    %v1096 = vpack.c.b16 %v1083, %v1082
    %v1097 = vpack.c.b16 %v1085, %v1084
    %v1098 = vpack.c.b16 %v1087, %v1086
    %v1099 = vpack.c.b16 %v1089, %v1088
    %v1100 = vpack.c.b16 %v1091, %v1090
    %v1101 = vpack.c.b16 %v1093, %v1092
    %1110 = vmatpush.bf16.msra.mxu0 %v1101
    %1111 = vmatpush.bf16.msra.mxu0 %v1100
    %1112 = vmatpush.bf16.msra.mxu0 %v1099
    %1113 = vmatpush.bf16.msra.mxu0 %v1098
    %1114 = vmatpush.bf16.msra.mxu0 %v1097
    %1115 = vmatpush.bf16.msra.mxu0 %v1096
    %1116 = vmatpush.bf16.msra.mxu0 %v1095
    %1117 = vmatpush.bf16.msra.mxu0 %v1094
    %1118 = vmatmul.bf16.gmra.mxu0 %v1010
    %v1119 = vpop.f32.mrf.mxu0
    %v1120 = vadd.f32 %v1060, %v1119
    %v1121 = vpop.f32.mrf.mxu0
    %v1122 = vadd.f32 %v1060, %v1121
    %1123 = vmatmul.bf16.gmra.mxu0 %v1011
    %v1124 = vpop.f32.mrf.mxu0
    %v1125 = vadd.f32 %v1060, %v1124
    %v1126 = vpop.f32.mrf.mxu0
    %v1127 = vadd.f32 %v1060, %v1126
    %1128 = vmatmul.bf16.gmra.mxu0 %v1012
    %v1129 = vpop.f32.mrf.mxu0
    %v1130 = vadd.f32 %v1060, %v1129
    %v1131 = vpop.f32.mrf.mxu0
    %v1132 = vadd.f32 %v1060, %v1131
    %1133 = vmatmul.bf16.gmra.mxu0 %v1013
    %v1134 = vpop.f32.mrf.mxu0
    %v1135 = vadd.f32 %v1060, %v1134
    %v1136 = vpop.f32.mrf.mxu0
    %v1137 = vadd.f32 %v1060, %v1136
    %1138 = vmatmul.bf16.gmra.mxu0 %v1014
    %v1139 = vpop.f32.mrf.mxu0
    %v1140 = vadd.f32 %v1060, %v1139
    %v1141 = vpop.f32.mrf.mxu0
    %v1142 = vadd.f32 %v1060, %v1141
    %1143 = vmatmul.bf16.gmra.mxu0 %v1015
    %v1144 = vpop.f32.mrf.mxu0
    %v1145 = vadd.f32 %v1060, %v1144
    %v1146 = vpop.f32.mrf.mxu0
    %v1147 = vadd.f32 %v1060, %v1146
    %1148 = vmatmul.bf16.gmra.mxu0 %v1016
    %v1149 = vpop.f32.mrf.mxu0
    %v1150 = vadd.f32 %v1060, %v1149
    %v1151 = vpop.f32.mrf.mxu0
    %v1152 = vadd.f32 %v1060, %v1151
    %1153 = vmatmul.bf16.gmra.mxu0 %v1017
    %v1154 = vpop.f32.mrf.mxu0
    %v1155 = vadd.f32 %v1060, %v1154
    %v1156 = vpop.f32.mrf.mxu0
    %v1157 = vadd.f32 %v1060, %v1156
    %1158 = vmatmul.bf16.gmra.mxu0 %v1018
    %v1159 = vpop.f32.mrf.mxu0
    %v1160 = vadd.f32 %v1060, %v1159
    %v1161 = vpop.f32.mrf.mxu0
    %v1162 = vadd.f32 %v1060, %v1161
    %1163 = vmatmul.bf16.gmra.mxu0 %v1019
    %v1164 = vpop.f32.mrf.mxu0
    %v1165 = vadd.f32 %v1060, %v1164
    %v1166 = vpop.f32.mrf.mxu0
    %v1167 = vadd.f32 %v1060, %v1166
    %1168 = vmatmul.bf16.gmra.mxu0 %v1020
    %v1169 = vpop.f32.mrf.mxu0
    %v1170 = vadd.f32 %v1060, %v1169
    %v1171 = vpop.f32.mrf.mxu0
    %v1172 = vadd.f32 %v1060, %v1171
    %1173 = vmatmul.bf16.gmra.mxu0 %v1021
    %v1174 = vpop.f32.mrf.mxu0
    %v1175 = vadd.f32 %v1060, %v1174
    %v1176 = vpop.f32.mrf.mxu0
    %v1177 = vadd.f32 %v1060, %v1176
    %1178 = vmatmul.bf16.gmra.mxu0 %v1022
    %v1179 = vpop.f32.mrf.mxu0
    %v1180 = vadd.f32 %v1060, %v1179
    %v1181 = vpop.f32.mrf.mxu0
    %v1182 = vadd.f32 %v1060, %v1181
    %1183 = vmatmul.bf16.gmra.mxu0 %v1023
    %v1184 = vpop.f32.mrf.mxu0
    %v1185 = vadd.f32 %v1060, %v1184
    %v1186 = vpop.f32.mrf.mxu0
    %v1187 = vadd.f32 %v1060, %v1186
    %1188 = vmatmul.bf16.gmra.mxu0 %v1024
    %v1189 = vpop.f32.mrf.mxu0
    %v1190 = vadd.f32 %v1060, %v1189
    %v1191 = vpop.f32.mrf.mxu0
    %v1192 = vadd.f32 %v1060, %v1191
    %1193 = vmatmul.bf16.gmra.mxu0 %v1025
    %v1194 = vpop.f32.mrf.mxu0
    %v1195 = vadd.f32 %v1060, %v1194
    %v1196 = vpop.f32.mrf.mxu0
    %v1197 = vadd.f32 %v1060, %v1196
    %1198 = vmatmul.bf16.gmra.mxu0 %v1026
    %v1199 = vpop.f32.mrf.mxu0
    %v1200 = vadd.f32 %v1060, %v1199
    %v1201 = vpop.f32.mrf.mxu0
    %v1202 = vadd.f32 %v1060, %v1201
    %1203 = vmatmul.bf16.gmra.mxu0 %v1027
    %v1204 = vpop.f32.mrf.mxu0
    %v1205 = vadd.f32 %v1060, %v1204
    %v1206 = vpop.f32.mrf.mxu0
    %v1207 = vadd.f32 %v1060, %v1206
    %1208 = vmatmul.bf16.gmra.mxu0 %v1028
    %v1209 = vpop.f32.mrf.mxu0
    %v1210 = vadd.f32 %v1060, %v1209
    %v1211 = vpop.f32.mrf.mxu0
    %v1212 = vadd.f32 %v1060, %v1211
    %1213 = vmatmul.bf16.gmra.mxu0 %v1029
    %v1214 = vpop.f32.mrf.mxu0
    %v1215 = vadd.f32 %v1060, %v1214
    %v1216 = vpop.f32.mrf.mxu0
    %v1217 = vadd.f32 %v1060, %v1216
    %1218 = vmatmul.bf16.gmra.mxu0 %v1030
    %v1219 = vpop.f32.mrf.mxu0
    %v1220 = vadd.f32 %v1060, %v1219
    %v1221 = vpop.f32.mrf.mxu0
    %v1222 = vadd.f32 %v1060, %v1221
    %1223 = vmatmul.bf16.gmra.mxu0 %v1031
    %v1224 = vpop.f32.mrf.mxu0
    %v1225 = vadd.f32 %v1060, %v1224
    %v1226 = vpop.f32.mrf.mxu0
    %v1227 = vadd.f32 %v1060, %v1226
    %1228 = vmatmul.bf16.gmra.mxu0 %v1032
    %v1229 = vpop.f32.mrf.mxu0
    %v1230 = vadd.f32 %v1060, %v1229
    %v1231 = vpop.f32.mrf.mxu0
    %v1232 = vadd.f32 %v1060, %v1231
    %1233 = vmatmul.bf16.gmra.mxu0 %v1033
    %v1234 = vpop.f32.mrf.mxu0
    %v1235 = vadd.f32 %v1060, %v1234
    %v1236 = vpop.f32.mrf.mxu0
    %v1237 = vadd.f32 %v1060, %v1236
    %1238 = vmatmul.bf16.gmra.mxu0 %v1034
    %v1239 = vpop.f32.mrf.mxu0
    %v1240 = vadd.f32 %v1060, %v1239
    %v1241 = vpop.f32.mrf.mxu0
    %v1242 = vadd.f32 %v1060, %v1241
    %1243 = vmatmul.bf16.gmra.mxu0 %v1035
    %v1244 = vpop.f32.mrf.mxu0
    %v1245 = vadd.f32 %v1060, %v1244
    %v1246 = vpop.f32.mrf.mxu0
    %v1247 = vadd.f32 %v1060, %v1246
    %1248 = vmatmul.bf16.gmra.mxu0 %v1036
    %v1249 = vpop.f32.mrf.mxu0
    %v1250 = vadd.f32 %v1060, %v1249
    %v1251 = vpop.f32.mrf.mxu0
    %v1252 = vadd.f32 %v1060, %v1251
    %1253 = vmatmul.bf16.gmra.mxu0 %v1037
    %v1254 = vpop.f32.mrf.mxu0
    %v1255 = vadd.f32 %v1060, %v1254
    %v1256 = vpop.f32.mrf.mxu0
    %v1257 = vadd.f32 %v1060, %v1256
    %1258 = vmatmul.bf16.gmra.mxu0 %v1038
    %v1259 = vpop.f32.mrf.mxu0
    %v1260 = vadd.f32 %v1060, %v1259
    %v1261 = vpop.f32.mrf.mxu0
    %v1262 = vadd.f32 %v1060, %v1261
    %1263 = vmatmul.bf16.gmra.mxu0 %v1039
    %v1264 = vpop.f32.mrf.mxu0
    %v1265 = vadd.f32 %v1060, %v1264
    %v1266 = vpop.f32.mrf.mxu0
    %v1267 = vadd.f32 %v1060, %v1266
    %1268 = vmatmul.bf16.gmra.mxu0 %v1040
    %v1269 = vpop.f32.mrf.mxu0
    %v1270 = vadd.f32 %v1060, %v1269
    %v1271 = vpop.f32.mrf.mxu0
    %v1272 = vadd.f32 %v1060, %v1271
    %1273 = vmatmul.bf16.gmra.mxu0 %v1041
    %v1274 = vpop.f32.mrf.mxu0
    %v1275 = vadd.f32 %v1060, %v1274
    %v1276 = vpop.f32.mrf.mxu0
    %v1277 = vadd.f32 %v1060, %v1276
    %1278 = vdwg.mxu0
    %v1279 = vmax.f32 %v1120, 0.0
    %v1280 = vmax.f32 %v1122, 0.0
    %v1281 = vmax.f32 %v1125, 0.0
    %v1282 = vmax.f32 %v1127, 0.0
    %v1283 = vmax.f32 %v1130, 0.0
    %v1284 = vmax.f32 %v1132, 0.0
    %v1285 = vmax.f32 %v1135, 0.0
    %v1286 = vmax.f32 %v1137, 0.0
    %v1287 = vmax.f32 %v1140, 0.0
    %v1288 = vmax.f32 %v1142, 0.0
    %v1289 = vmax.f32 %v1145, 0.0
    %v1290 = vmax.f32 %v1147, 0.0
    %v1291 = vmax.f32 %v1150, 0.0
    %v1292 = vmax.f32 %v1152, 0.0
    %v1293 = vmax.f32 %v1155, 0.0
    %v1294 = vmax.f32 %v1157, 0.0
    %v1295 = vmax.f32 %v1160, 0.0
    %v1296 = vmax.f32 %v1162, 0.0
    %v1297 = vmax.f32 %v1165, 0.0
    %v1298 = vmax.f32 %v1167, 0.0
    %v1299 = vmax.f32 %v1170, 0.0
    %v1300 = vmax.f32 %v1172, 0.0
    %v1301 = vmax.f32 %v1175, 0.0
    %v1302 = vmax.f32 %v1177, 0.0
    %v1303 = vmax.f32 %v1180, 0.0
    %v1304 = vmax.f32 %v1182, 0.0
    %v1305 = vmax.f32 %v1185, 0.0
    %v1306 = vmax.f32 %v1187, 0.0
    %v1307 = vmax.f32 %v1190, 0.0
    %v1308 = vmax.f32 %v1192, 0.0
    %v1309 = vmax.f32 %v1195, 0.0
    %v1310 = vmax.f32 %v1197, 0.0
    %v1311 = vmax.f32 %v1200, 0.0
    %v1312 = vmax.f32 %v1202, 0.0
    %v1313 = vmax.f32 %v1205, 0.0
    %v1314 = vmax.f32 %v1207, 0.0
    %v1315 = vmax.f32 %v1210, 0.0
    %v1316 = vmax.f32 %v1212, 0.0
    %v1317 = vmax.f32 %v1215, 0.0
    %v1318 = vmax.f32 %v1217, 0.0
    %v1319 = vmax.f32 %v1220, 0.0
    %v1320 = vmax.f32 %v1222, 0.0
    %v1321 = vmax.f32 %v1225, 0.0
    %v1322 = vmax.f32 %v1227, 0.0
    %v1323 = vmax.f32 %v1230, 0.0
    %v1324 = vmax.f32 %v1232, 0.0
    %v1325 = vmax.f32 %v1235, 0.0
    %v1326 = vmax.f32 %v1237, 0.0
    %v1327 = vmax.f32 %v1240, 0.0
    %v1328 = vmax.f32 %v1242, 0.0
    %v1329 = vmax.f32 %v1245, 0.0
    %v1330 = vmax.f32 %v1247, 0.0
    %v1331 = vmax.f32 %v1250, 0.0
    %v1332 = vmax.f32 %v1252, 0.0
    %v1333 = vmax.f32 %v1255, 0.0
    %v1334 = vmax.f32 %v1257, 0.0
    %v1335 = vmax.f32 %v1260, 0.0
    %v1336 = vmax.f32 %v1262, 0.0
    %v1337 = vmax.f32 %v1265, 0.0
    %v1338 = vmax.f32 %v1267, 0.0
    %v1339 = vmax.f32 %v1270, 0.0
    %v1340 = vmax.f32 %v1272, 0.0
    %v1341 = vmax.f32 %v1275, 0.0
    %v1342 = vmax.f32 %v1277, 0.0
    %v1343 = vpack.c.bf16 %v1280, %v1279
    %v1344 = vpack.c.bf16 %v1282, %v1281
    %v1345 = vpack.c.bf16 %v1284, %v1283
    %v1346 = vpack.c.bf16 %v1286, %v1285
    %v1347 = vpack.c.bf16 %v1288, %v1287
    %v1348 = vpack.c.bf16 %v1290, %v1289
    %v1349 = vpack.c.bf16 %v1292, %v1291
    %v1350 = vpack.c.bf16 %v1294, %v1293
    %v1351 = vpack.c.bf16 %v1296, %v1295
    %v1352 = vpack.c.bf16 %v1298, %v1297
    %v1353 = vpack.c.bf16 %v1300, %v1299
    %v1354 = vpack.c.bf16 %v1302, %v1301
    %v1355 = vpack.c.bf16 %v1304, %v1303
    %v1356 = vpack.c.bf16 %v1306, %v1305
    %v1357 = vpack.c.bf16 %v1308, %v1307
    %v1358 = vpack.c.bf16 %v1310, %v1309
    %v1359 = vpack.c.bf16 %v1312, %v1311
    %v1360 = vpack.c.bf16 %v1314, %v1313
    %v1361 = vpack.c.bf16 %v1316, %v1315
    %v1362 = vpack.c.bf16 %v1318, %v1317
    %v1363 = vpack.c.bf16 %v1320, %v1319
    %v1364 = vpack.c.bf16 %v1322, %v1321
    %v1365 = vpack.c.bf16 %v1324, %v1323
    %v1366 = vpack.c.bf16 %v1326, %v1325
    %v1367 = vpack.c.bf16 %v1328, %v1327
    %v1368 = vpack.c.bf16 %v1330, %v1329
    %v1369 = vpack.c.bf16 %v1332, %v1331
    %v1370 = vpack.c.bf16 %v1334, %v1333
    %v1371 = vpack.c.bf16 %v1336, %v1335
    %v1372 = vpack.c.bf16 %v1338, %v1337
    %v1373 = vpack.c.bf16 %v1340, %v1339
    %v1374 = vpack.c.bf16 %v1342, %v1341
    %v1375 = vld [vmem:[%s5] sm:$0xf]
    %v1376 = vld [vmem:[%s5 + $0x4] sm:$0xf]
    %v1377 = vld [vmem:[%s5 + $0x8] sm:$0xf]
    %v1378 = vld [vmem:[%s5 + $0xc] sm:$0xf]
    %v1379 = vld [vmem:[%s5 + $0x10] sm:$0xf]
    %v1380 = vld [vmem:[%s5 + $0x14] sm:$0xf]
    %v1381 = vld [vmem:[%s5 + $0x18] sm:$0xf]
    %v1382 = vld [vmem:[%s5 + $0x1c] sm:$0xf]
    %v1383 = vld [vmem:[%s5 + $0x20] sm:$0xf]
    %v1384 = vld [vmem:[%s5 + $0x24] sm:$0xf]
    %v1385 = vld [vmem:[%s5 + $0x28] sm:$0xf]
    %v1386 = vld [vmem:[%s5 + $0x2c] sm:$0xf]
    %v1387 = vld [vmem:[%s5 + $0x30] sm:$0xf]
    %v1388 = vld [vmem:[%s5 + $0x34] sm:$0xf]
    %v1389 = vld [vmem:[%s5 + $0x38] sm:$0xf]
    %v1390 = vld [vmem:[%s5 + $0x3c] sm:$0xf]
    %v1391 = vld [vmem:[%s6] sm:$0x1]
    %v1393 = vperm.slane %v1391, 0
    %v1411 = vunpack.c.l.b16 %v1375
    %v1412 = vunpack.c.l.b16 %v1376
    %v1413 = vunpack.c.l.b16 %v1377
    %v1414 = vunpack.c.l.b16 %v1378
    %v1415 = vunpack.c.l.b16 %v1379
    %v1416 = vunpack.c.l.b16 %v1380
    %v1417 = vunpack.c.l.b16 %v1381
    %v1418 = vunpack.c.l.b16 %v1382
    %v1419 = vunpack.c.l.b16 %v1383
    %v1420 = vunpack.c.l.b16 %v1384
    %v1421 = vunpack.c.l.b16 %v1385
    %v1422 = vunpack.c.l.b16 %v1386
    %v1423 = vunpack.c.l.b16 %v1387
    %v1424 = vunpack.c.l.b16 %v1388
    %v1425 = vunpack.c.l.b16 %v1389
    %v1426 = vunpack.c.l.b16 %v1390
    %v1427 = vpack.c.b16 %v1412, %v1411
    %v1428 = vpack.c.b16 %v1414, %v1413
    %v1429 = vpack.c.b16 %v1416, %v1415
    %v1430 = vpack.c.b16 %v1418, %v1417
    %v1431 = vpack.c.b16 %v1420, %v1419
    %v1432 = vpack.c.b16 %v1422, %v1421
    %v1433 = vpack.c.b16 %v1424, %v1423
    %v1434 = vpack.c.b16 %v1426, %v1425
    %1443 = vmatpush.bf16.msra.mxu0 %v1434
    %1444 = vmatpush.bf16.msra.mxu0 %v1433
    %1445 = vmatpush.bf16.msra.mxu0 %v1432
    %1446 = vmatpush.bf16.msra.mxu0 %v1431
    %1447 = vmatpush.bf16.msra.mxu0 %v1430
    %1448 = vmatpush.bf16.msra.mxu0 %v1429
    %1449 = vmatpush.bf16.msra.mxu0 %v1428
    %1450 = vmatpush.bf16.msra.mxu0 %v1427
    %1451 = vmatmul.bf16.gmra.mxu0 %v1343
    %v1452 = vpop.f32.mrf.mxu0
    %v1453 = vadd.f32 %v1393, %v1452
    %v1454 = vpop.f32.mrf.mxu0
    %v1455 = vadd.f32 %v1393, %v1454
    %1456 = vmatmul.bf16.gmra.mxu0 %v1344
    %v1457 = vpop.f32.mrf.mxu0
    %v1458 = vadd.f32 %v1393, %v1457
    %v1459 = vpop.f32.mrf.mxu0
    %v1460 = vadd.f32 %v1393, %v1459
    %1461 = vmatmul.bf16.gmra.mxu0 %v1345
    %v1462 = vpop.f32.mrf.mxu0
    %v1463 = vadd.f32 %v1393, %v1462
    %v1464 = vpop.f32.mrf.mxu0
    %v1465 = vadd.f32 %v1393, %v1464
    %1466 = vmatmul.bf16.gmra.mxu0 %v1346
    %v1467 = vpop.f32.mrf.mxu0
    %v1468 = vadd.f32 %v1393, %v1467
    %v1469 = vpop.f32.mrf.mxu0
    %v1470 = vadd.f32 %v1393, %v1469
    %1471 = vmatmul.bf16.gmra.mxu0 %v1347
    %v1472 = vpop.f32.mrf.mxu0
    %v1473 = vadd.f32 %v1393, %v1472
    %v1474 = vpop.f32.mrf.mxu0
    %v1475 = vadd.f32 %v1393, %v1474
    %1476 = vmatmul.bf16.gmra.mxu0 %v1348
    %v1477 = vpop.f32.mrf.mxu0
    %v1478 = vadd.f32 %v1393, %v1477
    %v1479 = vpop.f32.mrf.mxu0
    %v1480 = vadd.f32 %v1393, %v1479
    %1481 = vmatmul.bf16.gmra.mxu0 %v1349
    %v1482 = vpop.f32.mrf.mxu0
    %v1483 = vadd.f32 %v1393, %v1482
    %v1484 = vpop.f32.mrf.mxu0
    %v1485 = vadd.f32 %v1393, %v1484
    %1486 = vmatmul.bf16.gmra.mxu0 %v1350
    %v1487 = vpop.f32.mrf.mxu0
    %v1488 = vadd.f32 %v1393, %v1487
    %v1489 = vpop.f32.mrf.mxu0
    %v1490 = vadd.f32 %v1393, %v1489
    %1491 = vmatmul.bf16.gmra.mxu0 %v1351
    %v1492 = vpop.f32.mrf.mxu0
    %v1493 = vadd.f32 %v1393, %v1492
    %v1494 = vpop.f32.mrf.mxu0
    %v1495 = vadd.f32 %v1393, %v1494
    %1496 = vmatmul.bf16.gmra.mxu0 %v1352
    %v1497 = vpop.f32.mrf.mxu0
    %v1498 = vadd.f32 %v1393, %v1497
    %v1499 = vpop.f32.mrf.mxu0
    %v1500 = vadd.f32 %v1393, %v1499
    %1501 = vmatmul.bf16.gmra.mxu0 %v1353
    %v1502 = vpop.f32.mrf.mxu0
    %v1503 = vadd.f32 %v1393, %v1502
    %v1504 = vpop.f32.mrf.mxu0
    %v1505 = vadd.f32 %v1393, %v1504
    %1506 = vmatmul.bf16.gmra.mxu0 %v1354
    %v1507 = vpop.f32.mrf.mxu0
    %v1508 = vadd.f32 %v1393, %v1507
    %v1509 = vpop.f32.mrf.mxu0
    %v1510 = vadd.f32 %v1393, %v1509
    %1511 = vmatmul.bf16.gmra.mxu0 %v1355
    %v1512 = vpop.f32.mrf.mxu0
    %v1513 = vadd.f32 %v1393, %v1512
    %v1514 = vpop.f32.mrf.mxu0
    %v1515 = vadd.f32 %v1393, %v1514
    %1516 = vmatmul.bf16.gmra.mxu0 %v1356
    %v1517 = vpop.f32.mrf.mxu0
    %v1518 = vadd.f32 %v1393, %v1517
    %v1519 = vpop.f32.mrf.mxu0
    %v1520 = vadd.f32 %v1393, %v1519
    %1521 = vmatmul.bf16.gmra.mxu0 %v1357
    %v1522 = vpop.f32.mrf.mxu0
    %v1523 = vadd.f32 %v1393, %v1522
    %v1524 = vpop.f32.mrf.mxu0
    %v1525 = vadd.f32 %v1393, %v1524
    %1526 = vmatmul.bf16.gmra.mxu0 %v1358
    %v1527 = vpop.f32.mrf.mxu0
    %v1528 = vadd.f32 %v1393, %v1527
    %v1529 = vpop.f32.mrf.mxu0
    %v1530 = vadd.f32 %v1393, %v1529
    %1531 = vmatmul.bf16.gmra.mxu0 %v1359
    %v1532 = vpop.f32.mrf.mxu0
    %v1533 = vadd.f32 %v1393, %v1532
    %v1534 = vpop.f32.mrf.mxu0
    %v1535 = vadd.f32 %v1393, %v1534
    %1536 = vmatmul.bf16.gmra.mxu0 %v1360
    %v1537 = vpop.f32.mrf.mxu0
    %v1538 = vadd.f32 %v1393, %v1537
    %v1539 = vpop.f32.mrf.mxu0
    %v1540 = vadd.f32 %v1393, %v1539
    %1541 = vmatmul.bf16.gmra.mxu0 %v1361
    %v1542 = vpop.f32.mrf.mxu0
    %v1543 = vadd.f32 %v1393, %v1542
    %v1544 = vpop.f32.mrf.mxu0
    %v1545 = vadd.f32 %v1393, %v1544
    %1546 = vmatmul.bf16.gmra.mxu0 %v1362
    %v1547 = vpop.f32.mrf.mxu0
    %v1548 = vadd.f32 %v1393, %v1547
    %v1549 = vpop.f32.mrf.mxu0
    %v1550 = vadd.f32 %v1393, %v1549
    %1551 = vmatmul.bf16.gmra.mxu0 %v1363
    %v1552 = vpop.f32.mrf.mxu0
    %v1553 = vadd.f32 %v1393, %v1552
    %v1554 = vpop.f32.mrf.mxu0
    %v1555 = vadd.f32 %v1393, %v1554
    %1556 = vmatmul.bf16.gmra.mxu0 %v1364
    %v1557 = vpop.f32.mrf.mxu0
    %v1558 = vadd.f32 %v1393, %v1557
    %v1559 = vpop.f32.mrf.mxu0
    %v1560 = vadd.f32 %v1393, %v1559
    %1561 = vmatmul.bf16.gmra.mxu0 %v1365
    %v1562 = vpop.f32.mrf.mxu0
    %v1563 = vadd.f32 %v1393, %v1562
    %v1564 = vpop.f32.mrf.mxu0
    %v1565 = vadd.f32 %v1393, %v1564
    %1566 = vmatmul.bf16.gmra.mxu0 %v1366
    %v1567 = vpop.f32.mrf.mxu0
    %v1568 = vadd.f32 %v1393, %v1567
    %v1569 = vpop.f32.mrf.mxu0
    %v1570 = vadd.f32 %v1393, %v1569
    %1571 = vmatmul.bf16.gmra.mxu0 %v1367
    %v1572 = vpop.f32.mrf.mxu0
    %v1573 = vadd.f32 %v1393, %v1572
    %v1574 = vpop.f32.mrf.mxu0
    %v1575 = vadd.f32 %v1393, %v1574
    %1576 = vmatmul.bf16.gmra.mxu0 %v1368
    %v1577 = vpop.f32.mrf.mxu0
    %v1578 = vadd.f32 %v1393, %v1577
    %v1579 = vpop.f32.mrf.mxu0
    %v1580 = vadd.f32 %v1393, %v1579
    %1581 = vmatmul.bf16.gmra.mxu0 %v1369
    %v1582 = vpop.f32.mrf.mxu0
    %v1583 = vadd.f32 %v1393, %v1582
    %v1584 = vpop.f32.mrf.mxu0
    %v1585 = vadd.f32 %v1393, %v1584
    %1586 = vmatmul.bf16.gmra.mxu0 %v1370
    %v1587 = vpop.f32.mrf.mxu0
    %v1588 = vadd.f32 %v1393, %v1587
    %v1589 = vpop.f32.mrf.mxu0
    %v1590 = vadd.f32 %v1393, %v1589
    %1591 = vmatmul.bf16.gmra.mxu0 %v1371
    %v1592 = vpop.f32.mrf.mxu0
    %v1593 = vadd.f32 %v1393, %v1592
    %v1594 = vpop.f32.mrf.mxu0
    %v1595 = vadd.f32 %v1393, %v1594
    %1596 = vmatmul.bf16.gmra.mxu0 %v1372
    %v1597 = vpop.f32.mrf.mxu0
    %v1598 = vadd.f32 %v1393, %v1597
    %v1599 = vpop.f32.mrf.mxu0
    %v1600 = vadd.f32 %v1393, %v1599
    %1601 = vmatmul.bf16.gmra.mxu0 %v1373
    %v1602 = vpop.f32.mrf.mxu0
    %v1603 = vadd.f32 %v1393, %v1602
    %v1604 = vpop.f32.mrf.mxu0
    %v1605 = vadd.f32 %v1393, %v1604
    %1606 = vmatmul.bf16.gmra.mxu0 %v1374
    %v1607 = vpop.f32.mrf.mxu0
    %v1608 = vadd.f32 %v1393, %v1607
    %v1609 = vpop.f32.mrf.mxu0
    %v1610 = vadd.f32 %v1393, %v1609
    %1611 = vdwg.mxu0
    %v1612 = vld [vmem:[%s15] sm:$0x1]
    %v1614 = vperm.slane %v1612, 0
    %v1616 = vmul.f32 %v1453, %v1614
    %v1617 = vmul.f32 %v1455, %v1614
    %v1618 = vmul.f32 %v1458, %v1614
    %v1619 = vmul.f32 %v1460, %v1614
    %v1620 = vmul.f32 %v1463, %v1614
    %v1621 = vmul.f32 %v1465, %v1614
    %v1622 = vmul.f32 %v1468, %v1614
    %v1623 = vmul.f32 %v1470, %v1614
    %v1624 = vmul.f32 %v1473, %v1614
    %v1625 = vmul.f32 %v1475, %v1614
    %v1626 = vmul.f32 %v1478, %v1614
    %v1627 = vmul.f32 %v1480, %v1614
    %v1628 = vmul.f32 %v1483, %v1614
    %v1629 = vmul.f32 %v1485, %v1614
    %v1630 = vmul.f32 %v1488, %v1614
    %v1631 = vmul.f32 %v1490, %v1614
    %v1632 = vmul.f32 %v1493, %v1614
    %v1633 = vmul.f32 %v1495, %v1614
    %v1634 = vmul.f32 %v1498, %v1614
    %v1635 = vmul.f32 %v1500, %v1614
    %v1636 = vmul.f32 %v1503, %v1614
    %v1637 = vmul.f32 %v1505, %v1614
    %v1638 = vmul.f32 %v1508, %v1614
    %v1639 = vmul.f32 %v1510, %v1614
    %v1640 = vmul.f32 %v1513, %v1614
    %v1641 = vmul.f32 %v1515, %v1614
    %v1642 = vmul.f32 %v1518, %v1614
    %v1643 = vmul.f32 %v1520, %v1614
    %v1644 = vmul.f32 %v1523, %v1614
    %v1645 = vmul.f32 %v1525, %v1614
    %v1646 = vmul.f32 %v1528, %v1614
    %v1647 = vmul.f32 %v1530, %v1614
    %v1648 = vmul.f32 %v1533, %v1614
    %v1649 = vmul.f32 %v1535, %v1614
    %v1650 = vmul.f32 %v1538, %v1614
    %v1651 = vmul.f32 %v1540, %v1614
    %v1652 = vmul.f32 %v1543, %v1614
    %v1653 = vmul.f32 %v1545, %v1614
    %v1654 = vmul.f32 %v1548, %v1614
    %v1655 = vmul.f32 %v1550, %v1614
    %v1656 = vmul.f32 %v1553, %v1614
    %v1657 = vmul.f32 %v1555, %v1614
    %v1658 = vmul.f32 %v1558, %v1614
    %v1659 = vmul.f32 %v1560, %v1614
    %v1660 = vmul.f32 %v1563, %v1614
    %v1661 = vmul.f32 %v1565, %v1614
    %v1662 = vmul.f32 %v1568, %v1614
    %v1663 = vmul.f32 %v1570, %v1614
    %v1664 = vmul.f32 %v1573, %v1614
    %v1665 = vmul.f32 %v1575, %v1614
    %v1666 = vmul.f32 %v1578, %v1614
    %v1667 = vmul.f32 %v1580, %v1614
    %v1668 = vmul.f32 %v1583, %v1614
    %v1669 = vmul.f32 %v1585, %v1614
    %v1670 = vmul.f32 %v1588, %v1614
    %v1671 = vmul.f32 %v1590, %v1614
    %v1672 = vmul.f32 %v1593, %v1614
    %v1673 = vmul.f32 %v1595, %v1614
    %v1674 = vmul.f32 %v1598, %v1614
    %v1675 = vmul.f32 %v1600, %v1614
    %v1676 = vmul.f32 %v1603, %v1614
    %v1677 = vmul.f32 %v1605, %v1614
    %v1678 = vmul.f32 %v1608, %v1614
    %v1679 = vmul.f32 %v1610, %v1614
    %1680 = vadd.xlane.f32.xlu0 %v1616
    %v1681 = vpop.xlane.xlu0 %1680
    %1682 = vadd.xlane.f32.xlu0 %v1617
    %v1683 = vpop.xlane.xlu0 %1682
    %1684 = vadd.xlane.f32.xlu0 %v1618
    %v1685 = vpop.xlane.xlu0 %1684
    %1686 = vadd.xlane.f32.xlu0 %v1619
    %v1687 = vpop.xlane.xlu0 %1686
    %1688 = vadd.xlane.f32.xlu0 %v1620
    %v1689 = vpop.xlane.xlu0 %1688
    %1690 = vadd.xlane.f32.xlu0 %v1621
    %v1691 = vpop.xlane.xlu0 %1690
    %1692 = vadd.xlane.f32.xlu0 %v1622
    %v1693 = vpop.xlane.xlu0 %1692
    %1694 = vadd.xlane.f32.xlu0 %v1623
    %v1695 = vpop.xlane.xlu0 %1694
    %1696 = vadd.xlane.f32.xlu0 %v1624
    %v1697 = vpop.xlane.xlu0 %1696
    %1698 = vadd.xlane.f32.xlu0 %v1625
    %v1699 = vpop.xlane.xlu0 %1698
    %1700 = vadd.xlane.f32.xlu0 %v1626
    %v1701 = vpop.xlane.xlu0 %1700
    %1702 = vadd.xlane.f32.xlu0 %v1627
    %v1703 = vpop.xlane.xlu0 %1702
    %1704 = vadd.xlane.f32.xlu0 %v1628
    %v1705 = vpop.xlane.xlu0 %1704
    %1706 = vadd.xlane.f32.xlu0 %v1629
    %v1707 = vpop.xlane.xlu0 %1706
    %1708 = vadd.xlane.f32.xlu0 %v1630
    %v1709 = vpop.xlane.xlu0 %1708
    %1710 = vadd.xlane.f32.xlu0 %v1631
    %v1711 = vpop.xlane.xlu0 %1710
    %1712 = vadd.xlane.f32.xlu0 %v1632
    %v1713 = vpop.xlane.xlu0 %1712
    %1714 = vadd.xlane.f32.xlu0 %v1633
    %v1715 = vpop.xlane.xlu0 %1714
    %1716 = vadd.xlane.f32.xlu0 %v1634
    %v1717 = vpop.xlane.xlu0 %1716
    %1718 = vadd.xlane.f32.xlu0 %v1635
    %v1719 = vpop.xlane.xlu0 %1718
    %1720 = vadd.xlane.f32.xlu0 %v1636
    %v1721 = vpop.xlane.xlu0 %1720
    %1722 = vadd.xlane.f32.xlu0 %v1637
    %v1723 = vpop.xlane.xlu0 %1722
    %1724 = vadd.xlane.f32.xlu0 %v1638
    %v1725 = vpop.xlane.xlu0 %1724
    %1726 = vadd.xlane.f32.xlu0 %v1639
    %v1727 = vpop.xlane.xlu0 %1726
    %1728 = vadd.xlane.f32.xlu0 %v1640
    %v1729 = vpop.xlane.xlu0 %1728
    %1730 = vadd.xlane.f32.xlu0 %v1641
    %v1731 = vpop.xlane.xlu0 %1730
    %1732 = vadd.xlane.f32.xlu0 %v1642
    %v1733 = vpop.xlane.xlu0 %1732
    %1734 = vadd.xlane.f32.xlu0 %v1643
    %v1735 = vpop.xlane.xlu0 %1734
    %1736 = vadd.xlane.f32.xlu0 %v1644
    %v1737 = vpop.xlane.xlu0 %1736
    %1738 = vadd.xlane.f32.xlu0 %v1645
    %v1739 = vpop.xlane.xlu0 %1738
    %1740 = vadd.xlane.f32.xlu0 %v1646
    %v1741 = vpop.xlane.xlu0 %1740
    %1742 = vadd.xlane.f32.xlu0 %v1647
    %v1743 = vpop.xlane.xlu0 %1742
    %1744 = vadd.xlane.f32.xlu0 %v1648
    %v1745 = vpop.xlane.xlu0 %1744
    %1746 = vadd.xlane.f32.xlu0 %v1649
    %v1747 = vpop.xlane.xlu0 %1746
    %1748 = vadd.xlane.f32.xlu0 %v1650
    %v1749 = vpop.xlane.xlu0 %1748
    %1750 = vadd.xlane.f32.xlu0 %v1651
    %v1751 = vpop.xlane.xlu0 %1750
    %1752 = vadd.xlane.f32.xlu0 %v1652
    %v1753 = vpop.xlane.xlu0 %1752
    %1754 = vadd.xlane.f32.xlu0 %v1653
    %v1755 = vpop.xlane.xlu0 %1754
    %1756 = vadd.xlane.f32.xlu0 %v1654
    %v1757 = vpop.xlane.xlu0 %1756
    %1758 = vadd.xlane.f32.xlu0 %v1655
    %v1759 = vpop.xlane.xlu0 %1758
    %1760 = vadd.xlane.f32.xlu0 %v1656
    %v1761 = vpop.xlane.xlu0 %1760
    %1762 = vadd.xlane.f32.xlu0 %v1657
    %v1763 = vpop.xlane.xlu0 %1762
    %1764 = vadd.xlane.f32.xlu0 %v1658
    %v1765 = vpop.xlane.xlu0 %1764
    %1766 = vadd.xlane.f32.xlu0 %v1659
    %v1767 = vpop.xlane.xlu0 %1766
    %1768 = vadd.xlane.f32.xlu0 %v1660
    %v1769 = vpop.xlane.xlu0 %1768
    %1770 = vadd.xlane.f32.xlu0 %v1661
    %v1771 = vpop.xlane.xlu0 %1770
    %1772 = vadd.xlane.f32.xlu0 %v1662
    %v1773 = vpop.xlane.xlu0 %1772
    %1774 = vadd.xlane.f32.xlu0 %v1663
    %v1775 = vpop.xlane.xlu0 %1774
    %1776 = vadd.xlane.f32.xlu0 %v1664
    %v1777 = vpop.xlane.xlu0 %1776
    %1778 = vadd.xlane.f32.xlu0 %v1665
    %v1779 = vpop.xlane.xlu0 %1778
    %1780 = vadd.xlane.f32.xlu0 %v1666
    %v1781 = vpop.xlane.xlu0 %1780
    %1782 = vadd.xlane.f32.xlu0 %v1667
    %v1783 = vpop.xlane.xlu0 %1782
    %1784 = vadd.xlane.f32.xlu0 %v1668
    %v1785 = vpop.xlane.xlu0 %1784
    %1786 = vadd.xlane.f32.xlu0 %v1669
    %v1787 = vpop.xlane.xlu0 %1786
    %1788 = vadd.xlane.f32.xlu0 %v1670
    %v1789 = vpop.xlane.xlu0 %1788
    %1790 = vadd.xlane.f32.xlu0 %v1671
    %v1791 = vpop.xlane.xlu0 %1790
    %1792 = vadd.xlane.f32.xlu0 %v1672
    %v1793 = vpop.xlane.xlu0 %1792
    %1794 = vadd.xlane.f32.xlu0 %v1673
    %v1795 = vpop.xlane.xlu0 %1794
    %1796 = vadd.xlane.f32.xlu0 %v1674
    %v1797 = vpop.xlane.xlu0 %1796
    %1798 = vadd.xlane.f32.xlu0 %v1675
    %v1799 = vpop.xlane.xlu0 %1798
    %1800 = vadd.xlane.f32.xlu0 %v1676
    %v1801 = vpop.xlane.xlu0 %1800
    %1802 = vadd.xlane.f32.xlu0 %v1677
    %v1803 = vpop.xlane.xlu0 %1802
    %1804 = vadd.xlane.f32.xlu0 %v1678
    %v1805 = vpop.xlane.xlu0 %1804
    %1806 = vadd.xlane.f32.xlu0 %v1679
    %v1807 = vpop.xlane.xlu0 %1806
    %v1808 = vmul.f32 %v1453, %v1453
    %v1809 = vmul.f32 %v1455, %v1455
    %v1810 = vmul.f32 %v1458, %v1458
    %v1811 = vmul.f32 %v1460, %v1460
    %v1812 = vmul.f32 %v1463, %v1463
    %v1813 = vmul.f32 %v1465, %v1465
    %v1814 = vmul.f32 %v1468, %v1468
    %v1815 = vmul.f32 %v1470, %v1470
    %v1816 = vmul.f32 %v1473, %v1473
    %v1817 = vmul.f32 %v1475, %v1475
    %v1818 = vmul.f32 %v1478, %v1478
    %v1819 = vmul.f32 %v1480, %v1480
    %v1820 = vmul.f32 %v1483, %v1483
    %v1821 = vmul.f32 %v1485, %v1485
    %v1822 = vmul.f32 %v1488, %v1488
    %v1823 = vmul.f32 %v1490, %v1490
    %v1824 = vmul.f32 %v1493, %v1493
    %v1825 = vmul.f32 %v1495, %v1495
    %v1826 = vmul.f32 %v1498, %v1498
    %v1827 = vmul.f32 %v1500, %v1500
    %v1828 = vmul.f32 %v1503, %v1503
    %v1829 = vmul.f32 %v1505, %v1505
    %v1830 = vmul.f32 %v1508, %v1508
    %v1831 = vmul.f32 %v1510, %v1510
    %v1832 = vmul.f32 %v1513, %v1513
    %v1833 = vmul.f32 %v1515, %v1515
    %v1834 = vmul.f32 %v1518, %v1518
    %v1835 = vmul.f32 %v1520, %v1520
    %v1836 = vmul.f32 %v1523, %v1523
    %v1837 = vmul.f32 %v1525, %v1525
    %v1838 = vmul.f32 %v1528, %v1528
    %v1839 = vmul.f32 %v1530, %v1530
    %v1840 = vmul.f32 %v1533, %v1533
    %v1841 = vmul.f32 %v1535, %v1535
    %v1842 = vmul.f32 %v1538, %v1538
    %v1843 = vmul.f32 %v1540, %v1540
    %v1844 = vmul.f32 %v1543, %v1543
    %v1845 = vmul.f32 %v1545, %v1545
    %v1846 = vmul.f32 %v1548, %v1548
    %v1847 = vmul.f32 %v1550, %v1550
    %v1848 = vmul.f32 %v1553, %v1553
    %v1849 = vmul.f32 %v1555, %v1555
    %v1850 = vmul.f32 %v1558, %v1558
    %v1851 = vmul.f32 %v1560, %v1560
    %v1852 = vmul.f32 %v1563, %v1563
    %v1853 = vmul.f32 %v1565, %v1565
    %v1854 = vmul.f32 %v1568, %v1568
    %v1855 = vmul.f32 %v1570, %v1570
    %v1856 = vmul.f32 %v1573, %v1573
    %v1857 = vmul.f32 %v1575, %v1575
    %v1858 = vmul.f32 %v1578, %v1578
    %v1859 = vmul.f32 %v1580, %v1580
    %v1860 = vmul.f32 %v1583, %v1583
    %v1861 = vmul.f32 %v1585, %v1585
    %v1862 = vmul.f32 %v1588, %v1588
    %v1863 = vmul.f32 %v1590, %v1590
    %v1864 = vmul.f32 %v1593, %v1593
    %v1865 = vmul.f32 %v1595, %v1595
    %v1866 = vmul.f32 %v1598, %v1598
    %v1867 = vmul.f32 %v1600, %v1600
    %v1868 = vmul.f32 %v1603, %v1603
    %v1869 = vmul.f32 %v1605, %v1605
    %v1870 = vmul.f32 %v1608, %v1608
    %v1871 = vmul.f32 %v1610, %v1610
    %v1872 = vmul.f32 %v1808, %v1614
    %v1873 = vmul.f32 %v1809, %v1614
    %v1874 = vmul.f32 %v1810, %v1614
    %v1875 = vmul.f32 %v1811, %v1614
    %v1876 = vmul.f32 %v1812, %v1614
    %v1877 = vmul.f32 %v1813, %v1614
    %v1878 = vmul.f32 %v1814, %v1614
    %v1879 = vmul.f32 %v1815, %v1614
    %v1880 = vmul.f32 %v1816, %v1614
    %v1881 = vmul.f32 %v1817, %v1614
    %v1882 = vmul.f32 %v1818, %v1614
    %v1883 = vmul.f32 %v1819, %v1614
    %v1884 = vmul.f32 %v1820, %v1614
    %v1885 = vmul.f32 %v1821, %v1614
    %v1886 = vmul.f32 %v1822, %v1614
    %v1887 = vmul.f32 %v1823, %v1614
    %v1888 = vmul.f32 %v1824, %v1614
    %v1889 = vmul.f32 %v1825, %v1614
    %v1890 = vmul.f32 %v1826, %v1614
    %v1891 = vmul.f32 %v1827, %v1614
    %v1892 = vmul.f32 %v1828, %v1614
    %v1893 = vmul.f32 %v1829, %v1614
    %v1894 = vmul.f32 %v1830, %v1614
    %v1895 = vmul.f32 %v1831, %v1614
    %v1896 = vmul.f32 %v1832, %v1614
    %v1897 = vmul.f32 %v1833, %v1614
    %v1898 = vmul.f32 %v1834, %v1614
    %v1899 = vmul.f32 %v1835, %v1614
    %v1900 = vmul.f32 %v1836, %v1614
    %v1901 = vmul.f32 %v1837, %v1614
    %v1902 = vmul.f32 %v1838, %v1614
    %v1903 = vmul.f32 %v1839, %v1614
    %v1904 = vmul.f32 %v1840, %v1614
    %v1905 = vmul.f32 %v1841, %v1614
    %v1906 = vmul.f32 %v1842, %v1614
    %v1907 = vmul.f32 %v1843, %v1614
    %v1908 = vmul.f32 %v1844, %v1614
    %v1909 = vmul.f32 %v1845, %v1614
    %v1910 = vmul.f32 %v1846, %v1614
    %v1911 = vmul.f32 %v1847, %v1614
    %v1912 = vmul.f32 %v1848, %v1614
    %v1913 = vmul.f32 %v1849, %v1614
    %v1914 = vmul.f32 %v1850, %v1614
    %v1915 = vmul.f32 %v1851, %v1614
    %v1916 = vmul.f32 %v1852, %v1614
    %v1917 = vmul.f32 %v1853, %v1614
    %v1918 = vmul.f32 %v1854, %v1614
    %v1919 = vmul.f32 %v1855, %v1614
    %v1920 = vmul.f32 %v1856, %v1614
    %v1921 = vmul.f32 %v1857, %v1614
    %v1922 = vmul.f32 %v1858, %v1614
    %v1923 = vmul.f32 %v1859, %v1614
    %v1924 = vmul.f32 %v1860, %v1614
    %v1925 = vmul.f32 %v1861, %v1614
    %v1926 = vmul.f32 %v1862, %v1614
    %v1927 = vmul.f32 %v1863, %v1614
    %v1928 = vmul.f32 %v1864, %v1614
    %v1929 = vmul.f32 %v1865, %v1614
    %v1930 = vmul.f32 %v1866, %v1614
    %v1931 = vmul.f32 %v1867, %v1614
    %v1932 = vmul.f32 %v1868, %v1614
    %v1933 = vmul.f32 %v1869, %v1614
    %v1934 = vmul.f32 %v1870, %v1614
    %v1935 = vmul.f32 %v1871, %v1614
    %1936 = vadd.xlane.f32.xlu0 %v1872
    %v1937 = vpop.xlane.xlu0 %1936
    %1938 = vadd.xlane.f32.xlu0 %v1873
    %v1939 = vpop.xlane.xlu0 %1938
    %1940 = vadd.xlane.f32.xlu0 %v1874
    %v1941 = vpop.xlane.xlu0 %1940
    %1942 = vadd.xlane.f32.xlu0 %v1875
    %v1943 = vpop.xlane.xlu0 %1942
    %1944 = vadd.xlane.f32.xlu0 %v1876
    %v1945 = vpop.xlane.xlu0 %1944
    %1946 = vadd.xlane.f32.xlu0 %v1877
    %v1947 = vpop.xlane.xlu0 %1946
    %1948 = vadd.xlane.f32.xlu0 %v1878
    %v1949 = vpop.xlane.xlu0 %1948
    %1950 = vadd.xlane.f32.xlu0 %v1879
    %v1951 = vpop.xlane.xlu0 %1950
    %1952 = vadd.xlane.f32.xlu0 %v1880
    %v1953 = vpop.xlane.xlu0 %1952
    %1954 = vadd.xlane.f32.xlu0 %v1881
    %v1955 = vpop.xlane.xlu0 %1954
    %1956 = vadd.xlane.f32.xlu0 %v1882
    %v1957 = vpop.xlane.xlu0 %1956
    %1958 = vadd.xlane.f32.xlu0 %v1883
    %v1959 = vpop.xlane.xlu0 %1958
    %1960 = vadd.xlane.f32.xlu0 %v1884
    %v1961 = vpop.xlane.xlu0 %1960
    %1962 = vadd.xlane.f32.xlu0 %v1885
    %v1963 = vpop.xlane.xlu0 %1962
    %1964 = vadd.xlane.f32.xlu0 %v1886
    %v1965 = vpop.xlane.xlu0 %1964
    %1966 = vadd.xlane.f32.xlu0 %v1887
    %v1967 = vpop.xlane.xlu0 %1966
    %1968 = vadd.xlane.f32.xlu0 %v1888
    %v1969 = vpop.xlane.xlu0 %1968
    %1970 = vadd.xlane.f32.xlu0 %v1889
    %v1971 = vpop.xlane.xlu0 %1970
    %1972 = vadd.xlane.f32.xlu0 %v1890
    %v1973 = vpop.xlane.xlu0 %1972
    %1974 = vadd.xlane.f32.xlu0 %v1891
    %v1975 = vpop.xlane.xlu0 %1974
    %1976 = vadd.xlane.f32.xlu0 %v1892
    %v1977 = vpop.xlane.xlu0 %1976
    %1978 = vadd.xlane.f32.xlu0 %v1893
    %v1979 = vpop.xlane.xlu0 %1978
    %1980 = vadd.xlane.f32.xlu0 %v1894
    %v1981 = vpop.xlane.xlu0 %1980
    %1982 = vadd.xlane.f32.xlu0 %v1895
    %v1983 = vpop.xlane.xlu0 %1982
    %1984 = vadd.xlane.f32.xlu0 %v1896
    %v1985 = vpop.xlane.xlu0 %1984
    %1986 = vadd.xlane.f32.xlu0 %v1897
    %v1987 = vpop.xlane.xlu0 %1986
    %1988 = vadd.xlane.f32.xlu0 %v1898
    %v1989 = vpop.xlane.xlu0 %1988
    %1990 = vadd.xlane.f32.xlu0 %v1899
    %v1991 = vpop.xlane.xlu0 %1990
    %1992 = vadd.xlane.f32.xlu0 %v1900
    %v1993 = vpop.xlane.xlu0 %1992
    %1994 = vadd.xlane.f32.xlu0 %v1901
    %v1995 = vpop.xlane.xlu0 %1994
    %1996 = vadd.xlane.f32.xlu0 %v1902
    %v1997 = vpop.xlane.xlu0 %1996
    %1998 = vadd.xlane.f32.xlu0 %v1903
    %v1999 = vpop.xlane.xlu0 %1998
    %2000 = vadd.xlane.f32.xlu0 %v1904
    %v2001 = vpop.xlane.xlu0 %2000
    %2002 = vadd.xlane.f32.xlu0 %v1905
    %v2003 = vpop.xlane.xlu0 %2002
    %2004 = vadd.xlane.f32.xlu0 %v1906
    %v2005 = vpop.xlane.xlu0 %2004
    %2006 = vadd.xlane.f32.xlu0 %v1907
    %v2007 = vpop.xlane.xlu0 %2006
    %2008 = vadd.xlane.f32.xlu0 %v1908
    %v2009 = vpop.xlane.xlu0 %2008
    %2010 = vadd.xlane.f32.xlu0 %v1909
    %v2011 = vpop.xlane.xlu0 %2010
    %2012 = vadd.xlane.f32.xlu0 %v1910
    %v2013 = vpop.xlane.xlu0 %2012
    %2014 = vadd.xlane.f32.xlu0 %v1911
    %v2015 = vpop.xlane.xlu0 %2014
    %2016 = vadd.xlane.f32.xlu0 %v1912
    %v2017 = vpop.xlane.xlu0 %2016
    %2018 = vadd.xlane.f32.xlu0 %v1913
    %v2019 = vpop.xlane.xlu0 %2018
    %2020 = vadd.xlane.f32.xlu0 %v1914
    %v2021 = vpop.xlane.xlu0 %2020
    %2022 = vadd.xlane.f32.xlu0 %v1915
    %v2023 = vpop.xlane.xlu0 %2022
    %2024 = vadd.xlane.f32.xlu0 %v1916
    %v2025 = vpop.xlane.xlu0 %2024
    %2026 = vadd.xlane.f32.xlu0 %v1917
    %v2027 = vpop.xlane.xlu0 %2026
    %2028 = vadd.xlane.f32.xlu0 %v1918
    %v2029 = vpop.xlane.xlu0 %2028
    %2030 = vadd.xlane.f32.xlu0 %v1919
    %v2031 = vpop.xlane.xlu0 %2030
    %2032 = vadd.xlane.f32.xlu0 %v1920
    %v2033 = vpop.xlane.xlu0 %2032
    %2034 = vadd.xlane.f32.xlu0 %v1921
    %v2035 = vpop.xlane.xlu0 %2034
    %2036 = vadd.xlane.f32.xlu0 %v1922
    %v2037 = vpop.xlane.xlu0 %2036
    %2038 = vadd.xlane.f32.xlu0 %v1923
    %v2039 = vpop.xlane.xlu0 %2038
    %2040 = vadd.xlane.f32.xlu0 %v1924
    %v2041 = vpop.xlane.xlu0 %2040
    %2042 = vadd.xlane.f32.xlu0 %v1925
    %v2043 = vpop.xlane.xlu0 %2042
    %2044 = vadd.xlane.f32.xlu0 %v1926
    %v2045 = vpop.xlane.xlu0 %2044
    %2046 = vadd.xlane.f32.xlu0 %v1927
    %v2047 = vpop.xlane.xlu0 %2046
    %2048 = vadd.xlane.f32.xlu0 %v1928
    %v2049 = vpop.xlane.xlu0 %2048
    %2050 = vadd.xlane.f32.xlu0 %v1929
    %v2051 = vpop.xlane.xlu0 %2050
    %2052 = vadd.xlane.f32.xlu0 %v1930
    %v2053 = vpop.xlane.xlu0 %2052
    %2054 = vadd.xlane.f32.xlu0 %v1931
    %v2055 = vpop.xlane.xlu0 %2054
    %2056 = vadd.xlane.f32.xlu0 %v1932
    %v2057 = vpop.xlane.xlu0 %2056
    %2058 = vadd.xlane.f32.xlu0 %v1933
    %v2059 = vpop.xlane.xlu0 %2058
    %2060 = vadd.xlane.f32.xlu0 %v1934
    %v2061 = vpop.xlane.xlu0 %2060
    %2062 = vadd.xlane.f32.xlu0 %v1935
    %v2063 = vpop.xlane.xlu0 %2062
    %v2064 = vmul.f32 %v1681, %v1681
    %v2065 = vmul.f32 %v1683, %v1683
    %v2066 = vmul.f32 %v1685, %v1685
    %v2067 = vmul.f32 %v1687, %v1687
    %v2068 = vmul.f32 %v1689, %v1689
    %v2069 = vmul.f32 %v1691, %v1691
    %v2070 = vmul.f32 %v1693, %v1693
    %v2071 = vmul.f32 %v1695, %v1695
    %v2072 = vmul.f32 %v1697, %v1697
    %v2073 = vmul.f32 %v1699, %v1699
    %v2074 = vmul.f32 %v1701, %v1701
    %v2075 = vmul.f32 %v1703, %v1703
    %v2076 = vmul.f32 %v1705, %v1705
    %v2077 = vmul.f32 %v1707, %v1707
    %v2078 = vmul.f32 %v1709, %v1709
    %v2079 = vmul.f32 %v1711, %v1711
    %v2080 = vmul.f32 %v1713, %v1713
    %v2081 = vmul.f32 %v1715, %v1715
    %v2082 = vmul.f32 %v1717, %v1717
    %v2083 = vmul.f32 %v1719, %v1719
    %v2084 = vmul.f32 %v1721, %v1721
    %v2085 = vmul.f32 %v1723, %v1723
    %v2086 = vmul.f32 %v1725, %v1725
    %v2087 = vmul.f32 %v1727, %v1727
    %v2088 = vmul.f32 %v1729, %v1729
    %v2089 = vmul.f32 %v1731, %v1731
    %v2090 = vmul.f32 %v1733, %v1733
    %v2091 = vmul.f32 %v1735, %v1735
    %v2092 = vmul.f32 %v1737, %v1737
    %v2093 = vmul.f32 %v1739, %v1739
    %v2094 = vmul.f32 %v1741, %v1741
    %v2095 = vmul.f32 %v1743, %v1743
    %v2096 = vmul.f32 %v1745, %v1745
    %v2097 = vmul.f32 %v1747, %v1747
    %v2098 = vmul.f32 %v1749, %v1749
    %v2099 = vmul.f32 %v1751, %v1751
    %v2100 = vmul.f32 %v1753, %v1753
    %v2101 = vmul.f32 %v1755, %v1755
    %v2102 = vmul.f32 %v1757, %v1757
    %v2103 = vmul.f32 %v1759, %v1759
    %v2104 = vmul.f32 %v1761, %v1761
    %v2105 = vmul.f32 %v1763, %v1763
    %v2106 = vmul.f32 %v1765, %v1765
    %v2107 = vmul.f32 %v1767, %v1767
    %v2108 = vmul.f32 %v1769, %v1769
    %v2109 = vmul.f32 %v1771, %v1771
    %v2110 = vmul.f32 %v1773, %v1773
    %v2111 = vmul.f32 %v1775, %v1775
    %v2112 = vmul.f32 %v1777, %v1777
    %v2113 = vmul.f32 %v1779, %v1779
    %v2114 = vmul.f32 %v1781, %v1781
    %v2115 = vmul.f32 %v1783, %v1783
    %v2116 = vmul.f32 %v1785, %v1785
    %v2117 = vmul.f32 %v1787, %v1787
    %v2118 = vmul.f32 %v1789, %v1789
    %v2119 = vmul.f32 %v1791, %v1791
    %v2120 = vmul.f32 %v1793, %v1793
    %v2121 = vmul.f32 %v1795, %v1795
    %v2122 = vmul.f32 %v1797, %v1797
    %v2123 = vmul.f32 %v1799, %v1799
    %v2124 = vmul.f32 %v1801, %v1801
    %v2125 = vmul.f32 %v1803, %v1803
    %v2126 = vmul.f32 %v1805, %v1805
    %v2127 = vmul.f32 %v1807, %v1807
    %v2128 = vsub.f32 %v1937, %v2064
    %v2129 = vsub.f32 %v1939, %v2065
    %v2130 = vsub.f32 %v1941, %v2066
    %v2131 = vsub.f32 %v1943, %v2067
    %v2132 = vsub.f32 %v1945, %v2068
    %v2133 = vsub.f32 %v1947, %v2069
    %v2134 = vsub.f32 %v1949, %v2070
    %v2135 = vsub.f32 %v1951, %v2071
    %v2136 = vsub.f32 %v1953, %v2072
    %v2137 = vsub.f32 %v1955, %v2073
    %v2138 = vsub.f32 %v1957, %v2074
    %v2139 = vsub.f32 %v1959, %v2075
    %v2140 = vsub.f32 %v1961, %v2076
    %v2141 = vsub.f32 %v1963, %v2077
    %v2142 = vsub.f32 %v1965, %v2078
    %v2143 = vsub.f32 %v1967, %v2079
    %v2144 = vsub.f32 %v1969, %v2080
    %v2145 = vsub.f32 %v1971, %v2081
    %v2146 = vsub.f32 %v1973, %v2082
    %v2147 = vsub.f32 %v1975, %v2083
    %v2148 = vsub.f32 %v1977, %v2084
    %v2149 = vsub.f32 %v1979, %v2085
    %v2150 = vsub.f32 %v1981, %v2086
    %v2151 = vsub.f32 %v1983, %v2087
    %v2152 = vsub.f32 %v1985, %v2088
    %v2153 = vsub.f32 %v1987, %v2089
    %v2154 = vsub.f32 %v1989, %v2090
    %v2155 = vsub.f32 %v1991, %v2091
    %v2156 = vsub.f32 %v1993, %v2092
    %v2157 = vsub.f32 %v1995, %v2093
    %v2158 = vsub.f32 %v1997, %v2094
    %v2159 = vsub.f32 %v1999, %v2095
    %v2160 = vsub.f32 %v2001, %v2096
    %v2161 = vsub.f32 %v2003, %v2097
    %v2162 = vsub.f32 %v2005, %v2098
    %v2163 = vsub.f32 %v2007, %v2099
    %v2164 = vsub.f32 %v2009, %v2100
    %v2165 = vsub.f32 %v2011, %v2101
    %v2166 = vsub.f32 %v2013, %v2102
    %v2167 = vsub.f32 %v2015, %v2103
    %v2168 = vsub.f32 %v2017, %v2104
    %v2169 = vsub.f32 %v2019, %v2105
    %v2170 = vsub.f32 %v2021, %v2106
    %v2171 = vsub.f32 %v2023, %v2107
    %v2172 = vsub.f32 %v2025, %v2108
    %v2173 = vsub.f32 %v2027, %v2109
    %v2174 = vsub.f32 %v2029, %v2110
    %v2175 = vsub.f32 %v2031, %v2111
    %v2176 = vsub.f32 %v2033, %v2112
    %v2177 = vsub.f32 %v2035, %v2113
    %v2178 = vsub.f32 %v2037, %v2114
    %v2179 = vsub.f32 %v2039, %v2115
    %v2180 = vsub.f32 %v2041, %v2116
    %v2181 = vsub.f32 %v2043, %v2117
    %v2182 = vsub.f32 %v2045, %v2118
    %v2183 = vsub.f32 %v2047, %v2119
    %v2184 = vsub.f32 %v2049, %v2120
    %v2185 = vsub.f32 %v2051, %v2121
    %v2186 = vsub.f32 %v2053, %v2122
    %v2187 = vsub.f32 %v2055, %v2123
    %v2188 = vsub.f32 %v2057, %v2124
    %v2189 = vsub.f32 %v2059, %v2125
    %v2190 = vsub.f32 %v2061, %v2126
    %v2191 = vsub.f32 %v2063, %v2127
    %v2192 = vsub.f32 %v1453, %v1681
    %v2193 = vsub.f32 %v1455, %v1683
    %v2194 = vsub.f32 %v1458, %v1685
    %v2195 = vsub.f32 %v1460, %v1687
    %v2196 = vsub.f32 %v1463, %v1689
    %v2197 = vsub.f32 %v1465, %v1691
    %v2198 = vsub.f32 %v1468, %v1693
    %v2199 = vsub.f32 %v1470, %v1695
    %v2200 = vsub.f32 %v1473, %v1697
    %v2201 = vsub.f32 %v1475, %v1699
    %v2202 = vsub.f32 %v1478, %v1701
    %v2203 = vsub.f32 %v1480, %v1703
    %v2204 = vsub.f32 %v1483, %v1705
    %v2205 = vsub.f32 %v1485, %v1707
    %v2206 = vsub.f32 %v1488, %v1709
    %v2207 = vsub.f32 %v1490, %v1711
    %v2208 = vsub.f32 %v1493, %v1713
    %v2209 = vsub.f32 %v1495, %v1715
    %v2210 = vsub.f32 %v1498, %v1717
    %v2211 = vsub.f32 %v1500, %v1719
    %v2212 = vsub.f32 %v1503, %v1721
    %v2213 = vsub.f32 %v1505, %v1723
    %v2214 = vsub.f32 %v1508, %v1725
    %v2215 = vsub.f32 %v1510, %v1727
    %v2216 = vsub.f32 %v1513, %v1729
    %v2217 = vsub.f32 %v1515, %v1731
    %v2218 = vsub.f32 %v1518, %v1733
    %v2219 = vsub.f32 %v1520, %v1735
    %v2220 = vsub.f32 %v1523, %v1737
    %v2221 = vsub.f32 %v1525, %v1739
    %v2222 = vsub.f32 %v1528, %v1741
    %v2223 = vsub.f32 %v1530, %v1743
    %v2224 = vsub.f32 %v1533, %v1745
    %v2225 = vsub.f32 %v1535, %v1747
    %v2226 = vsub.f32 %v1538, %v1749
    %v2227 = vsub.f32 %v1540, %v1751
    %v2228 = vsub.f32 %v1543, %v1753
    %v2229 = vsub.f32 %v1545, %v1755
    %v2230 = vsub.f32 %v1548, %v1757
    %v2231 = vsub.f32 %v1550, %v1759
    %v2232 = vsub.f32 %v1553, %v1761
    %v2233 = vsub.f32 %v1555, %v1763
    %v2234 = vsub.f32 %v1558, %v1765
    %v2235 = vsub.f32 %v1560, %v1767
    %v2236 = vsub.f32 %v1563, %v1769
    %v2237 = vsub.f32 %v1565, %v1771
    %v2238 = vsub.f32 %v1568, %v1773
    %v2239 = vsub.f32 %v1570, %v1775
    %v2240 = vsub.f32 %v1573, %v1777
    %v2241 = vsub.f32 %v1575, %v1779
    %v2242 = vsub.f32 %v1578, %v1781
    %v2243 = vsub.f32 %v1580, %v1783
    %v2244 = vsub.f32 %v1583, %v1785
    %v2245 = vsub.f32 %v1585, %v1787
    %v2246 = vsub.f32 %v1588, %v1789
    %v2247 = vsub.f32 %v1590, %v1791
    %v2248 = vsub.f32 %v1593, %v1793
    %v2249 = vsub.f32 %v1595, %v1795
    %v2250 = vsub.f32 %v1598, %v1797
    %v2251 = vsub.f32 %v1600, %v1799
    %v2252 = vsub.f32 %v1603, %v1801
    %v2253 = vsub.f32 %v1605, %v1803
    %v2254 = vsub.f32 %v1608, %v1805
    %v2255 = vsub.f32 %v1610, %v1807
    %v2256 = vadd.f32 %v2128, 1e-05
    %v2257 = vadd.f32 %v2129, 1e-05
    %v2258 = vadd.f32 %v2130, 1e-05
    %v2259 = vadd.f32 %v2131, 1e-05
    %v2260 = vadd.f32 %v2132, 1e-05
    %v2261 = vadd.f32 %v2133, 1e-05
    %v2262 = vadd.f32 %v2134, 1e-05
    %v2263 = vadd.f32 %v2135, 1e-05
    %v2264 = vadd.f32 %v2136, 1e-05
    %v2265 = vadd.f32 %v2137, 1e-05
    %v2266 = vadd.f32 %v2138, 1e-05
    %v2267 = vadd.f32 %v2139, 1e-05
    %v2268 = vadd.f32 %v2140, 1e-05
    %v2269 = vadd.f32 %v2141, 1e-05
    %v2270 = vadd.f32 %v2142, 1e-05
    %v2271 = vadd.f32 %v2143, 1e-05
    %v2272 = vadd.f32 %v2144, 1e-05
    %v2273 = vadd.f32 %v2145, 1e-05
    %v2274 = vadd.f32 %v2146, 1e-05
    %v2275 = vadd.f32 %v2147, 1e-05
    %v2276 = vadd.f32 %v2148, 1e-05
    %v2277 = vadd.f32 %v2149, 1e-05
    %v2278 = vadd.f32 %v2150, 1e-05
    %v2279 = vadd.f32 %v2151, 1e-05
    %v2280 = vadd.f32 %v2152, 1e-05
    %v2281 = vadd.f32 %v2153, 1e-05
    %v2282 = vadd.f32 %v2154, 1e-05
    %v2283 = vadd.f32 %v2155, 1e-05
    %v2284 = vadd.f32 %v2156, 1e-05
    %v2285 = vadd.f32 %v2157, 1e-05
    %v2286 = vadd.f32 %v2158, 1e-05
    %v2287 = vadd.f32 %v2159, 1e-05
    %v2288 = vadd.f32 %v2160, 1e-05
    %v2289 = vadd.f32 %v2161, 1e-05
    %v2290 = vadd.f32 %v2162, 1e-05
    %v2291 = vadd.f32 %v2163, 1e-05
    %v2292 = vadd.f32 %v2164, 1e-05
    %v2293 = vadd.f32 %v2165, 1e-05
    %v2294 = vadd.f32 %v2166, 1e-05
    %v2295 = vadd.f32 %v2167, 1e-05
    %v2296 = vadd.f32 %v2168, 1e-05
    %v2297 = vadd.f32 %v2169, 1e-05
    %v2298 = vadd.f32 %v2170, 1e-05
    %v2299 = vadd.f32 %v2171, 1e-05
    %v2300 = vadd.f32 %v2172, 1e-05
    %v2301 = vadd.f32 %v2173, 1e-05
    %v2302 = vadd.f32 %v2174, 1e-05
    %v2303 = vadd.f32 %v2175, 1e-05
    %v2304 = vadd.f32 %v2176, 1e-05
    %v2305 = vadd.f32 %v2177, 1e-05
    %v2306 = vadd.f32 %v2178, 1e-05
    %v2307 = vadd.f32 %v2179, 1e-05
    %v2308 = vadd.f32 %v2180, 1e-05
    %v2309 = vadd.f32 %v2181, 1e-05
    %v2310 = vadd.f32 %v2182, 1e-05
    %v2311 = vadd.f32 %v2183, 1e-05
    %v2312 = vadd.f32 %v2184, 1e-05
    %v2313 = vadd.f32 %v2185, 1e-05
    %v2314 = vadd.f32 %v2186, 1e-05
    %v2315 = vadd.f32 %v2187, 1e-05
    %v2316 = vadd.f32 %v2188, 1e-05
    %v2317 = vadd.f32 %v2189, 1e-05
    %v2318 = vadd.f32 %v2190, 1e-05
    %v2319 = vadd.f32 %v2191, 1e-05
    %v2320 = vrsqrt.pop %v2256
    %v2321 = vmul.f32 %v2320, %v2256
    %v2322 = vmul.f32 %v2321, %v2320
    %v2323 = vmul.f32 0.5, %v2322
    %v2324 = vsub.f32 1.5, %v2323
    %v2325 = vmul.f32 %v2320, %v2324
    %vm2326 = vweird.f32 %v2256
    %vm2327 = vweird.f32 %v2320
    %vm2328 = vmor %vm2326, %vm2327
    %v2329 = vsel %vm2328, %v2320, %v2325
    %v2330 = vrsqrt.pop %v2257
    %v2331 = vmul.f32 %v2330, %v2257
    %v2332 = vmul.f32 %v2331, %v2330
    %v2333 = vmul.f32 0.5, %v2332
    %v2334 = vsub.f32 1.5, %v2333
    %v2335 = vmul.f32 %v2330, %v2334
    %vm2336 = vweird.f32 %v2257
    %vm2337 = vweird.f32 %v2330
    %vm2338 = vmor %vm2336, %vm2337
    %v2339 = vsel %vm2338, %v2330, %v2335
    %v2340 = vrsqrt.pop %v2258
    %v2341 = vmul.f32 %v2340, %v2258
    %v2342 = vmul.f32 %v2341, %v2340
    %v2343 = vmul.f32 0.5, %v2342
    %v2344 = vsub.f32 1.5, %v2343
    %v2345 = vmul.f32 %v2340, %v2344
    %vm2346 = vweird.f32 %v2258
    %vm2347 = vweird.f32 %v2340
    %vm2348 = vmor %vm2346, %vm2347
    %v2349 = vsel %vm2348, %v2340, %v2345
    %v2350 = vrsqrt.pop %v2259
    %v2351 = vmul.f32 %v2350, %v2259
    %v2352 = vmul.f32 %v2351, %v2350
    %v2353 = vmul.f32 0.5, %v2352
    %v2354 = vsub.f32 1.5, %v2353
    %v2355 = vmul.f32 %v2350, %v2354
    %vm2356 = vweird.f32 %v2259
    %vm2357 = vweird.f32 %v2350
    %vm2358 = vmor %vm2356, %vm2357
    %v2359 = vsel %vm2358, %v2350, %v2355
    %v2360 = vrsqrt.pop %v2260
    %v2361 = vmul.f32 %v2360, %v2260
    %v2362 = vmul.f32 %v2361, %v2360
    %v2363 = vmul.f32 0.5, %v2362
    %v2364 = vsub.f32 1.5, %v2363
    %v2365 = vmul.f32 %v2360, %v2364
    %vm2366 = vweird.f32 %v2260
    %vm2367 = vweird.f32 %v2360
    %vm2368 = vmor %vm2366, %vm2367
    %v2369 = vsel %vm2368, %v2360, %v2365
    %v2370 = vrsqrt.pop %v2261
    %v2371 = vmul.f32 %v2370, %v2261
    %v2372 = vmul.f32 %v2371, %v2370
    %v2373 = vmul.f32 0.5, %v2372
    %v2374 = vsub.f32 1.5, %v2373
    %v2375 = vmul.f32 %v2370, %v2374
    %vm2376 = vweird.f32 %v2261
    %vm2377 = vweird.f32 %v2370
    %vm2378 = vmor %vm2376, %vm2377
    %v2379 = vsel %vm2378, %v2370, %v2375
    %v2380 = vrsqrt.pop %v2262
    %v2381 = vmul.f32 %v2380, %v2262
    %v2382 = vmul.f32 %v2381, %v2380
    %v2383 = vmul.f32 0.5, %v2382
    %v2384 = vsub.f32 1.5, %v2383
    %v2385 = vmul.f32 %v2380, %v2384
    %vm2386 = vweird.f32 %v2262
    %vm2387 = vweird.f32 %v2380
    %vm2388 = vmor %vm2386, %vm2387
    %v2389 = vsel %vm2388, %v2380, %v2385
    %v2390 = vrsqrt.pop %v2263
    %v2391 = vmul.f32 %v2390, %v2263
    %v2392 = vmul.f32 %v2391, %v2390
    %v2393 = vmul.f32 0.5, %v2392
    %v2394 = vsub.f32 1.5, %v2393
    %v2395 = vmul.f32 %v2390, %v2394
    %vm2396 = vweird.f32 %v2263
    %vm2397 = vweird.f32 %v2390
    %vm2398 = vmor %vm2396, %vm2397
    %v2399 = vsel %vm2398, %v2390, %v2395
    %v2400 = vrsqrt.pop %v2264
    %v2401 = vmul.f32 %v2400, %v2264
    %v2402 = vmul.f32 %v2401, %v2400
    %v2403 = vmul.f32 0.5, %v2402
    %v2404 = vsub.f32 1.5, %v2403
    %v2405 = vmul.f32 %v2400, %v2404
    %vm2406 = vweird.f32 %v2264
    %vm2407 = vweird.f32 %v2400
    %vm2408 = vmor %vm2406, %vm2407
    %v2409 = vsel %vm2408, %v2400, %v2405
    %v2410 = vrsqrt.pop %v2265
    %v2411 = vmul.f32 %v2410, %v2265
    %v2412 = vmul.f32 %v2411, %v2410
    %v2413 = vmul.f32 0.5, %v2412
    %v2414 = vsub.f32 1.5, %v2413
    %v2415 = vmul.f32 %v2410, %v2414
    %vm2416 = vweird.f32 %v2265
    %vm2417 = vweird.f32 %v2410
    %vm2418 = vmor %vm2416, %vm2417
    %v2419 = vsel %vm2418, %v2410, %v2415
    %v2420 = vrsqrt.pop %v2266
    %v2421 = vmul.f32 %v2420, %v2266
    %v2422 = vmul.f32 %v2421, %v2420
    %v2423 = vmul.f32 0.5, %v2422
    %v2424 = vsub.f32 1.5, %v2423
    %v2425 = vmul.f32 %v2420, %v2424
    %vm2426 = vweird.f32 %v2266
    %vm2427 = vweird.f32 %v2420
    %vm2428 = vmor %vm2426, %vm2427
    %v2429 = vsel %vm2428, %v2420, %v2425
    %v2430 = vrsqrt.pop %v2267
    %v2431 = vmul.f32 %v2430, %v2267
    %v2432 = vmul.f32 %v2431, %v2430
    %v2433 = vmul.f32 0.5, %v2432
    %v2434 = vsub.f32 1.5, %v2433
    %v2435 = vmul.f32 %v2430, %v2434
    %vm2436 = vweird.f32 %v2267
    %vm2437 = vweird.f32 %v2430
    %vm2438 = vmor %vm2436, %vm2437
    %v2439 = vsel %vm2438, %v2430, %v2435
    %v2440 = vrsqrt.pop %v2268
    %v2441 = vmul.f32 %v2440, %v2268
    %v2442 = vmul.f32 %v2441, %v2440
    %v2443 = vmul.f32 0.5, %v2442
    %v2444 = vsub.f32 1.5, %v2443
    %v2445 = vmul.f32 %v2440, %v2444
    %vm2446 = vweird.f32 %v2268
    %vm2447 = vweird.f32 %v2440
    %vm2448 = vmor %vm2446, %vm2447
    %v2449 = vsel %vm2448, %v2440, %v2445
    %v2450 = vrsqrt.pop %v2269
    %v2451 = vmul.f32 %v2450, %v2269
    %v2452 = vmul.f32 %v2451, %v2450
    %v2453 = vmul.f32 0.5, %v2452
    %v2454 = vsub.f32 1.5, %v2453
    %v2455 = vmul.f32 %v2450, %v2454
    %vm2456 = vweird.f32 %v2269
    %vm2457 = vweird.f32 %v2450
    %vm2458 = vmor %vm2456, %vm2457
    %v2459 = vsel %vm2458, %v2450, %v2455
    %v2460 = vrsqrt.pop %v2270
    %v2461 = vmul.f32 %v2460, %v2270
    %v2462 = vmul.f32 %v2461, %v2460
    %v2463 = vmul.f32 0.5, %v2462
    %v2464 = vsub.f32 1.5, %v2463
    %v2465 = vmul.f32 %v2460, %v2464
    %vm2466 = vweird.f32 %v2270
    %vm2467 = vweird.f32 %v2460
    %vm2468 = vmor %vm2466, %vm2467
    %v2469 = vsel %vm2468, %v2460, %v2465
    %v2470 = vrsqrt.pop %v2271
    %v2471 = vmul.f32 %v2470, %v2271
    %v2472 = vmul.f32 %v2471, %v2470
    %v2473 = vmul.f32 0.5, %v2472
    %v2474 = vsub.f32 1.5, %v2473
    %v2475 = vmul.f32 %v2470, %v2474
    %vm2476 = vweird.f32 %v2271
    %vm2477 = vweird.f32 %v2470
    %vm2478 = vmor %vm2476, %vm2477
    %v2479 = vsel %vm2478, %v2470, %v2475
    %v2480 = vrsqrt.pop %v2272
    %v2481 = vmul.f32 %v2480, %v2272
    %v2482 = vmul.f32 %v2481, %v2480
    %v2483 = vmul.f32 0.5, %v2482
    %v2484 = vsub.f32 1.5, %v2483
    %v2485 = vmul.f32 %v2480, %v2484
    %vm2486 = vweird.f32 %v2272
    %vm2487 = vweird.f32 %v2480
    %vm2488 = vmor %vm2486, %vm2487
    %v2489 = vsel %vm2488, %v2480, %v2485
    %v2490 = vrsqrt.pop %v2273
    %v2491 = vmul.f32 %v2490, %v2273
    %v2492 = vmul.f32 %v2491, %v2490
    %v2493 = vmul.f32 0.5, %v2492
    %v2494 = vsub.f32 1.5, %v2493
    %v2495 = vmul.f32 %v2490, %v2494
    %vm2496 = vweird.f32 %v2273
    %vm2497 = vweird.f32 %v2490
    %vm2498 = vmor %vm2496, %vm2497
    %v2499 = vsel %vm2498, %v2490, %v2495
    %v2500 = vrsqrt.pop %v2274
    %v2501 = vmul.f32 %v2500, %v2274
    %v2502 = vmul.f32 %v2501, %v2500
    %v2503 = vmul.f32 0.5, %v2502
    %v2504 = vsub.f32 1.5, %v2503
    %v2505 = vmul.f32 %v2500, %v2504
    %vm2506 = vweird.f32 %v2274
    %vm2507 = vweird.f32 %v2500
    %vm2508 = vmor %vm2506, %vm2507
    %v2509 = vsel %vm2508, %v2500, %v2505
    %v2510 = vrsqrt.pop %v2275
    %v2511 = vmul.f32 %v2510, %v2275
    %v2512 = vmul.f32 %v2511, %v2510
    %v2513 = vmul.f32 0.5, %v2512
    %v2514 = vsub.f32 1.5, %v2513
    %v2515 = vmul.f32 %v2510, %v2514
    %vm2516 = vweird.f32 %v2275
    %vm2517 = vweird.f32 %v2510
    %vm2518 = vmor %vm2516, %vm2517
    %v2519 = vsel %vm2518, %v2510, %v2515
    %v2520 = vrsqrt.pop %v2276
    %v2521 = vmul.f32 %v2520, %v2276
    %v2522 = vmul.f32 %v2521, %v2520
    %v2523 = vmul.f32 0.5, %v2522
    %v2524 = vsub.f32 1.5, %v2523
    %v2525 = vmul.f32 %v2520, %v2524
    %vm2526 = vweird.f32 %v2276
    %vm2527 = vweird.f32 %v2520
    %vm2528 = vmor %vm2526, %vm2527
    %v2529 = vsel %vm2528, %v2520, %v2525
    %v2530 = vrsqrt.pop %v2277
    %v2531 = vmul.f32 %v2530, %v2277
    %v2532 = vmul.f32 %v2531, %v2530
    %v2533 = vmul.f32 0.5, %v2532
    %v2534 = vsub.f32 1.5, %v2533
    %v2535 = vmul.f32 %v2530, %v2534
    %vm2536 = vweird.f32 %v2277
    %vm2537 = vweird.f32 %v2530
    %vm2538 = vmor %vm2536, %vm2537
    %v2539 = vsel %vm2538, %v2530, %v2535
    %v2540 = vrsqrt.pop %v2278
    %v2541 = vmul.f32 %v2540, %v2278
    %v2542 = vmul.f32 %v2541, %v2540
    %v2543 = vmul.f32 0.5, %v2542
    %v2544 = vsub.f32 1.5, %v2543
    %v2545 = vmul.f32 %v2540, %v2544
    %vm2546 = vweird.f32 %v2278
    %vm2547 = vweird.f32 %v2540
    %vm2548 = vmor %vm2546, %vm2547
    %v2549 = vsel %vm2548, %v2540, %v2545
    %v2550 = vrsqrt.pop %v2279
    %v2551 = vmul.f32 %v2550, %v2279
    %v2552 = vmul.f32 %v2551, %v2550
    %v2553 = vmul.f32 0.5, %v2552
    %v2554 = vsub.f32 1.5, %v2553
    %v2555 = vmul.f32 %v2550, %v2554
    %vm2556 = vweird.f32 %v2279
    %vm2557 = vweird.f32 %v2550
    %vm2558 = vmor %vm2556, %vm2557
    %v2559 = vsel %vm2558, %v2550, %v2555
    %v2560 = vrsqrt.pop %v2280
    %v2561 = vmul.f32 %v2560, %v2280
    %v2562 = vmul.f32 %v2561, %v2560
    %v2563 = vmul.f32 0.5, %v2562
    %v2564 = vsub.f32 1.5, %v2563
    %v2565 = vmul.f32 %v2560, %v2564
    %vm2566 = vweird.f32 %v2280
    %vm2567 = vweird.f32 %v2560
    %vm2568 = vmor %vm2566, %vm2567
    %v2569 = vsel %vm2568, %v2560, %v2565
    %v2570 = vrsqrt.pop %v2281
    %v2571 = vmul.f32 %v2570, %v2281
    %v2572 = vmul.f32 %v2571, %v2570
    %v2573 = vmul.f32 0.5, %v2572
    %v2574 = vsub.f32 1.5, %v2573
    %v2575 = vmul.f32 %v2570, %v2574
    %vm2576 = vweird.f32 %v2281
    %vm2577 = vweird.f32 %v2570
    %vm2578 = vmor %vm2576, %vm2577
    %v2579 = vsel %vm2578, %v2570, %v2575
    %v2580 = vrsqrt.pop %v2282
    %v2581 = vmul.f32 %v2580, %v2282
    %v2582 = vmul.f32 %v2581, %v2580
    %v2583 = vmul.f32 0.5, %v2582
    %v2584 = vsub.f32 1.5, %v2583
    %v2585 = vmul.f32 %v2580, %v2584
    %vm2586 = vweird.f32 %v2282
    %vm2587 = vweird.f32 %v2580
    %vm2588 = vmor %vm2586, %vm2587
    %v2589 = vsel %vm2588, %v2580, %v2585
    %v2590 = vrsqrt.pop %v2283
    %v2591 = vmul.f32 %v2590, %v2283
    %v2592 = vmul.f32 %v2591, %v2590
    %v2593 = vmul.f32 0.5, %v2592
    %v2594 = vsub.f32 1.5, %v2593
    %v2595 = vmul.f32 %v2590, %v2594
    %vm2596 = vweird.f32 %v2283
    %vm2597 = vweird.f32 %v2590
    %vm2598 = vmor %vm2596, %vm2597
    %v2599 = vsel %vm2598, %v2590, %v2595
    %v2600 = vrsqrt.pop %v2284
    %v2601 = vmul.f32 %v2600, %v2284
    %v2602 = vmul.f32 %v2601, %v2600
    %v2603 = vmul.f32 0.5, %v2602
    %v2604 = vsub.f32 1.5, %v2603
    %v2605 = vmul.f32 %v2600, %v2604
    %vm2606 = vweird.f32 %v2284
    %vm2607 = vweird.f32 %v2600
    %vm2608 = vmor %vm2606, %vm2607
    %v2609 = vsel %vm2608, %v2600, %v2605
    %v2610 = vrsqrt.pop %v2285
    %v2611 = vmul.f32 %v2610, %v2285
    %v2612 = vmul.f32 %v2611, %v2610
    %v2613 = vmul.f32 0.5, %v2612
    %v2614 = vsub.f32 1.5, %v2613
    %v2615 = vmul.f32 %v2610, %v2614
    %vm2616 = vweird.f32 %v2285
    %vm2617 = vweird.f32 %v2610
    %vm2618 = vmor %vm2616, %vm2617
    %v2619 = vsel %vm2618, %v2610, %v2615
    %v2620 = vrsqrt.pop %v2286
    %v2621 = vmul.f32 %v2620, %v2286
    %v2622 = vmul.f32 %v2621, %v2620
    %v2623 = vmul.f32 0.5, %v2622
    %v2624 = vsub.f32 1.5, %v2623
    %v2625 = vmul.f32 %v2620, %v2624
    %vm2626 = vweird.f32 %v2286
    %vm2627 = vweird.f32 %v2620
    %vm2628 = vmor %vm2626, %vm2627
    %v2629 = vsel %vm2628, %v2620, %v2625
    %v2630 = vrsqrt.pop %v2287
    %v2631 = vmul.f32 %v2630, %v2287
    %v2632 = vmul.f32 %v2631, %v2630
    %v2633 = vmul.f32 0.5, %v2632
    %v2634 = vsub.f32 1.5, %v2633
    %v2635 = vmul.f32 %v2630, %v2634
    %vm2636 = vweird.f32 %v2287
    %vm2637 = vweird.f32 %v2630
    %vm2638 = vmor %vm2636, %vm2637
    %v2639 = vsel %vm2638, %v2630, %v2635
    %v2640 = vrsqrt.pop %v2288
    %v2641 = vmul.f32 %v2640, %v2288
    %v2642 = vmul.f32 %v2641, %v2640
    %v2643 = vmul.f32 0.5, %v2642
    %v2644 = vsub.f32 1.5, %v2643
    %v2645 = vmul.f32 %v2640, %v2644
    %vm2646 = vweird.f32 %v2288
    %vm2647 = vweird.f32 %v2640
    %vm2648 = vmor %vm2646, %vm2647
    %v2649 = vsel %vm2648, %v2640, %v2645
    %v2650 = vrsqrt.pop %v2289
    %v2651 = vmul.f32 %v2650, %v2289
    %v2652 = vmul.f32 %v2651, %v2650
    %v2653 = vmul.f32 0.5, %v2652
    %v2654 = vsub.f32 1.5, %v2653
    %v2655 = vmul.f32 %v2650, %v2654
    %vm2656 = vweird.f32 %v2289
    %vm2657 = vweird.f32 %v2650
    %vm2658 = vmor %vm2656, %vm2657
    %v2659 = vsel %vm2658, %v2650, %v2655
    %v2660 = vrsqrt.pop %v2290
    %v2661 = vmul.f32 %v2660, %v2290
    %v2662 = vmul.f32 %v2661, %v2660
    %v2663 = vmul.f32 0.5, %v2662
    %v2664 = vsub.f32 1.5, %v2663
    %v2665 = vmul.f32 %v2660, %v2664
    %vm2666 = vweird.f32 %v2290
    %vm2667 = vweird.f32 %v2660
    %vm2668 = vmor %vm2666, %vm2667
    %v2669 = vsel %vm2668, %v2660, %v2665
    %v2670 = vrsqrt.pop %v2291
    %v2671 = vmul.f32 %v2670, %v2291
    %v2672 = vmul.f32 %v2671, %v2670
    %v2673 = vmul.f32 0.5, %v2672
    %v2674 = vsub.f32 1.5, %v2673
    %v2675 = vmul.f32 %v2670, %v2674
    %vm2676 = vweird.f32 %v2291
    %vm2677 = vweird.f32 %v2670
    %vm2678 = vmor %vm2676, %vm2677
    %v2679 = vsel %vm2678, %v2670, %v2675
    %v2680 = vrsqrt.pop %v2292
    %v2681 = vmul.f32 %v2680, %v2292
    %v2682 = vmul.f32 %v2681, %v2680
    %v2683 = vmul.f32 0.5, %v2682
    %v2684 = vsub.f32 1.5, %v2683
    %v2685 = vmul.f32 %v2680, %v2684
    %vm2686 = vweird.f32 %v2292
    %vm2687 = vweird.f32 %v2680
    %vm2688 = vmor %vm2686, %vm2687
    %v2689 = vsel %vm2688, %v2680, %v2685
    %v2690 = vrsqrt.pop %v2293
    %v2691 = vmul.f32 %v2690, %v2293
    %v2692 = vmul.f32 %v2691, %v2690
    %v2693 = vmul.f32 0.5, %v2692
    %v2694 = vsub.f32 1.5, %v2693
    %v2695 = vmul.f32 %v2690, %v2694
    %vm2696 = vweird.f32 %v2293
    %vm2697 = vweird.f32 %v2690
    %vm2698 = vmor %vm2696, %vm2697
    %v2699 = vsel %vm2698, %v2690, %v2695
    %v2700 = vrsqrt.pop %v2294
    %v2701 = vmul.f32 %v2700, %v2294
    %v2702 = vmul.f32 %v2701, %v2700
    %v2703 = vmul.f32 0.5, %v2702
    %v2704 = vsub.f32 1.5, %v2703
    %v2705 = vmul.f32 %v2700, %v2704
    %vm2706 = vweird.f32 %v2294
    %vm2707 = vweird.f32 %v2700
    %vm2708 = vmor %vm2706, %vm2707
    %v2709 = vsel %vm2708, %v2700, %v2705
    %v2710 = vrsqrt.pop %v2295
    %v2711 = vmul.f32 %v2710, %v2295
    %v2712 = vmul.f32 %v2711, %v2710
    %v2713 = vmul.f32 0.5, %v2712
    %v2714 = vsub.f32 1.5, %v2713
    %v2715 = vmul.f32 %v2710, %v2714
    %vm2716 = vweird.f32 %v2295
    %vm2717 = vweird.f32 %v2710
    %vm2718 = vmor %vm2716, %vm2717
    %v2719 = vsel %vm2718, %v2710, %v2715
    %v2720 = vrsqrt.pop %v2296
    %v2721 = vmul.f32 %v2720, %v2296
    %v2722 = vmul.f32 %v2721, %v2720
    %v2723 = vmul.f32 0.5, %v2722
    %v2724 = vsub.f32 1.5, %v2723
    %v2725 = vmul.f32 %v2720, %v2724
    %vm2726 = vweird.f32 %v2296
    %vm2727 = vweird.f32 %v2720
    %vm2728 = vmor %vm2726, %vm2727
    %v2729 = vsel %vm2728, %v2720, %v2725
    %v2730 = vrsqrt.pop %v2297
    %v2731 = vmul.f32 %v2730, %v2297
    %v2732 = vmul.f32 %v2731, %v2730
    %v2733 = vmul.f32 0.5, %v2732
    %v2734 = vsub.f32 1.5, %v2733
    %v2735 = vmul.f32 %v2730, %v2734
    %vm2736 = vweird.f32 %v2297
    %vm2737 = vweird.f32 %v2730
    %vm2738 = vmor %vm2736, %vm2737
    %v2739 = vsel %vm2738, %v2730, %v2735
    %v2740 = vrsqrt.pop %v2298
    %v2741 = vmul.f32 %v2740, %v2298
    %v2742 = vmul.f32 %v2741, %v2740
    %v2743 = vmul.f32 0.5, %v2742
    %v2744 = vsub.f32 1.5, %v2743
    %v2745 = vmul.f32 %v2740, %v2744
    %vm2746 = vweird.f32 %v2298
    %vm2747 = vweird.f32 %v2740
    %vm2748 = vmor %vm2746, %vm2747
    %v2749 = vsel %vm2748, %v2740, %v2745
    %v2750 = vrsqrt.pop %v2299
    %v2751 = vmul.f32 %v2750, %v2299
    %v2752 = vmul.f32 %v2751, %v2750
    %v2753 = vmul.f32 0.5, %v2752
    %v2754 = vsub.f32 1.5, %v2753
    %v2755 = vmul.f32 %v2750, %v2754
    %vm2756 = vweird.f32 %v2299
    %vm2757 = vweird.f32 %v2750
    %vm2758 = vmor %vm2756, %vm2757
    %v2759 = vsel %vm2758, %v2750, %v2755
    %v2760 = vrsqrt.pop %v2300
    %v2761 = vmul.f32 %v2760, %v2300
    %v2762 = vmul.f32 %v2761, %v2760
    %v2763 = vmul.f32 0.5, %v2762
    %v2764 = vsub.f32 1.5, %v2763
    %v2765 = vmul.f32 %v2760, %v2764
    %vm2766 = vweird.f32 %v2300
    %vm2767 = vweird.f32 %v2760
    %vm2768 = vmor %vm2766, %vm2767
    %v2769 = vsel %vm2768, %v2760, %v2765
    %v2770 = vrsqrt.pop %v2301
    %v2771 = vmul.f32 %v2770, %v2301
    %v2772 = vmul.f32 %v2771, %v2770
    %v2773 = vmul.f32 0.5, %v2772
    %v2774 = vsub.f32 1.5, %v2773
    %v2775 = vmul.f32 %v2770, %v2774
    %vm2776 = vweird.f32 %v2301
    %vm2777 = vweird.f32 %v2770
    %vm2778 = vmor %vm2776, %vm2777
    %v2779 = vsel %vm2778, %v2770, %v2775
    %v2780 = vrsqrt.pop %v2302
    %v2781 = vmul.f32 %v2780, %v2302
    %v2782 = vmul.f32 %v2781, %v2780
    %v2783 = vmul.f32 0.5, %v2782
    %v2784 = vsub.f32 1.5, %v2783
    %v2785 = vmul.f32 %v2780, %v2784
    %vm2786 = vweird.f32 %v2302
    %vm2787 = vweird.f32 %v2780
    %vm2788 = vmor %vm2786, %vm2787
    %v2789 = vsel %vm2788, %v2780, %v2785
    %v2790 = vrsqrt.pop %v2303
    %v2791 = vmul.f32 %v2790, %v2303
    %v2792 = vmul.f32 %v2791, %v2790
    %v2793 = vmul.f32 0.5, %v2792
    %v2794 = vsub.f32 1.5, %v2793
    %v2795 = vmul.f32 %v2790, %v2794
    %vm2796 = vweird.f32 %v2303
    %vm2797 = vweird.f32 %v2790
    %vm2798 = vmor %vm2796, %vm2797
    %v2799 = vsel %vm2798, %v2790, %v2795
    %v2800 = vrsqrt.pop %v2304
    %v2801 = vmul.f32 %v2800, %v2304
    %v2802 = vmul.f32 %v2801, %v2800
    %v2803 = vmul.f32 0.5, %v2802
    %v2804 = vsub.f32 1.5, %v2803
    %v2805 = vmul.f32 %v2800, %v2804
    %vm2806 = vweird.f32 %v2304
    %vm2807 = vweird.f32 %v2800
    %vm2808 = vmor %vm2806, %vm2807
    %v2809 = vsel %vm2808, %v2800, %v2805
    %v2810 = vrsqrt.pop %v2305
    %v2811 = vmul.f32 %v2810, %v2305
    %v2812 = vmul.f32 %v2811, %v2810
    %v2813 = vmul.f32 0.5, %v2812
    %v2814 = vsub.f32 1.5, %v2813
    %v2815 = vmul.f32 %v2810, %v2814
    %vm2816 = vweird.f32 %v2305
    %vm2817 = vweird.f32 %v2810
    %vm2818 = vmor %vm2816, %vm2817
    %v2819 = vsel %vm2818, %v2810, %v2815
    %v2820 = vrsqrt.pop %v2306
    %v2821 = vmul.f32 %v2820, %v2306
    %v2822 = vmul.f32 %v2821, %v2820
    %v2823 = vmul.f32 0.5, %v2822
    %v2824 = vsub.f32 1.5, %v2823
    %v2825 = vmul.f32 %v2820, %v2824
    %vm2826 = vweird.f32 %v2306
    %vm2827 = vweird.f32 %v2820
    %vm2828 = vmor %vm2826, %vm2827
    %v2829 = vsel %vm2828, %v2820, %v2825
    %v2830 = vrsqrt.pop %v2307
    %v2831 = vmul.f32 %v2830, %v2307
    %v2832 = vmul.f32 %v2831, %v2830
    %v2833 = vmul.f32 0.5, %v2832
    %v2834 = vsub.f32 1.5, %v2833
    %v2835 = vmul.f32 %v2830, %v2834
    %vm2836 = vweird.f32 %v2307
    %vm2837 = vweird.f32 %v2830
    %vm2838 = vmor %vm2836, %vm2837
    %v2839 = vsel %vm2838, %v2830, %v2835
    %v2840 = vrsqrt.pop %v2308
    %v2841 = vmul.f32 %v2840, %v2308
    %v2842 = vmul.f32 %v2841, %v2840
    %v2843 = vmul.f32 0.5, %v2842
    %v2844 = vsub.f32 1.5, %v2843
    %v2845 = vmul.f32 %v2840, %v2844
    %vm2846 = vweird.f32 %v2308
    %vm2847 = vweird.f32 %v2840
    %vm2848 = vmor %vm2846, %vm2847
    %v2849 = vsel %vm2848, %v2840, %v2845
    %v2850 = vrsqrt.pop %v2309
    %v2851 = vmul.f32 %v2850, %v2309
    %v2852 = vmul.f32 %v2851, %v2850
    %v2853 = vmul.f32 0.5, %v2852
    %v2854 = vsub.f32 1.5, %v2853
    %v2855 = vmul.f32 %v2850, %v2854
    %vm2856 = vweird.f32 %v2309
    %vm2857 = vweird.f32 %v2850
    %vm2858 = vmor %vm2856, %vm2857
    %v2859 = vsel %vm2858, %v2850, %v2855
    %v2860 = vrsqrt.pop %v2310
    %v2861 = vmul.f32 %v2860, %v2310
    %v2862 = vmul.f32 %v2861, %v2860
    %v2863 = vmul.f32 0.5, %v2862
    %v2864 = vsub.f32 1.5, %v2863
    %v2865 = vmul.f32 %v2860, %v2864
    %vm2866 = vweird.f32 %v2310
    %vm2867 = vweird.f32 %v2860
    %vm2868 = vmor %vm2866, %vm2867
    %v2869 = vsel %vm2868, %v2860, %v2865
    %v2870 = vrsqrt.pop %v2311
    %v2871 = vmul.f32 %v2870, %v2311
    %v2872 = vmul.f32 %v2871, %v2870
    %v2873 = vmul.f32 0.5, %v2872
    %v2874 = vsub.f32 1.5, %v2873
    %v2875 = vmul.f32 %v2870, %v2874
    %vm2876 = vweird.f32 %v2311
    %vm2877 = vweird.f32 %v2870
    %vm2878 = vmor %vm2876, %vm2877
    %v2879 = vsel %vm2878, %v2870, %v2875
    %v2880 = vrsqrt.pop %v2312
    %v2881 = vmul.f32 %v2880, %v2312
    %v2882 = vmul.f32 %v2881, %v2880
    %v2883 = vmul.f32 0.5, %v2882
    %v2884 = vsub.f32 1.5, %v2883
    %v2885 = vmul.f32 %v2880, %v2884
    %vm2886 = vweird.f32 %v2312
    %vm2887 = vweird.f32 %v2880
    %vm2888 = vmor %vm2886, %vm2887
    %v2889 = vsel %vm2888, %v2880, %v2885
    %v2890 = vrsqrt.pop %v2313
    %v2891 = vmul.f32 %v2890, %v2313
    %v2892 = vmul.f32 %v2891, %v2890
    %v2893 = vmul.f32 0.5, %v2892
    %v2894 = vsub.f32 1.5, %v2893
    %v2895 = vmul.f32 %v2890, %v2894
    %vm2896 = vweird.f32 %v2313
    %vm2897 = vweird.f32 %v2890
    %vm2898 = vmor %vm2896, %vm2897
    %v2899 = vsel %vm2898, %v2890, %v2895
    %v2900 = vrsqrt.pop %v2314
    %v2901 = vmul.f32 %v2900, %v2314
    %v2902 = vmul.f32 %v2901, %v2900
    %v2903 = vmul.f32 0.5, %v2902
    %v2904 = vsub.f32 1.5, %v2903
    %v2905 = vmul.f32 %v2900, %v2904
    %vm2906 = vweird.f32 %v2314
    %vm2907 = vweird.f32 %v2900
    %vm2908 = vmor %vm2906, %vm2907
    %v2909 = vsel %vm2908, %v2900, %v2905
    %v2910 = vrsqrt.pop %v2315
    %v2911 = vmul.f32 %v2910, %v2315
    %v2912 = vmul.f32 %v2911, %v2910
    %v2913 = vmul.f32 0.5, %v2912
    %v2914 = vsub.f32 1.5, %v2913
    %v2915 = vmul.f32 %v2910, %v2914
    %vm2916 = vweird.f32 %v2315
    %vm2917 = vweird.f32 %v2910
    %vm2918 = vmor %vm2916, %vm2917
    %v2919 = vsel %vm2918, %v2910, %v2915
    %v2920 = vrsqrt.pop %v2316
    %v2921 = vmul.f32 %v2920, %v2316
    %v2922 = vmul.f32 %v2921, %v2920
    %v2923 = vmul.f32 0.5, %v2922
    %v2924 = vsub.f32 1.5, %v2923
    %v2925 = vmul.f32 %v2920, %v2924
    %vm2926 = vweird.f32 %v2316
    %vm2927 = vweird.f32 %v2920
    %vm2928 = vmor %vm2926, %vm2927
    %v2929 = vsel %vm2928, %v2920, %v2925
    %v2930 = vrsqrt.pop %v2317
    %v2931 = vmul.f32 %v2930, %v2317
    %v2932 = vmul.f32 %v2931, %v2930
    %v2933 = vmul.f32 0.5, %v2932
    %v2934 = vsub.f32 1.5, %v2933
    %v2935 = vmul.f32 %v2930, %v2934
    %vm2936 = vweird.f32 %v2317
    %vm2937 = vweird.f32 %v2930
    %vm2938 = vmor %vm2936, %vm2937
    %v2939 = vsel %vm2938, %v2930, %v2935
    %v2940 = vrsqrt.pop %v2318
    %v2941 = vmul.f32 %v2940, %v2318
    %v2942 = vmul.f32 %v2941, %v2940
    %v2943 = vmul.f32 0.5, %v2942
    %v2944 = vsub.f32 1.5, %v2943
    %v2945 = vmul.f32 %v2940, %v2944
    %vm2946 = vweird.f32 %v2318
    %vm2947 = vweird.f32 %v2940
    %vm2948 = vmor %vm2946, %vm2947
    %v2949 = vsel %vm2948, %v2940, %v2945
    %v2950 = vrsqrt.pop %v2319
    %v2951 = vmul.f32 %v2950, %v2319
    %v2952 = vmul.f32 %v2951, %v2950
    %v2953 = vmul.f32 0.5, %v2952
    %v2954 = vsub.f32 1.5, %v2953
    %v2955 = vmul.f32 %v2950, %v2954
    %vm2956 = vweird.f32 %v2319
    %vm2957 = vweird.f32 %v2950
    %vm2958 = vmor %vm2956, %vm2957
    %v2959 = vsel %vm2958, %v2950, %v2955
    %v2960 = vmul.f32 %v2192, %v2329
    %v2961 = vmul.f32 %v2193, %v2339
    %v2962 = vmul.f32 %v2194, %v2349
    %v2963 = vmul.f32 %v2195, %v2359
    %v2964 = vmul.f32 %v2196, %v2369
    %v2965 = vmul.f32 %v2197, %v2379
    %v2966 = vmul.f32 %v2198, %v2389
    %v2967 = vmul.f32 %v2199, %v2399
    %v2968 = vmul.f32 %v2200, %v2409
    %v2969 = vmul.f32 %v2201, %v2419
    %v2970 = vmul.f32 %v2202, %v2429
    %v2971 = vmul.f32 %v2203, %v2439
    %v2972 = vmul.f32 %v2204, %v2449
    %v2973 = vmul.f32 %v2205, %v2459
    %v2974 = vmul.f32 %v2206, %v2469
    %v2975 = vmul.f32 %v2207, %v2479
    %v2976 = vmul.f32 %v2208, %v2489
    %v2977 = vmul.f32 %v2209, %v2499
    %v2978 = vmul.f32 %v2210, %v2509
    %v2979 = vmul.f32 %v2211, %v2519
    %v2980 = vmul.f32 %v2212, %v2529
    %v2981 = vmul.f32 %v2213, %v2539
    %v2982 = vmul.f32 %v2214, %v2549
    %v2983 = vmul.f32 %v2215, %v2559
    %v2984 = vmul.f32 %v2216, %v2569
    %v2985 = vmul.f32 %v2217, %v2579
    %v2986 = vmul.f32 %v2218, %v2589
    %v2987 = vmul.f32 %v2219, %v2599
    %v2988 = vmul.f32 %v2220, %v2609
    %v2989 = vmul.f32 %v2221, %v2619
    %v2990 = vmul.f32 %v2222, %v2629
    %v2991 = vmul.f32 %v2223, %v2639
    %v2992 = vmul.f32 %v2224, %v2649
    %v2993 = vmul.f32 %v2225, %v2659
    %v2994 = vmul.f32 %v2226, %v2669
    %v2995 = vmul.f32 %v2227, %v2679
    %v2996 = vmul.f32 %v2228, %v2689
    %v2997 = vmul.f32 %v2229, %v2699
    %v2998 = vmul.f32 %v2230, %v2709
    %v2999 = vmul.f32 %v2231, %v2719
    %v3000 = vmul.f32 %v2232, %v2729
    %v3001 = vmul.f32 %v2233, %v2739
    %v3002 = vmul.f32 %v2234, %v2749
    %v3003 = vmul.f32 %v2235, %v2759
    %v3004 = vmul.f32 %v2236, %v2769
    %v3005 = vmul.f32 %v2237, %v2779
    %v3006 = vmul.f32 %v2238, %v2789
    %v3007 = vmul.f32 %v2239, %v2799
    %v3008 = vmul.f32 %v2240, %v2809
    %v3009 = vmul.f32 %v2241, %v2819
    %v3010 = vmul.f32 %v2242, %v2829
    %v3011 = vmul.f32 %v2243, %v2839
    %v3012 = vmul.f32 %v2244, %v2849
    %v3013 = vmul.f32 %v2245, %v2859
    %v3014 = vmul.f32 %v2246, %v2869
    %v3015 = vmul.f32 %v2247, %v2879
    %v3016 = vmul.f32 %v2248, %v2889
    %v3017 = vmul.f32 %v2249, %v2899
    %v3018 = vmul.f32 %v2250, %v2909
    %v3019 = vmul.f32 %v2251, %v2919
    %v3020 = vmul.f32 %v2252, %v2929
    %v3021 = vmul.f32 %v2253, %v2939
    %v3022 = vmul.f32 %v2254, %v2949
    %v3023 = vmul.f32 %v2255, %v2959
    %v3024 = vld [vmem:[%s13] sm:$0x1]
    %v3026 = vperm.slane %v3024, 0
    %v3028 = vmul.f32 %v2960, %v3026
    %v3029 = vmul.f32 %v2961, %v3026
    %v3030 = vmul.f32 %v2962, %v3026
    %v3031 = vmul.f32 %v2963, %v3026
    %v3032 = vmul.f32 %v2964, %v3026
    %v3033 = vmul.f32 %v2965, %v3026
    %v3034 = vmul.f32 %v2966, %v3026
    %v3035 = vmul.f32 %v2967, %v3026
    %v3036 = vmul.f32 %v2968, %v3026
    %v3037 = vmul.f32 %v2969, %v3026
    %v3038 = vmul.f32 %v2970, %v3026
    %v3039 = vmul.f32 %v2971, %v3026
    %v3040 = vmul.f32 %v2972, %v3026
    %v3041 = vmul.f32 %v2973, %v3026
    %v3042 = vmul.f32 %v2974, %v3026
    %v3043 = vmul.f32 %v2975, %v3026
    %v3044 = vmul.f32 %v2976, %v3026
    %v3045 = vmul.f32 %v2977, %v3026
    %v3046 = vmul.f32 %v2978, %v3026
    %v3047 = vmul.f32 %v2979, %v3026
    %v3048 = vmul.f32 %v2980, %v3026
    %v3049 = vmul.f32 %v2981, %v3026
    %v3050 = vmul.f32 %v2982, %v3026
    %v3051 = vmul.f32 %v2983, %v3026
    %v3052 = vmul.f32 %v2984, %v3026
    %v3053 = vmul.f32 %v2985, %v3026
    %v3054 = vmul.f32 %v2986, %v3026
    %v3055 = vmul.f32 %v2987, %v3026
    %v3056 = vmul.f32 %v2988, %v3026
    %v3057 = vmul.f32 %v2989, %v3026
    %v3058 = vmul.f32 %v2990, %v3026
    %v3059 = vmul.f32 %v2991, %v3026
    %v3060 = vmul.f32 %v2992, %v3026
    %v3061 = vmul.f32 %v2993, %v3026
    %v3062 = vmul.f32 %v2994, %v3026
    %v3063 = vmul.f32 %v2995, %v3026
    %v3064 = vmul.f32 %v2996, %v3026
    %v3065 = vmul.f32 %v2997, %v3026
    %v3066 = vmul.f32 %v2998, %v3026
    %v3067 = vmul.f32 %v2999, %v3026
    %v3068 = vmul.f32 %v3000, %v3026
    %v3069 = vmul.f32 %v3001, %v3026
    %v3070 = vmul.f32 %v3002, %v3026
    %v3071 = vmul.f32 %v3003, %v3026
    %v3072 = vmul.f32 %v3004, %v3026
    %v3073 = vmul.f32 %v3005, %v3026
    %v3074 = vmul.f32 %v3006, %v3026
    %v3075 = vmul.f32 %v3007, %v3026
    %v3076 = vmul.f32 %v3008, %v3026
    %v3077 = vmul.f32 %v3009, %v3026
    %v3078 = vmul.f32 %v3010, %v3026
    %v3079 = vmul.f32 %v3011, %v3026
    %v3080 = vmul.f32 %v3012, %v3026
    %v3081 = vmul.f32 %v3013, %v3026
    %v3082 = vmul.f32 %v3014, %v3026
    %v3083 = vmul.f32 %v3015, %v3026
    %v3084 = vmul.f32 %v3016, %v3026
    %v3085 = vmul.f32 %v3017, %v3026
    %v3086 = vmul.f32 %v3018, %v3026
    %v3087 = vmul.f32 %v3019, %v3026
    %v3088 = vmul.f32 %v3020, %v3026
    %v3089 = vmul.f32 %v3021, %v3026
    %v3090 = vmul.f32 %v3022, %v3026
    %v3091 = vmul.f32 %v3023, %v3026
    %v3092 = vld [vmem:[%s14] sm:$0x1]
    %v3094 = vperm.slane %v3092, 0
    %v3096 = vadd.f32 %v3028, %v3094
    %v3097 = vadd.f32 %v3029, %v3094
    %v3098 = vadd.f32 %v3030, %v3094
    %v3099 = vadd.f32 %v3031, %v3094
    %v3100 = vadd.f32 %v3032, %v3094
    %v3101 = vadd.f32 %v3033, %v3094
    %v3102 = vadd.f32 %v3034, %v3094
    %v3103 = vadd.f32 %v3035, %v3094
    %v3104 = vadd.f32 %v3036, %v3094
    %v3105 = vadd.f32 %v3037, %v3094
    %v3106 = vadd.f32 %v3038, %v3094
    %v3107 = vadd.f32 %v3039, %v3094
    %v3108 = vadd.f32 %v3040, %v3094
    %v3109 = vadd.f32 %v3041, %v3094
    %v3110 = vadd.f32 %v3042, %v3094
    %v3111 = vadd.f32 %v3043, %v3094
    %v3112 = vadd.f32 %v3044, %v3094
    %v3113 = vadd.f32 %v3045, %v3094
    %v3114 = vadd.f32 %v3046, %v3094
    %v3115 = vadd.f32 %v3047, %v3094
    %v3116 = vadd.f32 %v3048, %v3094
    %v3117 = vadd.f32 %v3049, %v3094
    %v3118 = vadd.f32 %v3050, %v3094
    %v3119 = vadd.f32 %v3051, %v3094
    %v3120 = vadd.f32 %v3052, %v3094
    %v3121 = vadd.f32 %v3053, %v3094
    %v3122 = vadd.f32 %v3054, %v3094
    %v3123 = vadd.f32 %v3055, %v3094
    %v3124 = vadd.f32 %v3056, %v3094
    %v3125 = vadd.f32 %v3057, %v3094
    %v3126 = vadd.f32 %v3058, %v3094
    %v3127 = vadd.f32 %v3059, %v3094
    %v3128 = vadd.f32 %v3060, %v3094
    %v3129 = vadd.f32 %v3061, %v3094
    %v3130 = vadd.f32 %v3062, %v3094
    %v3131 = vadd.f32 %v3063, %v3094
    %v3132 = vadd.f32 %v3064, %v3094
    %v3133 = vadd.f32 %v3065, %v3094
    %v3134 = vadd.f32 %v3066, %v3094
    %v3135 = vadd.f32 %v3067, %v3094
    %v3136 = vadd.f32 %v3068, %v3094
    %v3137 = vadd.f32 %v3069, %v3094
    %v3138 = vadd.f32 %v3070, %v3094
    %v3139 = vadd.f32 %v3071, %v3094
    %v3140 = vadd.f32 %v3072, %v3094
    %v3141 = vadd.f32 %v3073, %v3094
    %v3142 = vadd.f32 %v3074, %v3094
    %v3143 = vadd.f32 %v3075, %v3094
    %v3144 = vadd.f32 %v3076, %v3094
    %v3145 = vadd.f32 %v3077, %v3094
    %v3146 = vadd.f32 %v3078, %v3094
    %v3147 = vadd.f32 %v3079, %v3094
    %v3148 = vadd.f32 %v3080, %v3094
    %v3149 = vadd.f32 %v3081, %v3094
    %v3150 = vadd.f32 %v3082, %v3094
    %v3151 = vadd.f32 %v3083, %v3094
    %v3152 = vadd.f32 %v3084, %v3094
    %v3153 = vadd.f32 %v3085, %v3094
    %v3154 = vadd.f32 %v3086, %v3094
    %v3155 = vadd.f32 %v3087, %v3094
    %v3156 = vadd.f32 %v3088, %v3094
    %v3157 = vadd.f32 %v3089, %v3094
    %v3158 = vadd.f32 %v3090, %v3094
    %v3159 = vadd.f32 %v3091, %v3094
    %v3160 = vpack.c.bf16 %v3097, %v3096
    %v3161 = vpack.c.bf16 %v3099, %v3098
    %v3162 = vpack.c.bf16 %v3101, %v3100
    %v3163 = vpack.c.bf16 %v3103, %v3102
    %v3164 = vpack.c.bf16 %v3105, %v3104
    %v3165 = vpack.c.bf16 %v3107, %v3106
    %v3166 = vpack.c.bf16 %v3109, %v3108
    %v3167 = vpack.c.bf16 %v3111, %v3110
    %v3168 = vpack.c.bf16 %v3113, %v3112
    %v3169 = vpack.c.bf16 %v3115, %v3114
    %v3170 = vpack.c.bf16 %v3117, %v3116
    %v3171 = vpack.c.bf16 %v3119, %v3118
    %v3172 = vpack.c.bf16 %v3121, %v3120
    %v3173 = vpack.c.bf16 %v3123, %v3122
    %v3174 = vpack.c.bf16 %v3125, %v3124
    %v3175 = vpack.c.bf16 %v3127, %v3126
    %v3176 = vpack.c.bf16 %v3129, %v3128
    %v3177 = vpack.c.bf16 %v3131, %v3130
    %v3178 = vpack.c.bf16 %v3133, %v3132
    %v3179 = vpack.c.bf16 %v3135, %v3134
    %v3180 = vpack.c.bf16 %v3137, %v3136
    %v3181 = vpack.c.bf16 %v3139, %v3138
    %v3182 = vpack.c.bf16 %v3141, %v3140
    %v3183 = vpack.c.bf16 %v3143, %v3142
    %v3184 = vpack.c.bf16 %v3145, %v3144
    %v3185 = vpack.c.bf16 %v3147, %v3146
    %v3186 = vpack.c.bf16 %v3149, %v3148
    %v3187 = vpack.c.bf16 %v3151, %v3150
    %v3188 = vpack.c.bf16 %v3153, %v3152
    %v3189 = vpack.c.bf16 %v3155, %v3154
    %v3190 = vpack.c.bf16 %v3157, %v3156
    %v3191 = vpack.c.bf16 %v3159, %v3158
    %v3192 = vld [vmem:[%s16] sm:$0xf]
    %v3193 = vld [vmem:[%s16 + $0x4] sm:$0xf]
    %v3194 = vld [vmem:[%s16 + $0x8] sm:$0xf]
    %v3195 = vld [vmem:[%s16 + $0xc] sm:$0xf]
    %v3196 = vld [vmem:[%s16 + $0x10] sm:$0xf]
    %v3197 = vld [vmem:[%s16 + $0x14] sm:$0xf]
    %v3198 = vld [vmem:[%s16 + $0x18] sm:$0xf]
    %v3199 = vld [vmem:[%s16 + $0x1c] sm:$0xf]
    %v3200 = vld [vmem:[%s16 + $0x20] sm:$0xf]
    %v3201 = vld [vmem:[%s16 + $0x24] sm:$0xf]
    %v3202 = vld [vmem:[%s16 + $0x28] sm:$0xf]
    %v3203 = vld [vmem:[%s16 + $0x2c] sm:$0xf]
    %v3204 = vld [vmem:[%s16 + $0x30] sm:$0xf]
    %v3205 = vld [vmem:[%s16 + $0x34] sm:$0xf]
    %v3206 = vld [vmem:[%s16 + $0x38] sm:$0xf]
    %v3207 = vld [vmem:[%s16 + $0x3c] sm:$0xf]
    %v3208 = vld [vmem:[%s17] sm:$0x1]
    %v3210 = vperm.slane %v3208, 0
    %v3228 = vunpack.c.l.b16 %v3192
    %v3229 = vunpack.c.l.b16 %v3193
    %v3230 = vunpack.c.l.b16 %v3194
    %v3231 = vunpack.c.l.b16 %v3195
    %v3232 = vunpack.c.l.b16 %v3196
    %v3233 = vunpack.c.l.b16 %v3197
    %v3234 = vunpack.c.l.b16 %v3198
    %v3235 = vunpack.c.l.b16 %v3199
    %v3236 = vunpack.c.l.b16 %v3200
    %v3237 = vunpack.c.l.b16 %v3201
    %v3238 = vunpack.c.l.b16 %v3202
    %v3239 = vunpack.c.l.b16 %v3203
    %v3240 = vunpack.c.l.b16 %v3204
    %v3241 = vunpack.c.l.b16 %v3205
    %v3242 = vunpack.c.l.b16 %v3206
    %v3243 = vunpack.c.l.b16 %v3207
    %v3244 = vpack.c.b16 %v3229, %v3228
    %v3245 = vpack.c.b16 %v3231, %v3230
    %v3246 = vpack.c.b16 %v3233, %v3232
    %v3247 = vpack.c.b16 %v3235, %v3234
    %v3248 = vpack.c.b16 %v3237, %v3236
    %v3249 = vpack.c.b16 %v3239, %v3238
    %v3250 = vpack.c.b16 %v3241, %v3240
    %v3251 = vpack.c.b16 %v3243, %v3242
    %3260 = vmatpush.bf16.msra.mxu0 %v3251
    %3261 = vmatpush.bf16.msra.mxu0 %v3250
    %3262 = vmatpush.bf16.msra.mxu0 %v3249
    %3263 = vmatpush.bf16.msra.mxu0 %v3248
    %3264 = vmatpush.bf16.msra.mxu0 %v3247
    %3265 = vmatpush.bf16.msra.mxu0 %v3246
    %3266 = vmatpush.bf16.msra.mxu0 %v3245
    %3267 = vmatpush.bf16.msra.mxu0 %v3244
    %3268 = vmatmul.bf16.gmra.mxu0 %v3160
    %v3269 = vpop.f32.mrf.mxu0
    %v3270 = vadd.f32 %v3210, %v3269
    %v3271 = vpop.f32.mrf.mxu0
    %v3272 = vadd.f32 %v3210, %v3271
    %3273 = vmatmul.bf16.gmra.mxu0 %v3161
    %v3274 = vpop.f32.mrf.mxu0
    %v3275 = vadd.f32 %v3210, %v3274
    %v3276 = vpop.f32.mrf.mxu0
    %v3277 = vadd.f32 %v3210, %v3276
    %3278 = vmatmul.bf16.gmra.mxu0 %v3162
    %v3279 = vpop.f32.mrf.mxu0
    %v3280 = vadd.f32 %v3210, %v3279
    %v3281 = vpop.f32.mrf.mxu0
    %v3282 = vadd.f32 %v3210, %v3281
    %3283 = vmatmul.bf16.gmra.mxu0 %v3163
    %v3284 = vpop.f32.mrf.mxu0
    %v3285 = vadd.f32 %v3210, %v3284
    %v3286 = vpop.f32.mrf.mxu0
    %v3287 = vadd.f32 %v3210, %v3286
    %3288 = vmatmul.bf16.gmra.mxu0 %v3164
    %v3289 = vpop.f32.mrf.mxu0
    %v3290 = vadd.f32 %v3210, %v3289
    %v3291 = vpop.f32.mrf.mxu0
    %v3292 = vadd.f32 %v3210, %v3291
    %3293 = vmatmul.bf16.gmra.mxu0 %v3165
    %v3294 = vpop.f32.mrf.mxu0
    %v3295 = vadd.f32 %v3210, %v3294
    %v3296 = vpop.f32.mrf.mxu0
    %v3297 = vadd.f32 %v3210, %v3296
    %3298 = vmatmul.bf16.gmra.mxu0 %v3166
    %v3299 = vpop.f32.mrf.mxu0
    %v3300 = vadd.f32 %v3210, %v3299
    %v3301 = vpop.f32.mrf.mxu0
    %v3302 = vadd.f32 %v3210, %v3301
    %3303 = vmatmul.bf16.gmra.mxu0 %v3167
    %v3304 = vpop.f32.mrf.mxu0
    %v3305 = vadd.f32 %v3210, %v3304
    %v3306 = vpop.f32.mrf.mxu0
    %v3307 = vadd.f32 %v3210, %v3306
    %3308 = vmatmul.bf16.gmra.mxu0 %v3168
    %v3309 = vpop.f32.mrf.mxu0
    %v3310 = vadd.f32 %v3210, %v3309
    %v3311 = vpop.f32.mrf.mxu0
    %v3312 = vadd.f32 %v3210, %v3311
    %3313 = vmatmul.bf16.gmra.mxu0 %v3169
    %v3314 = vpop.f32.mrf.mxu0
    %v3315 = vadd.f32 %v3210, %v3314
    %v3316 = vpop.f32.mrf.mxu0
    %v3317 = vadd.f32 %v3210, %v3316
    %3318 = vmatmul.bf16.gmra.mxu0 %v3170
    %v3319 = vpop.f32.mrf.mxu0
    %v3320 = vadd.f32 %v3210, %v3319
    %v3321 = vpop.f32.mrf.mxu0
    %v3322 = vadd.f32 %v3210, %v3321
    %3323 = vmatmul.bf16.gmra.mxu0 %v3171
    %v3324 = vpop.f32.mrf.mxu0
    %v3325 = vadd.f32 %v3210, %v3324
    %v3326 = vpop.f32.mrf.mxu0
    %v3327 = vadd.f32 %v3210, %v3326
    %3328 = vmatmul.bf16.gmra.mxu0 %v3172
    %v3329 = vpop.f32.mrf.mxu0
    %v3330 = vadd.f32 %v3210, %v3329
    %v3331 = vpop.f32.mrf.mxu0
    %v3332 = vadd.f32 %v3210, %v3331
    %3333 = vmatmul.bf16.gmra.mxu0 %v3173
    %v3334 = vpop.f32.mrf.mxu0
    %v3335 = vadd.f32 %v3210, %v3334
    %v3336 = vpop.f32.mrf.mxu0
    %v3337 = vadd.f32 %v3210, %v3336
    %3338 = vmatmul.bf16.gmra.mxu0 %v3174
    %v3339 = vpop.f32.mrf.mxu0
    %v3340 = vadd.f32 %v3210, %v3339
    %v3341 = vpop.f32.mrf.mxu0
    %v3342 = vadd.f32 %v3210, %v3341
    %3343 = vmatmul.bf16.gmra.mxu0 %v3175
    %v3344 = vpop.f32.mrf.mxu0
    %v3345 = vadd.f32 %v3210, %v3344
    %v3346 = vpop.f32.mrf.mxu0
    %v3347 = vadd.f32 %v3210, %v3346
    %3348 = vmatmul.bf16.gmra.mxu0 %v3176
    %v3349 = vpop.f32.mrf.mxu0
    %v3350 = vadd.f32 %v3210, %v3349
    %v3351 = vpop.f32.mrf.mxu0
    %v3352 = vadd.f32 %v3210, %v3351
    %3353 = vmatmul.bf16.gmra.mxu0 %v3177
    %v3354 = vpop.f32.mrf.mxu0
    %v3355 = vadd.f32 %v3210, %v3354
    %v3356 = vpop.f32.mrf.mxu0
    %v3357 = vadd.f32 %v3210, %v3356
    %3358 = vmatmul.bf16.gmra.mxu0 %v3178
    %v3359 = vpop.f32.mrf.mxu0
    %v3360 = vadd.f32 %v3210, %v3359
    %v3361 = vpop.f32.mrf.mxu0
    %v3362 = vadd.f32 %v3210, %v3361
    %3363 = vmatmul.bf16.gmra.mxu0 %v3179
    %v3364 = vpop.f32.mrf.mxu0
    %v3365 = vadd.f32 %v3210, %v3364
    %v3366 = vpop.f32.mrf.mxu0
    %v3367 = vadd.f32 %v3210, %v3366
    %3368 = vmatmul.bf16.gmra.mxu0 %v3180
    %v3369 = vpop.f32.mrf.mxu0
    %v3370 = vadd.f32 %v3210, %v3369
    %v3371 = vpop.f32.mrf.mxu0
    %v3372 = vadd.f32 %v3210, %v3371
    %3373 = vmatmul.bf16.gmra.mxu0 %v3181
    %v3374 = vpop.f32.mrf.mxu0
    %v3375 = vadd.f32 %v3210, %v3374
    %v3376 = vpop.f32.mrf.mxu0
    %v3377 = vadd.f32 %v3210, %v3376
    %3378 = vmatmul.bf16.gmra.mxu0 %v3182
    %v3379 = vpop.f32.mrf.mxu0
    %v3380 = vadd.f32 %v3210, %v3379
    %v3381 = vpop.f32.mrf.mxu0
    %v3382 = vadd.f32 %v3210, %v3381
    %3383 = vmatmul.bf16.gmra.mxu0 %v3183
    %v3384 = vpop.f32.mrf.mxu0
    %v3385 = vadd.f32 %v3210, %v3384
    %v3386 = vpop.f32.mrf.mxu0
    %v3387 = vadd.f32 %v3210, %v3386
    %3388 = vmatmul.bf16.gmra.mxu0 %v3184
    %v3389 = vpop.f32.mrf.mxu0
    %v3390 = vadd.f32 %v3210, %v3389
    %v3391 = vpop.f32.mrf.mxu0
    %v3392 = vadd.f32 %v3210, %v3391
    %3393 = vmatmul.bf16.gmra.mxu0 %v3185
    %v3394 = vpop.f32.mrf.mxu0
    %v3395 = vadd.f32 %v3210, %v3394
    %v3396 = vpop.f32.mrf.mxu0
    %v3397 = vadd.f32 %v3210, %v3396
    %3398 = vmatmul.bf16.gmra.mxu0 %v3186
    %v3399 = vpop.f32.mrf.mxu0
    %v3400 = vadd.f32 %v3210, %v3399
    %v3401 = vpop.f32.mrf.mxu0
    %v3402 = vadd.f32 %v3210, %v3401
    %3403 = vmatmul.bf16.gmra.mxu0 %v3187
    %v3404 = vpop.f32.mrf.mxu0
    %v3405 = vadd.f32 %v3210, %v3404
    %v3406 = vpop.f32.mrf.mxu0
    %v3407 = vadd.f32 %v3210, %v3406
    %3408 = vmatmul.bf16.gmra.mxu0 %v3188
    %v3409 = vpop.f32.mrf.mxu0
    %v3410 = vadd.f32 %v3210, %v3409
    %v3411 = vpop.f32.mrf.mxu0
    %v3412 = vadd.f32 %v3210, %v3411
    %3413 = vmatmul.bf16.gmra.mxu0 %v3189
    %v3414 = vpop.f32.mrf.mxu0
    %v3415 = vadd.f32 %v3210, %v3414
    %v3416 = vpop.f32.mrf.mxu0
    %v3417 = vadd.f32 %v3210, %v3416
    %3418 = vmatmul.bf16.gmra.mxu0 %v3190
    %v3419 = vpop.f32.mrf.mxu0
    %v3420 = vadd.f32 %v3210, %v3419
    %v3421 = vpop.f32.mrf.mxu0
    %v3422 = vadd.f32 %v3210, %v3421
    %3423 = vmatmul.bf16.gmra.mxu0 %v3191
    %v3424 = vpop.f32.mrf.mxu0
    %v3425 = vadd.f32 %v3210, %v3424
    %v3426 = vpop.f32.mrf.mxu0
    %v3427 = vadd.f32 %v3210, %v3426
    %3428 = vdwg.mxu0
    %v3429 = vadd.f32 %v3270, %v3350
    %v3430 = vadd.f32 %v3272, %v3352
    %v3431 = vadd.f32 %v3275, %v3355
    %v3432 = vadd.f32 %v3277, %v3357
    %v3433 = vadd.f32 %v3280, %v3360
    %v3434 = vadd.f32 %v3282, %v3362
    %v3435 = vadd.f32 %v3285, %v3365
    %v3436 = vadd.f32 %v3287, %v3367
    %v3437 = vadd.f32 %v3290, %v3370
    %v3438 = vadd.f32 %v3292, %v3372
    %v3439 = vadd.f32 %v3295, %v3375
    %v3440 = vadd.f32 %v3297, %v3377
    %v3441 = vadd.f32 %v3300, %v3380
    %v3442 = vadd.f32 %v3302, %v3382
    %v3443 = vadd.f32 %v3305, %v3385
    %v3444 = vadd.f32 %v3307, %v3387
    %v3445 = vadd.f32 %v3310, %v3390
    %v3446 = vadd.f32 %v3312, %v3392
    %v3447 = vadd.f32 %v3315, %v3395
    %v3448 = vadd.f32 %v3317, %v3397
    %v3449 = vadd.f32 %v3320, %v3400
    %v3450 = vadd.f32 %v3322, %v3402
    %v3451 = vadd.f32 %v3325, %v3405
    %v3452 = vadd.f32 %v3327, %v3407
    %v3453 = vadd.f32 %v3330, %v3410
    %v3454 = vadd.f32 %v3332, %v3412
    %v3455 = vadd.f32 %v3335, %v3415
    %v3456 = vadd.f32 %v3337, %v3417
    %v3457 = vadd.f32 %v3340, %v3420
    %v3458 = vadd.f32 %v3342, %v3422
    %v3459 = vadd.f32 %v3345, %v3425
    %v3460 = vadd.f32 %v3347, %v3427
    %v3461 = vpack.c.bf16 %v3430, %v3429
    %v3462 = vpack.c.bf16 %v3432, %v3431
    %v3463 = vpack.c.bf16 %v3434, %v3433
    %v3464 = vpack.c.bf16 %v3436, %v3435
    %v3465 = vpack.c.bf16 %v3438, %v3437
    %v3466 = vpack.c.bf16 %v3440, %v3439
    %v3467 = vpack.c.bf16 %v3442, %v3441
    %v3468 = vpack.c.bf16 %v3444, %v3443
    %v3469 = vpack.c.bf16 %v3446, %v3445
    %v3470 = vpack.c.bf16 %v3448, %v3447
    %v3471 = vpack.c.bf16 %v3450, %v3449
    %v3472 = vpack.c.bf16 %v3452, %v3451
    %v3473 = vpack.c.bf16 %v3454, %v3453
    %v3474 = vpack.c.bf16 %v3456, %v3455
    %v3475 = vpack.c.bf16 %v3458, %v3457
    %v3476 = vpack.c.bf16 %v3460, %v3459
    %v3477 = vld [vmem:[%s18] sm:$0xf]
    %v3478 = vld [vmem:[%s18 + $0x4] sm:$0xf]
    %v3479 = vld [vmem:[%s18 + $0x8] sm:$0xf]
    %v3480 = vld [vmem:[%s18 + $0xc] sm:$0xf]
    %v3481 = vld [vmem:[%s18 + $0x10] sm:$0xf]
    %v3482 = vld [vmem:[%s18 + $0x14] sm:$0xf]
    %v3483 = vld [vmem:[%s18 + $0x18] sm:$0xf]
    %v3484 = vld [vmem:[%s18 + $0x1c] sm:$0xf]
    %v3485 = vld [vmem:[%s18 + $0x20] sm:$0xf]
    %v3486 = vld [vmem:[%s18 + $0x24] sm:$0xf]
    %v3487 = vld [vmem:[%s18 + $0x28] sm:$0xf]
    %v3488 = vld [vmem:[%s18 + $0x2c] sm:$0xf]
    %v3489 = vld [vmem:[%s18 + $0x30] sm:$0xf]
    %v3490 = vld [vmem:[%s18 + $0x34] sm:$0xf]
    %v3491 = vld [vmem:[%s18 + $0x38] sm:$0xf]
    %v3492 = vld [vmem:[%s18 + $0x3c] sm:$0xf]
    %v3493 = vld [vmem:[%s19] sm:$0x1]
    %v3495 = vperm.slane %v3493, 0
    %v3513 = vunpack.c.l.b16 %v3477
    %v3514 = vunpack.c.l.b16 %v3478
    %v3515 = vunpack.c.l.b16 %v3479
    %v3516 = vunpack.c.l.b16 %v3480
    %v3517 = vunpack.c.l.b16 %v3481
    %v3518 = vunpack.c.l.b16 %v3482
    %v3519 = vunpack.c.l.b16 %v3483
    %v3520 = vunpack.c.l.b16 %v3484
    %v3521 = vunpack.c.l.b16 %v3485
    %v3522 = vunpack.c.l.b16 %v3486
    %v3523 = vunpack.c.l.b16 %v3487
    %v3524 = vunpack.c.l.b16 %v3488
    %v3525 = vunpack.c.l.b16 %v3489
    %v3526 = vunpack.c.l.b16 %v3490
    %v3527 = vunpack.c.l.b16 %v3491
    %v3528 = vunpack.c.l.b16 %v3492
    %v3529 = vpack.c.b16 %v3514, %v3513
    %v3530 = vpack.c.b16 %v3516, %v3515
    %v3531 = vpack.c.b16 %v3518, %v3517
    %v3532 = vpack.c.b16 %v3520, %v3519
    %v3533 = vpack.c.b16 %v3522, %v3521
    %v3534 = vpack.c.b16 %v3524, %v3523
    %v3535 = vpack.c.b16 %v3526, %v3525
    %v3536 = vpack.c.b16 %v3528, %v3527
    %3545 = vmatpush.bf16.msra.mxu0 %v3536
    %3546 = vmatpush.bf16.msra.mxu0 %v3535
    %3547 = vmatpush.bf16.msra.mxu0 %v3534
    %3548 = vmatpush.bf16.msra.mxu0 %v3533
    %3549 = vmatpush.bf16.msra.mxu0 %v3532
    %3550 = vmatpush.bf16.msra.mxu0 %v3531
    %3551 = vmatpush.bf16.msra.mxu0 %v3530
    %3552 = vmatpush.bf16.msra.mxu0 %v3529
    %3553 = vmatmul.bf16.gmra.mxu0 %v3461
    %v3554 = vpop.f32.mrf.mxu0
    %v3555 = vadd.f32 %v3495, %v3554
    %v3556 = vpop.f32.mrf.mxu0
    %v3557 = vadd.f32 %v3495, %v3556
    %3558 = vmatmul.bf16.gmra.mxu0 %v3462
    %v3559 = vpop.f32.mrf.mxu0
    %v3560 = vadd.f32 %v3495, %v3559
    %v3561 = vpop.f32.mrf.mxu0
    %v3562 = vadd.f32 %v3495, %v3561
    %3563 = vmatmul.bf16.gmra.mxu0 %v3463
    %v3564 = vpop.f32.mrf.mxu0
    %v3565 = vadd.f32 %v3495, %v3564
    %v3566 = vpop.f32.mrf.mxu0
    %v3567 = vadd.f32 %v3495, %v3566
    %3568 = vmatmul.bf16.gmra.mxu0 %v3464
    %v3569 = vpop.f32.mrf.mxu0
    %v3570 = vadd.f32 %v3495, %v3569
    %v3571 = vpop.f32.mrf.mxu0
    %v3572 = vadd.f32 %v3495, %v3571
    %3573 = vmatmul.bf16.gmra.mxu0 %v3465
    %v3574 = vpop.f32.mrf.mxu0
    %v3575 = vadd.f32 %v3495, %v3574
    %v3576 = vpop.f32.mrf.mxu0
    %v3577 = vadd.f32 %v3495, %v3576
    %3578 = vmatmul.bf16.gmra.mxu0 %v3466
    %v3579 = vpop.f32.mrf.mxu0
    %v3580 = vadd.f32 %v3495, %v3579
    %v3581 = vpop.f32.mrf.mxu0
    %v3582 = vadd.f32 %v3495, %v3581
    %3583 = vmatmul.bf16.gmra.mxu0 %v3467
    %v3584 = vpop.f32.mrf.mxu0
    %v3585 = vadd.f32 %v3495, %v3584
    %v3586 = vpop.f32.mrf.mxu0
    %v3587 = vadd.f32 %v3495, %v3586
    %3588 = vmatmul.bf16.gmra.mxu0 %v3468
    %v3589 = vpop.f32.mrf.mxu0
    %v3590 = vadd.f32 %v3495, %v3589
    %v3591 = vpop.f32.mrf.mxu0
    %v3592 = vadd.f32 %v3495, %v3591
    %3593 = vmatmul.bf16.gmra.mxu0 %v3469
    %v3594 = vpop.f32.mrf.mxu0
    %v3595 = vadd.f32 %v3495, %v3594
    %v3596 = vpop.f32.mrf.mxu0
    %v3597 = vadd.f32 %v3495, %v3596
    %3598 = vmatmul.bf16.gmra.mxu0 %v3470
    %v3599 = vpop.f32.mrf.mxu0
    %v3600 = vadd.f32 %v3495, %v3599
    %v3601 = vpop.f32.mrf.mxu0
    %v3602 = vadd.f32 %v3495, %v3601
    %3603 = vmatmul.bf16.gmra.mxu0 %v3471
    %v3604 = vpop.f32.mrf.mxu0
    %v3605 = vadd.f32 %v3495, %v3604
    %v3606 = vpop.f32.mrf.mxu0
    %v3607 = vadd.f32 %v3495, %v3606
    %3608 = vmatmul.bf16.gmra.mxu0 %v3472
    %v3609 = vpop.f32.mrf.mxu0
    %v3610 = vadd.f32 %v3495, %v3609
    %v3611 = vpop.f32.mrf.mxu0
    %v3612 = vadd.f32 %v3495, %v3611
    %3613 = vmatmul.bf16.gmra.mxu0 %v3473
    %v3614 = vpop.f32.mrf.mxu0
    %v3615 = vadd.f32 %v3495, %v3614
    %v3616 = vpop.f32.mrf.mxu0
    %v3617 = vadd.f32 %v3495, %v3616
    %3618 = vmatmul.bf16.gmra.mxu0 %v3474
    %v3619 = vpop.f32.mrf.mxu0
    %v3620 = vadd.f32 %v3495, %v3619
    %v3621 = vpop.f32.mrf.mxu0
    %v3622 = vadd.f32 %v3495, %v3621
    %3623 = vmatmul.bf16.gmra.mxu0 %v3475
    %v3624 = vpop.f32.mrf.mxu0
    %v3625 = vadd.f32 %v3495, %v3624
    %v3626 = vpop.f32.mrf.mxu0
    %v3627 = vadd.f32 %v3495, %v3626
    %3628 = vmatmul.bf16.gmra.mxu0 %v3476
    %v3629 = vpop.f32.mrf.mxu0
    %v3630 = vadd.f32 %v3495, %v3629
    %v3631 = vpop.f32.mrf.mxu0
    %v3632 = vadd.f32 %v3495, %v3631
    %3633 = vdwg.mxu0
    %v3634 = vmax.f32 %v3555, 0.0
    %v3635 = vmax.f32 %v3557, 0.0
    %v3636 = vmax.f32 %v3560, 0.0
    %v3637 = vmax.f32 %v3562, 0.0
    %v3638 = vmax.f32 %v3565, 0.0
    %v3639 = vmax.f32 %v3567, 0.0
    %v3640 = vmax.f32 %v3570, 0.0
    %v3641 = vmax.f32 %v3572, 0.0
    %v3642 = vmax.f32 %v3575, 0.0
    %v3643 = vmax.f32 %v3577, 0.0
    %v3644 = vmax.f32 %v3580, 0.0
    %v3645 = vmax.f32 %v3582, 0.0
    %v3646 = vmax.f32 %v3585, 0.0
    %v3647 = vmax.f32 %v3587, 0.0
    %v3648 = vmax.f32 %v3590, 0.0
    %v3649 = vmax.f32 %v3592, 0.0
    %v3650 = vmax.f32 %v3595, 0.0
    %v3651 = vmax.f32 %v3597, 0.0
    %v3652 = vmax.f32 %v3600, 0.0
    %v3653 = vmax.f32 %v3602, 0.0
    %v3654 = vmax.f32 %v3605, 0.0
    %v3655 = vmax.f32 %v3607, 0.0
    %v3656 = vmax.f32 %v3610, 0.0
    %v3657 = vmax.f32 %v3612, 0.0
    %v3658 = vmax.f32 %v3615, 0.0
    %v3659 = vmax.f32 %v3617, 0.0
    %v3660 = vmax.f32 %v3620, 0.0
    %v3661 = vmax.f32 %v3622, 0.0
    %v3662 = vmax.f32 %v3625, 0.0
    %v3663 = vmax.f32 %v3627, 0.0
    %v3664 = vmax.f32 %v3630, 0.0
    %v3665 = vmax.f32 %v3632, 0.0
    %v3666 = vpack.c.bf16 %v3635, %v3634
    %v3667 = vpack.c.bf16 %v3637, %v3636
    %v3668 = vpack.c.bf16 %v3639, %v3638
    %v3669 = vpack.c.bf16 %v3641, %v3640
    %v3670 = vpack.c.bf16 %v3643, %v3642
    %v3671 = vpack.c.bf16 %v3645, %v3644
    %v3672 = vpack.c.bf16 %v3647, %v3646
    %v3673 = vpack.c.bf16 %v3649, %v3648
    %v3674 = vpack.c.bf16 %v3651, %v3650
    %v3675 = vpack.c.bf16 %v3653, %v3652
    %v3676 = vpack.c.bf16 %v3655, %v3654
    %v3677 = vpack.c.bf16 %v3657, %v3656
    %v3678 = vpack.c.bf16 %v3659, %v3658
    %v3679 = vpack.c.bf16 %v3661, %v3660
    %v3680 = vpack.c.bf16 %v3663, %v3662
    %v3681 = vpack.c.bf16 %v3665, %v3664
    %v3682 = vld [vmem:[%s20] sm:$0xf]
    %v3683 = vld [vmem:[%s20 + $0x4] sm:$0xf]
    %v3684 = vld [vmem:[%s20 + $0x8] sm:$0xf]
    %v3685 = vld [vmem:[%s20 + $0xc] sm:$0xf]
    %v3686 = vld [vmem:[%s20 + $0x10] sm:$0xf]
    %v3687 = vld [vmem:[%s20 + $0x14] sm:$0xf]
    %v3688 = vld [vmem:[%s20 + $0x18] sm:$0xf]
    %v3689 = vld [vmem:[%s20 + $0x1c] sm:$0xf]
    %v3690 = vld [vmem:[%s20 + $0x20] sm:$0xf]
    %v3691 = vld [vmem:[%s20 + $0x24] sm:$0xf]
    %v3692 = vld [vmem:[%s20 + $0x28] sm:$0xf]
    %v3693 = vld [vmem:[%s20 + $0x2c] sm:$0xf]
    %v3694 = vld [vmem:[%s20 + $0x30] sm:$0xf]
    %v3695 = vld [vmem:[%s20 + $0x34] sm:$0xf]
    %v3696 = vld [vmem:[%s20 + $0x38] sm:$0xf]
    %v3697 = vld [vmem:[%s20 + $0x3c] sm:$0xf]
    %v3698 = vld [vmem:[%s21] sm:$0x1]
    %v3700 = vperm.slane %v3698, 0
    %v3718 = vunpack.c.l.b16 %v3682
    %v3719 = vunpack.c.l.b16 %v3683
    %v3720 = vunpack.c.l.b16 %v3684
    %v3721 = vunpack.c.l.b16 %v3685
    %v3722 = vunpack.c.l.b16 %v3686
    %v3723 = vunpack.c.l.b16 %v3687
    %v3724 = vunpack.c.l.b16 %v3688
    %v3725 = vunpack.c.l.b16 %v3689
    %v3726 = vunpack.c.l.b16 %v3690
    %v3727 = vunpack.c.l.b16 %v3691
    %v3728 = vunpack.c.l.b16 %v3692
    %v3729 = vunpack.c.l.b16 %v3693
    %v3730 = vunpack.c.l.b16 %v3694
    %v3731 = vunpack.c.l.b16 %v3695
    %v3732 = vunpack.c.l.b16 %v3696
    %v3733 = vunpack.c.l.b16 %v3697
    %v3734 = vpack.c.b16 %v3719, %v3718
    %v3735 = vpack.c.b16 %v3721, %v3720
    %v3736 = vpack.c.b16 %v3723, %v3722
    %v3737 = vpack.c.b16 %v3725, %v3724
    %v3738 = vpack.c.b16 %v3727, %v3726
    %v3739 = vpack.c.b16 %v3729, %v3728
    %v3740 = vpack.c.b16 %v3731, %v3730
    %v3741 = vpack.c.b16 %v3733, %v3732
    %3750 = vmatpush.bf16.msra.mxu0 %v3741
    %3751 = vmatpush.bf16.msra.mxu0 %v3740
    %3752 = vmatpush.bf16.msra.mxu0 %v3739
    %3753 = vmatpush.bf16.msra.mxu0 %v3738
    %3754 = vmatpush.bf16.msra.mxu0 %v3737
    %3755 = vmatpush.bf16.msra.mxu0 %v3736
    %3756 = vmatpush.bf16.msra.mxu0 %v3735
    %3757 = vmatpush.bf16.msra.mxu0 %v3734
    %3758 = vmatmul.bf16.gmra.mxu0 %v3666
    %v3759 = vpop.f32.mrf.mxu0
    %v3760 = vadd.f32 %v3700, %v3759
    %v3761 = vpop.f32.mrf.mxu0
    %v3762 = vadd.f32 %v3700, %v3761
    %3763 = vmatmul.bf16.gmra.mxu0 %v3667
    %v3764 = vpop.f32.mrf.mxu0
    %v3765 = vadd.f32 %v3700, %v3764
    %v3766 = vpop.f32.mrf.mxu0
    %v3767 = vadd.f32 %v3700, %v3766
    %3768 = vmatmul.bf16.gmra.mxu0 %v3668
    %v3769 = vpop.f32.mrf.mxu0
    %v3770 = vadd.f32 %v3700, %v3769
    %v3771 = vpop.f32.mrf.mxu0
    %v3772 = vadd.f32 %v3700, %v3771
    %3773 = vmatmul.bf16.gmra.mxu0 %v3669
    %v3774 = vpop.f32.mrf.mxu0
    %v3775 = vadd.f32 %v3700, %v3774
    %v3776 = vpop.f32.mrf.mxu0
    %v3777 = vadd.f32 %v3700, %v3776
    %3778 = vmatmul.bf16.gmra.mxu0 %v3670
    %v3779 = vpop.f32.mrf.mxu0
    %v3780 = vadd.f32 %v3700, %v3779
    %v3781 = vpop.f32.mrf.mxu0
    %v3782 = vadd.f32 %v3700, %v3781
    %3783 = vmatmul.bf16.gmra.mxu0 %v3671
    %v3784 = vpop.f32.mrf.mxu0
    %v3785 = vadd.f32 %v3700, %v3784
    %v3786 = vpop.f32.mrf.mxu0
    %v3787 = vadd.f32 %v3700, %v3786
    %3788 = vmatmul.bf16.gmra.mxu0 %v3672
    %v3789 = vpop.f32.mrf.mxu0
    %v3790 = vadd.f32 %v3700, %v3789
    %v3791 = vpop.f32.mrf.mxu0
    %v3792 = vadd.f32 %v3700, %v3791
    %3793 = vmatmul.bf16.gmra.mxu0 %v3673
    %v3794 = vpop.f32.mrf.mxu0
    %v3795 = vadd.f32 %v3700, %v3794
    %v3796 = vpop.f32.mrf.mxu0
    %v3797 = vadd.f32 %v3700, %v3796
    %3798 = vmatmul.bf16.gmra.mxu0 %v3674
    %v3799 = vpop.f32.mrf.mxu0
    %v3800 = vadd.f32 %v3700, %v3799
    %v3801 = vpop.f32.mrf.mxu0
    %v3802 = vadd.f32 %v3700, %v3801
    %3803 = vmatmul.bf16.gmra.mxu0 %v3675
    %v3804 = vpop.f32.mrf.mxu0
    %v3805 = vadd.f32 %v3700, %v3804
    %v3806 = vpop.f32.mrf.mxu0
    %v3807 = vadd.f32 %v3700, %v3806
    %3808 = vmatmul.bf16.gmra.mxu0 %v3676
    %v3809 = vpop.f32.mrf.mxu0
    %v3810 = vadd.f32 %v3700, %v3809
    %v3811 = vpop.f32.mrf.mxu0
    %v3812 = vadd.f32 %v3700, %v3811
    %3813 = vmatmul.bf16.gmra.mxu0 %v3677
    %v3814 = vpop.f32.mrf.mxu0
    %v3815 = vadd.f32 %v3700, %v3814
    %v3816 = vpop.f32.mrf.mxu0
    %v3817 = vadd.f32 %v3700, %v3816
    %3818 = vmatmul.bf16.gmra.mxu0 %v3678
    %v3819 = vpop.f32.mrf.mxu0
    %v3820 = vadd.f32 %v3700, %v3819
    %v3821 = vpop.f32.mrf.mxu0
    %v3822 = vadd.f32 %v3700, %v3821
    %3823 = vmatmul.bf16.gmra.mxu0 %v3679
    %v3824 = vpop.f32.mrf.mxu0
    %v3825 = vadd.f32 %v3700, %v3824
    %v3826 = vpop.f32.mrf.mxu0
    %v3827 = vadd.f32 %v3700, %v3826
    %3828 = vmatmul.bf16.gmra.mxu0 %v3680
    %v3829 = vpop.f32.mrf.mxu0
    %v3830 = vadd.f32 %v3700, %v3829
    %v3831 = vpop.f32.mrf.mxu0
    %v3832 = vadd.f32 %v3700, %v3831
    %3833 = vmatmul.bf16.gmra.mxu0 %v3681
    %v3834 = vpop.f32.mrf.mxu0
    %v3835 = vadd.f32 %v3700, %v3834
    %v3836 = vpop.f32.mrf.mxu0
    %v3837 = vadd.f32 %v3700, %v3836
    %3838 = vdwg.mxu0
    %v3839 = vmax.f32 %v3760, 0.0
    %v3840 = vmax.f32 %v3762, 0.0
    %v3841 = vmax.f32 %v3765, 0.0
    %v3842 = vmax.f32 %v3767, 0.0
    %v3843 = vmax.f32 %v3770, 0.0
    %v3844 = vmax.f32 %v3772, 0.0
    %v3845 = vmax.f32 %v3775, 0.0
    %v3846 = vmax.f32 %v3777, 0.0
    %v3847 = vmax.f32 %v3780, 0.0
    %v3848 = vmax.f32 %v3782, 0.0
    %v3849 = vmax.f32 %v3785, 0.0
    %v3850 = vmax.f32 %v3787, 0.0
    %v3851 = vmax.f32 %v3790, 0.0
    %v3852 = vmax.f32 %v3792, 0.0
    %v3853 = vmax.f32 %v3795, 0.0
    %v3854 = vmax.f32 %v3797, 0.0
    %v3855 = vmax.f32 %v3800, 0.0
    %v3856 = vmax.f32 %v3802, 0.0
    %v3857 = vmax.f32 %v3805, 0.0
    %v3858 = vmax.f32 %v3807, 0.0
    %v3859 = vmax.f32 %v3810, 0.0
    %v3860 = vmax.f32 %v3812, 0.0
    %v3861 = vmax.f32 %v3815, 0.0
    %v3862 = vmax.f32 %v3817, 0.0
    %v3863 = vmax.f32 %v3820, 0.0
    %v3864 = vmax.f32 %v3822, 0.0
    %v3865 = vmax.f32 %v3825, 0.0
    %v3866 = vmax.f32 %v3827, 0.0
    %v3867 = vmax.f32 %v3830, 0.0
    %v3868 = vmax.f32 %v3832, 0.0
    %v3869 = vmax.f32 %v3835, 0.0
    %v3870 = vmax.f32 %v3837, 0.0
    %v3871 = vpack.c.bf16 %v3840, %v3839
    %v3872 = vpack.c.bf16 %v3842, %v3841
    %v3873 = vpack.c.bf16 %v3844, %v3843
    %v3874 = vpack.c.bf16 %v3846, %v3845
    %v3875 = vpack.c.bf16 %v3848, %v3847
    %v3876 = vpack.c.bf16 %v3850, %v3849
    %v3877 = vpack.c.bf16 %v3852, %v3851
    %v3878 = vpack.c.bf16 %v3854, %v3853
    %v3879 = vpack.c.bf16 %v3856, %v3855
    %v3880 = vpack.c.bf16 %v3858, %v3857
    %v3881 = vpack.c.bf16 %v3860, %v3859
    %v3882 = vpack.c.bf16 %v3862, %v3861
    %v3883 = vpack.c.bf16 %v3864, %v3863
    %v3884 = vpack.c.bf16 %v3866, %v3865
    %v3885 = vpack.c.bf16 %v3868, %v3867
    %v3886 = vpack.c.bf16 %v3870, %v3869
    %v3887 = vld [vmem:[%s22] sm:$0xf]
    %v3888 = vld [vmem:[%s22 + $0x4] sm:$0xf]
    %v3889 = vld [vmem:[%s22 + $0x8] sm:$0xf]
    %v3890 = vld [vmem:[%s22 + $0xc] sm:$0xf]
    %v3891 = vld [vmem:[%s22 + $0x10] sm:$0xf]
    %v3892 = vld [vmem:[%s22 + $0x14] sm:$0xf]
    %v3893 = vld [vmem:[%s22 + $0x18] sm:$0xf]
    %v3894 = vld [vmem:[%s22 + $0x1c] sm:$0xf]
    %v3895 = vld [vmem:[%s22 + $0x20] sm:$0xf]
    %v3896 = vld [vmem:[%s22 + $0x24] sm:$0xf]
    %v3897 = vld [vmem:[%s22 + $0x28] sm:$0xf]
    %v3898 = vld [vmem:[%s22 + $0x2c] sm:$0xf]
    %v3899 = vld [vmem:[%s22 + $0x30] sm:$0xf]
    %v3900 = vld [vmem:[%s22 + $0x34] sm:$0xf]
    %v3901 = vld [vmem:[%s22 + $0x38] sm:$0xf]
    %v3902 = vld [vmem:[%s22 + $0x3c] sm:$0xf]
    %v3903 = vld [vmem:[%s23] sm:$0x1]
    %v3905 = vperm.slane %v3903, 0
    %v3923 = vunpack.c.l.b16 %v3887
    %v3924 = vunpack.c.l.b16 %v3888
    %v3925 = vunpack.c.l.b16 %v3889
    %v3926 = vunpack.c.l.b16 %v3890
    %v3927 = vunpack.c.l.b16 %v3891
    %v3928 = vunpack.c.l.b16 %v3892
    %v3929 = vunpack.c.l.b16 %v3893
    %v3930 = vunpack.c.l.b16 %v3894
    %v3931 = vunpack.c.l.b16 %v3895
    %v3932 = vunpack.c.l.b16 %v3896
    %v3933 = vunpack.c.l.b16 %v3897
    %v3934 = vunpack.c.l.b16 %v3898
    %v3935 = vunpack.c.l.b16 %v3899
    %v3936 = vunpack.c.l.b16 %v3900
    %v3937 = vunpack.c.l.b16 %v3901
    %v3938 = vunpack.c.l.b16 %v3902
    %v3939 = vpack.c.b16 %v3924, %v3923
    %v3940 = vpack.c.b16 %v3926, %v3925
    %v3941 = vpack.c.b16 %v3928, %v3927
    %v3942 = vpack.c.b16 %v3930, %v3929
    %v3943 = vpack.c.b16 %v3932, %v3931
    %v3944 = vpack.c.b16 %v3934, %v3933
    %v3945 = vpack.c.b16 %v3936, %v3935
    %v3946 = vpack.c.b16 %v3938, %v3937
    %3955 = vmatpush.bf16.msra.mxu0 %v3946
    %3956 = vmatpush.bf16.msra.mxu0 %v3945
    %3957 = vmatpush.bf16.msra.mxu0 %v3944
    %3958 = vmatpush.bf16.msra.mxu0 %v3943
    %3959 = vmatpush.bf16.msra.mxu0 %v3942
    %3960 = vmatpush.bf16.msra.mxu0 %v3941
    %3961 = vmatpush.bf16.msra.mxu0 %v3940
    %3962 = vmatpush.bf16.msra.mxu0 %v3939
    %3963 = vmatmul.bf16.gmra.mxu0 %v3871
    %v3964 = vpop.f32.mrf.mxu0
    %v3965 = vadd.f32 %v3905, %v3964
    %v3966 = vpop.f32.mrf.mxu0
    %v3967 = vadd.f32 %v3905, %v3966
    %3968 = vmatmul.bf16.gmra.mxu0 %v3872
    %v3969 = vpop.f32.mrf.mxu0
    %v3970 = vadd.f32 %v3905, %v3969
    %v3971 = vpop.f32.mrf.mxu0
    %v3972 = vadd.f32 %v3905, %v3971
    %3973 = vmatmul.bf16.gmra.mxu0 %v3873
    %v3974 = vpop.f32.mrf.mxu0
    %v3975 = vadd.f32 %v3905, %v3974
    %v3976 = vpop.f32.mrf.mxu0
    %v3977 = vadd.f32 %v3905, %v3976
    %3978 = vmatmul.bf16.gmra.mxu0 %v3874
    %v3979 = vpop.f32.mrf.mxu0
    %v3980 = vadd.f32 %v3905, %v3979
    %v3981 = vpop.f32.mrf.mxu0
    %v3982 = vadd.f32 %v3905, %v3981
    %3983 = vmatmul.bf16.gmra.mxu0 %v3875
    %v3984 = vpop.f32.mrf.mxu0
    %v3985 = vadd.f32 %v3905, %v3984
    %v3986 = vpop.f32.mrf.mxu0
    %v3987 = vadd.f32 %v3905, %v3986
    %3988 = vmatmul.bf16.gmra.mxu0 %v3876
    %v3989 = vpop.f32.mrf.mxu0
    %v3990 = vadd.f32 %v3905, %v3989
    %v3991 = vpop.f32.mrf.mxu0
    %v3992 = vadd.f32 %v3905, %v3991
    %3993 = vmatmul.bf16.gmra.mxu0 %v3877
    %v3994 = vpop.f32.mrf.mxu0
    %v3995 = vadd.f32 %v3905, %v3994
    %v3996 = vpop.f32.mrf.mxu0
    %v3997 = vadd.f32 %v3905, %v3996
    %3998 = vmatmul.bf16.gmra.mxu0 %v3878
    %v3999 = vpop.f32.mrf.mxu0
    %v4000 = vadd.f32 %v3905, %v3999
    %v4001 = vpop.f32.mrf.mxu0
    %v4002 = vadd.f32 %v3905, %v4001
    %4003 = vmatmul.bf16.gmra.mxu0 %v3879
    %v4004 = vpop.f32.mrf.mxu0
    %v4005 = vadd.f32 %v3905, %v4004
    %v4006 = vpop.f32.mrf.mxu0
    %v4007 = vadd.f32 %v3905, %v4006
    %4008 = vmatmul.bf16.gmra.mxu0 %v3880
    %v4009 = vpop.f32.mrf.mxu0
    %v4010 = vadd.f32 %v3905, %v4009
    %v4011 = vpop.f32.mrf.mxu0
    %v4012 = vadd.f32 %v3905, %v4011
    %4013 = vmatmul.bf16.gmra.mxu0 %v3881
    %v4014 = vpop.f32.mrf.mxu0
    %v4015 = vadd.f32 %v3905, %v4014
    %v4016 = vpop.f32.mrf.mxu0
    %v4017 = vadd.f32 %v3905, %v4016
    %4018 = vmatmul.bf16.gmra.mxu0 %v3882
    %v4019 = vpop.f32.mrf.mxu0
    %v4020 = vadd.f32 %v3905, %v4019
    %v4021 = vpop.f32.mrf.mxu0
    %v4022 = vadd.f32 %v3905, %v4021
    %4023 = vmatmul.bf16.gmra.mxu0 %v3883
    %v4024 = vpop.f32.mrf.mxu0
    %v4025 = vadd.f32 %v3905, %v4024
    %v4026 = vpop.f32.mrf.mxu0
    %v4027 = vadd.f32 %v3905, %v4026
    %4028 = vmatmul.bf16.gmra.mxu0 %v3884
    %v4029 = vpop.f32.mrf.mxu0
    %v4030 = vadd.f32 %v3905, %v4029
    %v4031 = vpop.f32.mrf.mxu0
    %v4032 = vadd.f32 %v3905, %v4031
    %4033 = vmatmul.bf16.gmra.mxu0 %v3885
    %v4034 = vpop.f32.mrf.mxu0
    %v4035 = vadd.f32 %v3905, %v4034
    %v4036 = vpop.f32.mrf.mxu0
    %v4037 = vadd.f32 %v3905, %v4036
    %4038 = vmatmul.bf16.gmra.mxu0 %v3886
    %v4039 = vpop.f32.mrf.mxu0
    %v4040 = vadd.f32 %v3905, %v4039
    %v4041 = vpop.f32.mrf.mxu0
    %v4042 = vadd.f32 %v3905, %v4041
    %4043 = vdwg.mxu0
    %v4044 = vmax.f32 %v3965, 0.0
    %v4045 = vmax.f32 %v3967, 0.0
    %v4046 = vmax.f32 %v3970, 0.0
    %v4047 = vmax.f32 %v3972, 0.0
    %v4048 = vmax.f32 %v3975, 0.0
    %v4049 = vmax.f32 %v3977, 0.0
    %v4050 = vmax.f32 %v3980, 0.0
    %v4051 = vmax.f32 %v3982, 0.0
    %v4052 = vmax.f32 %v3985, 0.0
    %v4053 = vmax.f32 %v3987, 0.0
    %v4054 = vmax.f32 %v3990, 0.0
    %v4055 = vmax.f32 %v3992, 0.0
    %v4056 = vmax.f32 %v3995, 0.0
    %v4057 = vmax.f32 %v3997, 0.0
    %v4058 = vmax.f32 %v4000, 0.0
    %v4059 = vmax.f32 %v4002, 0.0
    %v4060 = vmax.f32 %v4005, 0.0
    %v4061 = vmax.f32 %v4007, 0.0
    %v4062 = vmax.f32 %v4010, 0.0
    %v4063 = vmax.f32 %v4012, 0.0
    %v4064 = vmax.f32 %v4015, 0.0
    %v4065 = vmax.f32 %v4017, 0.0
    %v4066 = vmax.f32 %v4020, 0.0
    %v4067 = vmax.f32 %v4022, 0.0
    %v4068 = vmax.f32 %v4025, 0.0
    %v4069 = vmax.f32 %v4027, 0.0
    %v4070 = vmax.f32 %v4030, 0.0
    %v4071 = vmax.f32 %v4032, 0.0
    %v4072 = vmax.f32 %v4035, 0.0
    %v4073 = vmax.f32 %v4037, 0.0
    %v4074 = vmax.f32 %v4040, 0.0
    %v4075 = vmax.f32 %v4042, 0.0
    %v4076 = vpack.c.bf16 %v4045, %v4044
    %v4077 = vpack.c.bf16 %v4047, %v4046
    %v4078 = vpack.c.bf16 %v4049, %v4048
    %v4079 = vpack.c.bf16 %v4051, %v4050
    %v4080 = vpack.c.bf16 %v4053, %v4052
    %v4081 = vpack.c.bf16 %v4055, %v4054
    %v4082 = vpack.c.bf16 %v4057, %v4056
    %v4083 = vpack.c.bf16 %v4059, %v4058
    %v4084 = vpack.c.bf16 %v4061, %v4060
    %v4085 = vpack.c.bf16 %v4063, %v4062
    %v4086 = vpack.c.bf16 %v4065, %v4064
    %v4087 = vpack.c.bf16 %v4067, %v4066
    %v4088 = vpack.c.bf16 %v4069, %v4068
    %v4089 = vpack.c.bf16 %v4071, %v4070
    %v4090 = vpack.c.bf16 %v4073, %v4072
    %v4091 = vpack.c.bf16 %v4075, %v4074
    %v4092 = vld [vmem:[%s24] sm:$0xf]
    %v4093 = vld [vmem:[%s24 + $0x4] sm:$0xf]
    %v4094 = vld [vmem:[%s24 + $0x8] sm:$0xf]
    %v4095 = vld [vmem:[%s24 + $0xc] sm:$0xf]
    %v4096 = vld [vmem:[%s24 + $0x10] sm:$0xf]
    %v4097 = vld [vmem:[%s24 + $0x14] sm:$0xf]
    %v4098 = vld [vmem:[%s24 + $0x18] sm:$0xf]
    %v4099 = vld [vmem:[%s24 + $0x1c] sm:$0xf]
    %v4100 = vld [vmem:[%s24 + $0x20] sm:$0xf]
    %v4101 = vld [vmem:[%s24 + $0x24] sm:$0xf]
    %v4102 = vld [vmem:[%s24 + $0x28] sm:$0xf]
    %v4103 = vld [vmem:[%s24 + $0x2c] sm:$0xf]
    %v4104 = vld [vmem:[%s24 + $0x30] sm:$0xf]
    %v4105 = vld [vmem:[%s24 + $0x34] sm:$0xf]
    %v4106 = vld [vmem:[%s24 + $0x38] sm:$0xf]
    %v4107 = vld [vmem:[%s24 + $0x3c] sm:$0xf]
    %v4108 = vld [vmem:[%s25] sm:$0x1]
    %v4110 = vperm.slane %v4108, 0
    %v4128 = vunpack.c.l.b16 %v4092
    %v4129 = vunpack.c.l.b16 %v4093
    %v4130 = vunpack.c.l.b16 %v4094
    %v4131 = vunpack.c.l.b16 %v4095
    %v4132 = vunpack.c.l.b16 %v4096
    %v4133 = vunpack.c.l.b16 %v4097
    %v4134 = vunpack.c.l.b16 %v4098
    %v4135 = vunpack.c.l.b16 %v4099
    %v4136 = vunpack.c.l.b16 %v4100
    %v4137 = vunpack.c.l.b16 %v4101
    %v4138 = vunpack.c.l.b16 %v4102
    %v4139 = vunpack.c.l.b16 %v4103
    %v4140 = vunpack.c.l.b16 %v4104
    %v4141 = vunpack.c.l.b16 %v4105
    %v4142 = vunpack.c.l.b16 %v4106
    %v4143 = vunpack.c.l.b16 %v4107
    %v4144 = vpack.c.b16 %v4129, %v4128
    %v4145 = vpack.c.b16 %v4131, %v4130
    %v4146 = vpack.c.b16 %v4133, %v4132
    %v4147 = vpack.c.b16 %v4135, %v4134
    %v4148 = vpack.c.b16 %v4137, %v4136
    %v4149 = vpack.c.b16 %v4139, %v4138
    %v4150 = vpack.c.b16 %v4141, %v4140
    %v4151 = vpack.c.b16 %v4143, %v4142
    %4160 = vmatpush.bf16.msra.mxu0 %v4151
    %4161 = vmatpush.bf16.msra.mxu0 %v4150
    %4162 = vmatpush.bf16.msra.mxu0 %v4149
    %4163 = vmatpush.bf16.msra.mxu0 %v4148
    %4164 = vmatpush.bf16.msra.mxu0 %v4147
    %4165 = vmatpush.bf16.msra.mxu0 %v4146
    %4166 = vmatpush.bf16.msra.mxu0 %v4145
    %4167 = vmatpush.bf16.msra.mxu0 %v4144
    %4168 = vmatmul.bf16.gmra.mxu0 %v4076
    %v4169 = vpop.f32.mrf.mxu0
    %v4170 = vadd.f32 %v4110, %v4169
    %v4171 = vpop.f32.mrf.mxu0
    %v4172 = vadd.f32 %v4110, %v4171
    %4173 = vmatmul.bf16.gmra.mxu0 %v4077
    %v4174 = vpop.f32.mrf.mxu0
    %v4175 = vadd.f32 %v4110, %v4174
    %v4176 = vpop.f32.mrf.mxu0
    %v4177 = vadd.f32 %v4110, %v4176
    %4178 = vmatmul.bf16.gmra.mxu0 %v4078
    %v4179 = vpop.f32.mrf.mxu0
    %v4180 = vadd.f32 %v4110, %v4179
    %v4181 = vpop.f32.mrf.mxu0
    %v4182 = vadd.f32 %v4110, %v4181
    %4183 = vmatmul.bf16.gmra.mxu0 %v4079
    %v4184 = vpop.f32.mrf.mxu0
    %v4185 = vadd.f32 %v4110, %v4184
    %v4186 = vpop.f32.mrf.mxu0
    %v4187 = vadd.f32 %v4110, %v4186
    %4188 = vmatmul.bf16.gmra.mxu0 %v4080
    %v4189 = vpop.f32.mrf.mxu0
    %v4190 = vadd.f32 %v4110, %v4189
    %v4191 = vpop.f32.mrf.mxu0
    %v4192 = vadd.f32 %v4110, %v4191
    %4193 = vmatmul.bf16.gmra.mxu0 %v4081
    %v4194 = vpop.f32.mrf.mxu0
    %v4195 = vadd.f32 %v4110, %v4194
    %v4196 = vpop.f32.mrf.mxu0
    %v4197 = vadd.f32 %v4110, %v4196
    %4198 = vmatmul.bf16.gmra.mxu0 %v4082
    %v4199 = vpop.f32.mrf.mxu0
    %v4200 = vadd.f32 %v4110, %v4199
    %v4201 = vpop.f32.mrf.mxu0
    %v4202 = vadd.f32 %v4110, %v4201
    %4203 = vmatmul.bf16.gmra.mxu0 %v4083
    %v4204 = vpop.f32.mrf.mxu0
    %v4205 = vadd.f32 %v4110, %v4204
    %v4206 = vpop.f32.mrf.mxu0
    %v4207 = vadd.f32 %v4110, %v4206
    %4208 = vmatmul.bf16.gmra.mxu0 %v4084
    %v4209 = vpop.f32.mrf.mxu0
    %v4210 = vadd.f32 %v4110, %v4209
    %v4211 = vpop.f32.mrf.mxu0
    %v4212 = vadd.f32 %v4110, %v4211
    %4213 = vmatmul.bf16.gmra.mxu0 %v4085
    %v4214 = vpop.f32.mrf.mxu0
    %v4215 = vadd.f32 %v4110, %v4214
    %v4216 = vpop.f32.mrf.mxu0
    %v4217 = vadd.f32 %v4110, %v4216
    %4218 = vmatmul.bf16.gmra.mxu0 %v4086
    %v4219 = vpop.f32.mrf.mxu0
    %v4220 = vadd.f32 %v4110, %v4219
    %v4221 = vpop.f32.mrf.mxu0
    %v4222 = vadd.f32 %v4110, %v4221
    %4223 = vmatmul.bf16.gmra.mxu0 %v4087
    %v4224 = vpop.f32.mrf.mxu0
    %v4225 = vadd.f32 %v4110, %v4224
    %v4226 = vpop.f32.mrf.mxu0
    %v4227 = vadd.f32 %v4110, %v4226
    %4228 = vmatmul.bf16.gmra.mxu0 %v4088
    %v4229 = vpop.f32.mrf.mxu0
    %v4230 = vadd.f32 %v4110, %v4229
    %v4231 = vpop.f32.mrf.mxu0
    %v4232 = vadd.f32 %v4110, %v4231
    %4233 = vmatmul.bf16.gmra.mxu0 %v4089
    %v4234 = vpop.f32.mrf.mxu0
    %v4235 = vadd.f32 %v4110, %v4234
    %v4236 = vpop.f32.mrf.mxu0
    %v4237 = vadd.f32 %v4110, %v4236
    %4238 = vmatmul.bf16.gmra.mxu0 %v4090
    %v4239 = vpop.f32.mrf.mxu0
    %v4240 = vadd.f32 %v4110, %v4239
    %v4241 = vpop.f32.mrf.mxu0
    %v4242 = vadd.f32 %v4110, %v4241
    %4243 = vmatmul.bf16.gmra.mxu0 %v4091
    %v4244 = vpop.f32.mrf.mxu0
    %v4245 = vadd.f32 %v4110, %v4244
    %v4246 = vpop.f32.mrf.mxu0
    %v4247 = vadd.f32 %v4110, %v4246
    %4248 = vdwg.mxu0
    %v4249 = vld [vmem:[%s26] sm:$0x1]
    %v4251 = vperm.slane %v4249, 0
    %v4253 = vmul.f32 %v3429, %v4251
    %v4254 = vmul.f32 %v3430, %v4251
    %v4255 = vmul.f32 %v3431, %v4251
    %v4256 = vmul.f32 %v3432, %v4251
    %v4257 = vmul.f32 %v3433, %v4251
    %v4258 = vmul.f32 %v3434, %v4251
    %v4259 = vmul.f32 %v3435, %v4251
    %v4260 = vmul.f32 %v3436, %v4251
    %v4261 = vmul.f32 %v3437, %v4251
    %v4262 = vmul.f32 %v3438, %v4251
    %v4263 = vmul.f32 %v3439, %v4251
    %v4264 = vmul.f32 %v3440, %v4251
    %v4265 = vmul.f32 %v3441, %v4251
    %v4266 = vmul.f32 %v3442, %v4251
    %v4267 = vmul.f32 %v3443, %v4251
    %v4268 = vmul.f32 %v3444, %v4251
    %v4269 = vmul.f32 %v3445, %v4251
    %v4270 = vmul.f32 %v3446, %v4251
    %v4271 = vmul.f32 %v3447, %v4251
    %v4272 = vmul.f32 %v3448, %v4251
    %v4273 = vmul.f32 %v3449, %v4251
    %v4274 = vmul.f32 %v3450, %v4251
    %v4275 = vmul.f32 %v3451, %v4251
    %v4276 = vmul.f32 %v3452, %v4251
    %v4277 = vmul.f32 %v3453, %v4251
    %v4278 = vmul.f32 %v3454, %v4251
    %v4279 = vmul.f32 %v3455, %v4251
    %v4280 = vmul.f32 %v3456, %v4251
    %v4281 = vmul.f32 %v3457, %v4251
    %v4282 = vmul.f32 %v3458, %v4251
    %v4283 = vmul.f32 %v3459, %v4251
    %v4284 = vmul.f32 %v3460, %v4251
    %4285 = vadd.xlane.f32.xlu0 %v4253
    %v4286 = vpop.xlane.xlu0 %4285
    %4287 = vadd.xlane.f32.xlu0 %v4254
    %v4288 = vpop.xlane.xlu0 %4287
    %4289 = vadd.xlane.f32.xlu0 %v4255
    %v4290 = vpop.xlane.xlu0 %4289
    %4291 = vadd.xlane.f32.xlu0 %v4256
    %v4292 = vpop.xlane.xlu0 %4291
    %4293 = vadd.xlane.f32.xlu0 %v4257
    %v4294 = vpop.xlane.xlu0 %4293
    %4295 = vadd.xlane.f32.xlu0 %v4258
    %v4296 = vpop.xlane.xlu0 %4295
    %4297 = vadd.xlane.f32.xlu0 %v4259
    %v4298 = vpop.xlane.xlu0 %4297
    %4299 = vadd.xlane.f32.xlu0 %v4260
    %v4300 = vpop.xlane.xlu0 %4299
    %4301 = vadd.xlane.f32.xlu0 %v4261
    %v4302 = vpop.xlane.xlu0 %4301
    %4303 = vadd.xlane.f32.xlu0 %v4262
    %v4304 = vpop.xlane.xlu0 %4303
    %4305 = vadd.xlane.f32.xlu0 %v4263
    %v4306 = vpop.xlane.xlu0 %4305
    %4307 = vadd.xlane.f32.xlu0 %v4264
    %v4308 = vpop.xlane.xlu0 %4307
    %4309 = vadd.xlane.f32.xlu0 %v4265
    %v4310 = vpop.xlane.xlu0 %4309
    %4311 = vadd.xlane.f32.xlu0 %v4266
    %v4312 = vpop.xlane.xlu0 %4311
    %4313 = vadd.xlane.f32.xlu0 %v4267
    %v4314 = vpop.xlane.xlu0 %4313
    %4315 = vadd.xlane.f32.xlu0 %v4268
    %v4316 = vpop.xlane.xlu0 %4315
    %4317 = vadd.xlane.f32.xlu0 %v4269
    %v4318 = vpop.xlane.xlu0 %4317
    %4319 = vadd.xlane.f32.xlu0 %v4270
    %v4320 = vpop.xlane.xlu0 %4319
    %4321 = vadd.xlane.f32.xlu0 %v4271
    %v4322 = vpop.xlane.xlu0 %4321
    %4323 = vadd.xlane.f32.xlu0 %v4272
    %v4324 = vpop.xlane.xlu0 %4323
    %4325 = vadd.xlane.f32.xlu0 %v4273
    %v4326 = vpop.xlane.xlu0 %4325
    %4327 = vadd.xlane.f32.xlu0 %v4274
    %v4328 = vpop.xlane.xlu0 %4327
    %4329 = vadd.xlane.f32.xlu0 %v4275
    %v4330 = vpop.xlane.xlu0 %4329
    %4331 = vadd.xlane.f32.xlu0 %v4276
    %v4332 = vpop.xlane.xlu0 %4331
    %4333 = vadd.xlane.f32.xlu0 %v4277
    %v4334 = vpop.xlane.xlu0 %4333
    %4335 = vadd.xlane.f32.xlu0 %v4278
    %v4336 = vpop.xlane.xlu0 %4335
    %4337 = vadd.xlane.f32.xlu0 %v4279
    %v4338 = vpop.xlane.xlu0 %4337
    %4339 = vadd.xlane.f32.xlu0 %v4280
    %v4340 = vpop.xlane.xlu0 %4339
    %4341 = vadd.xlane.f32.xlu0 %v4281
    %v4342 = vpop.xlane.xlu0 %4341
    %4343 = vadd.xlane.f32.xlu0 %v4282
    %v4344 = vpop.xlane.xlu0 %4343
    %4345 = vadd.xlane.f32.xlu0 %v4283
    %v4346 = vpop.xlane.xlu0 %4345
    %4347 = vadd.xlane.f32.xlu0 %v4284
    %v4348 = vpop.xlane.xlu0 %4347
    %v4349 = vld [vmem:[#allocation2] sm:$0x1]
    %v4351 = vperm.slane %v4349, 0
    %v4353 = vadd.f32 %v4286, %v4351
    %v4354 = vadd.f32 %v4288, %v4351
    %v4355 = vadd.f32 %v4290, %v4351
    %v4356 = vadd.f32 %v4292, %v4351
    %v4357 = vadd.f32 %v4294, %v4351
    %v4358 = vadd.f32 %v4296, %v4351
    %v4359 = vadd.f32 %v4298, %v4351
    %v4360 = vadd.f32 %v4300, %v4351
    %v4361 = vadd.f32 %v4302, %v4351
    %v4362 = vadd.f32 %v4304, %v4351
    %v4363 = vadd.f32 %v4306, %v4351
    %v4364 = vadd.f32 %v4308, %v4351
    %v4365 = vadd.f32 %v4310, %v4351
    %v4366 = vadd.f32 %v4312, %v4351
    %v4367 = vadd.f32 %v4314, %v4351
    %v4368 = vadd.f32 %v4316, %v4351
    %v4369 = vadd.f32 %v4318, %v4351
    %v4370 = vadd.f32 %v4320, %v4351
    %v4371 = vadd.f32 %v4322, %v4351
    %v4372 = vadd.f32 %v4324, %v4351
    %v4373 = vadd.f32 %v4326, %v4351
    %v4374 = vadd.f32 %v4328, %v4351
    %v4375 = vadd.f32 %v4330, %v4351
    %v4376 = vadd.f32 %v4332, %v4351
    %v4377 = vadd.f32 %v4334, %v4351
    %v4378 = vadd.f32 %v4336, %v4351
    %v4379 = vadd.f32 %v4338, %v4351
    %v4380 = vadd.f32 %v4340, %v4351
    %v4381 = vadd.f32 %v4342, %v4351
    %v4382 = vadd.f32 %v4344, %v4351
    %v4383 = vadd.f32 %v4346, %v4351
    %v4384 = vadd.f32 %v4348, %v4351
    %v4385 = vxor.u32 %v4353, 2147483648
    %v4386 = vxor.u32 %v4354, 2147483648
    %v4387 = vxor.u32 %v4355, 2147483648
    %v4388 = vxor.u32 %v4356, 2147483648
    %v4389 = vxor.u32 %v4357, 2147483648
    %v4390 = vxor.u32 %v4358, 2147483648
    %v4391 = vxor.u32 %v4359, 2147483648
    %v4392 = vxor.u32 %v4360, 2147483648
    %v4393 = vxor.u32 %v4361, 2147483648
    %v4394 = vxor.u32 %v4362, 2147483648
    %v4395 = vxor.u32 %v4363, 2147483648
    %v4396 = vxor.u32 %v4364, 2147483648
    %v4397 = vxor.u32 %v4365, 2147483648
    %v4398 = vxor.u32 %v4366, 2147483648
    %v4399 = vxor.u32 %v4367, 2147483648
    %v4400 = vxor.u32 %v4368, 2147483648
    %v4401 = vxor.u32 %v4369, 2147483648
    %v4402 = vxor.u32 %v4370, 2147483648
    %v4403 = vxor.u32 %v4371, 2147483648
    %v4404 = vxor.u32 %v4372, 2147483648
    %v4405 = vxor.u32 %v4373, 2147483648
    %v4406 = vxor.u32 %v4374, 2147483648
    %v4407 = vxor.u32 %v4375, 2147483648
    %v4408 = vxor.u32 %v4376, 2147483648
    %v4409 = vxor.u32 %v4377, 2147483648
    %v4410 = vxor.u32 %v4378, 2147483648
    %v4411 = vxor.u32 %v4379, 2147483648
    %v4412 = vxor.u32 %v4380, 2147483648
    %v4413 = vxor.u32 %v4381, 2147483648
    %v4414 = vxor.u32 %v4382, 2147483648
    %v4415 = vxor.u32 %v4383, 2147483648
    %v4416 = vxor.u32 %v4384, 2147483648
    %v4417 = vmul.f32 %v4385, 1.442695
    %v4418 = vpow.pop %v4417
    %v4419 = vmul.f32 %v4386, 1.442695
    %v4420 = vpow.pop %v4419
    %v4421 = vmul.f32 %v4387, 1.442695
    %v4422 = vpow.pop %v4421
    %v4423 = vmul.f32 %v4388, 1.442695
    %v4424 = vpow.pop %v4423
    %v4425 = vmul.f32 %v4389, 1.442695
    %v4426 = vpow.pop %v4425
    %v4427 = vmul.f32 %v4390, 1.442695
    %v4428 = vpow.pop %v4427
    %v4429 = vmul.f32 %v4391, 1.442695
    %v4430 = vpow.pop %v4429
    %v4431 = vmul.f32 %v4392, 1.442695
    %v4432 = vpow.pop %v4431
    %v4433 = vmul.f32 %v4393, 1.442695
    %v4434 = vpow.pop %v4433
    %v4435 = vmul.f32 %v4394, 1.442695
    %v4436 = vpow.pop %v4435
    %v4437 = vmul.f32 %v4395, 1.442695
    %v4438 = vpow.pop %v4437
    %v4439 = vmul.f32 %v4396, 1.442695
    %v4440 = vpow.pop %v4439
    %v4441 = vmul.f32 %v4397, 1.442695
    %v4442 = vpow.pop %v4441
    %v4443 = vmul.f32 %v4398, 1.442695
    %v4444 = vpow.pop %v4443
    %v4445 = vmul.f32 %v4399, 1.442695
    %v4446 = vpow.pop %v4445
    %v4447 = vmul.f32 %v4400, 1.442695
    %v4448 = vpow.pop %v4447
    %v4449 = vmul.f32 %v4401, 1.442695
    %v4450 = vpow.pop %v4449
    %v4451 = vmul.f32 %v4402, 1.442695
    %v4452 = vpow.pop %v4451
    %v4453 = vmul.f32 %v4403, 1.442695
    %v4454 = vpow.pop %v4453
    %v4455 = vmul.f32 %v4404, 1.442695
    %v4456 = vpow.pop %v4455
    %v4457 = vmul.f32 %v4405, 1.442695
    %v4458 = vpow.pop %v4457
    %v4459 = vmul.f32 %v4406, 1.442695
    %v4460 = vpow.pop %v4459
    %v4461 = vmul.f32 %v4407, 1.442695
    %v4462 = vpow.pop %v4461
    %v4463 = vmul.f32 %v4408, 1.442695
    %v4464 = vpow.pop %v4463
    %v4465 = vmul.f32 %v4409, 1.442695
    %v4466 = vpow.pop %v4465
    %v4467 = vmul.f32 %v4410, 1.442695
    %v4468 = vpow.pop %v4467
    %v4469 = vmul.f32 %v4411, 1.442695
    %v4470 = vpow.pop %v4469
    %v4471 = vmul.f32 %v4412, 1.442695
    %v4472 = vpow.pop %v4471
    %v4473 = vmul.f32 %v4413, 1.442695
    %v4474 = vpow.pop %v4473
    %v4475 = vmul.f32 %v4414, 1.442695
    %v4476 = vpow.pop %v4475
    %v4477 = vmul.f32 %v4415, 1.442695
    %v4478 = vpow.pop %v4477
    %v4479 = vmul.f32 %v4416, 1.442695
    %v4480 = vpow.pop %v4479
    %v4481 = vadd.f32 %v4418, 1.0
    %v4482 = vadd.f32 %v4420, 1.0
    %v4483 = vadd.f32 %v4422, 1.0
    %v4484 = vadd.f32 %v4424, 1.0
    %v4485 = vadd.f32 %v4426, 1.0
    %v4486 = vadd.f32 %v4428, 1.0
    %v4487 = vadd.f32 %v4430, 1.0
    %v4488 = vadd.f32 %v4432, 1.0
    %v4489 = vadd.f32 %v4434, 1.0
    %v4490 = vadd.f32 %v4436, 1.0
    %v4491 = vadd.f32 %v4438, 1.0
    %v4492 = vadd.f32 %v4440, 1.0
    %v4493 = vadd.f32 %v4442, 1.0
    %v4494 = vadd.f32 %v4444, 1.0
    %v4495 = vadd.f32 %v4446, 1.0
    %v4496 = vadd.f32 %v4448, 1.0
    %v4497 = vadd.f32 %v4450, 1.0
    %v4498 = vadd.f32 %v4452, 1.0
    %v4499 = vadd.f32 %v4454, 1.0
    %v4500 = vadd.f32 %v4456, 1.0
    %v4501 = vadd.f32 %v4458, 1.0
    %v4502 = vadd.f32 %v4460, 1.0
    %v4503 = vadd.f32 %v4462, 1.0
    %v4504 = vadd.f32 %v4464, 1.0
    %v4505 = vadd.f32 %v4466, 1.0
    %v4506 = vadd.f32 %v4468, 1.0
    %v4507 = vadd.f32 %v4470, 1.0
    %v4508 = vadd.f32 %v4472, 1.0
    %v4509 = vadd.f32 %v4474, 1.0
    %v4510 = vadd.f32 %v4476, 1.0
    %v4511 = vadd.f32 %v4478, 1.0
    %v4512 = vadd.f32 %v4480, 1.0
    %v4513 = vrcp.pop %v4481
    %v4514 = vmul.f32 %v4481, %v4513
    %v4515 = vsub.f32 1.0, %v4514
    %v4516 = vmul.f32 %v4513, %v4515
    %v4517 = vadd.f32 %v4513, %v4516
    %vm4518 = vweird.f32 %v4481
    %vm4519 = vweird.f32 %v4513
    %vm4520 = vmor %vm4518, %vm4519
    %v4521 = vsel %vm4520, %v4513, %v4517
    %v4522 = vand.u32 2147483647, %v4481
    %vm4523 = vcmp.eq.f32.partialorder %v4522, 8.507059e+37
    %v4524 = vand.u32 %v4481, 2147483648
    %v4525 = vor.u32 1.1754944e-38, %v4524
    %v4526 = vsel %vm4523, %v4525, %v4521
    %v4527 = vmul.f32 1.0, %v4526
    %v4528 = vrcp.pop %v4482
    %v4529 = vmul.f32 %v4482, %v4528
    %v4530 = vsub.f32 1.0, %v4529
    %v4531 = vmul.f32 %v4528, %v4530
    %v4532 = vadd.f32 %v4528, %v4531
    %vm4533 = vweird.f32 %v4482
    %vm4534 = vweird.f32 %v4528
    %vm4535 = vmor %vm4533, %vm4534
    %v4536 = vsel %vm4535, %v4528, %v4532
    %v4537 = vand.u32 2147483647, %v4482
    %vm4538 = vcmp.eq.f32.partialorder %v4537, 8.507059e+37
    %v4539 = vand.u32 %v4482, 2147483648
    %v4540 = vor.u32 1.1754944e-38, %v4539
    %v4541 = vsel %vm4538, %v4540, %v4536
    %v4542 = vmul.f32 1.0, %v4541
    %v4543 = vrcp.pop %v4483
    %v4544 = vmul.f32 %v4483, %v4543
    %v4545 = vsub.f32 1.0, %v4544
    %v4546 = vmul.f32 %v4543, %v4545
    %v4547 = vadd.f32 %v4543, %v4546
    %vm4548 = vweird.f32 %v4483
    %vm4549 = vweird.f32 %v4543
    %vm4550 = vmor %vm4548, %vm4549
    %v4551 = vsel %vm4550, %v4543, %v4547
    %v4552 = vand.u32 2147483647, %v4483
    %vm4553 = vcmp.eq.f32.partialorder %v4552, 8.507059e+37
    %v4554 = vand.u32 %v4483, 2147483648
    %v4555 = vor.u32 1.1754944e-38, %v4554
    %v4556 = vsel %vm4553, %v4555, %v4551
    %v4557 = vmul.f32 1.0, %v4556
    %v4558 = vrcp.pop %v4484
    %v4559 = vmul.f32 %v4484, %v4558
    %v4560 = vsub.f32 1.0, %v4559
    %v4561 = vmul.f32 %v4558, %v4560
    %v4562 = vadd.f32 %v4558, %v4561
    %vm4563 = vweird.f32 %v4484
    %vm4564 = vweird.f32 %v4558
    %vm4565 = vmor %vm4563, %vm4564
    %v4566 = vsel %vm4565, %v4558, %v4562
    %v4567 = vand.u32 2147483647, %v4484
    %vm4568 = vcmp.eq.f32.partialorder %v4567, 8.507059e+37
    %v4569 = vand.u32 %v4484, 2147483648
    %v4570 = vor.u32 1.1754944e-38, %v4569
    %v4571 = vsel %vm4568, %v4570, %v4566
    %v4572 = vmul.f32 1.0, %v4571
    %v4573 = vrcp.pop %v4485
    %v4574 = vmul.f32 %v4485, %v4573
    %v4575 = vsub.f32 1.0, %v4574
    %v4576 = vmul.f32 %v4573, %v4575
    %v4577 = vadd.f32 %v4573, %v4576
    %vm4578 = vweird.f32 %v4485
    %vm4579 = vweird.f32 %v4573
    %vm4580 = vmor %vm4578, %vm4579
    %v4581 = vsel %vm4580, %v4573, %v4577
    %v4582 = vand.u32 2147483647, %v4485
    %vm4583 = vcmp.eq.f32.partialorder %v4582, 8.507059e+37
    %v4584 = vand.u32 %v4485, 2147483648
    %v4585 = vor.u32 1.1754944e-38, %v4584
    %v4586 = vsel %vm4583, %v4585, %v4581
    %v4587 = vmul.f32 1.0, %v4586
    %v4588 = vrcp.pop %v4486
    %v4589 = vmul.f32 %v4486, %v4588
    %v4590 = vsub.f32 1.0, %v4589
    %v4591 = vmul.f32 %v4588, %v4590
    %v4592 = vadd.f32 %v4588, %v4591
    %vm4593 = vweird.f32 %v4486
    %vm4594 = vweird.f32 %v4588
    %vm4595 = vmor %vm4593, %vm4594
    %v4596 = vsel %vm4595, %v4588, %v4592
    %v4597 = vand.u32 2147483647, %v4486
    %vm4598 = vcmp.eq.f32.partialorder %v4597, 8.507059e+37
    %v4599 = vand.u32 %v4486, 2147483648
    %v4600 = vor.u32 1.1754944e-38, %v4599
    %v4601 = vsel %vm4598, %v4600, %v4596
    %v4602 = vmul.f32 1.0, %v4601
    %v4603 = vrcp.pop %v4487
    %v4604 = vmul.f32 %v4487, %v4603
    %v4605 = vsub.f32 1.0, %v4604
    %v4606 = vmul.f32 %v4603, %v4605
    %v4607 = vadd.f32 %v4603, %v4606
    %vm4608 = vweird.f32 %v4487
    %vm4609 = vweird.f32 %v4603
    %vm4610 = vmor %vm4608, %vm4609
    %v4611 = vsel %vm4610, %v4603, %v4607
    %v4612 = vand.u32 2147483647, %v4487
    %vm4613 = vcmp.eq.f32.partialorder %v4612, 8.507059e+37
    %v4614 = vand.u32 %v4487, 2147483648
    %v4615 = vor.u32 1.1754944e-38, %v4614
    %v4616 = vsel %vm4613, %v4615, %v4611
    %v4617 = vmul.f32 1.0, %v4616
    %v4618 = vrcp.pop %v4488
    %v4619 = vmul.f32 %v4488, %v4618
    %v4620 = vsub.f32 1.0, %v4619
    %v4621 = vmul.f32 %v4618, %v4620
    %v4622 = vadd.f32 %v4618, %v4621
    %vm4623 = vweird.f32 %v4488
    %vm4624 = vweird.f32 %v4618
    %vm4625 = vmor %vm4623, %vm4624
    %v4626 = vsel %vm4625, %v4618, %v4622
    %v4627 = vand.u32 2147483647, %v4488
    %vm4628 = vcmp.eq.f32.partialorder %v4627, 8.507059e+37
    %v4629 = vand.u32 %v4488, 2147483648
    %v4630 = vor.u32 1.1754944e-38, %v4629
    %v4631 = vsel %vm4628, %v4630, %v4626
    %v4632 = vmul.f32 1.0, %v4631
    %v4633 = vrcp.pop %v4489
    %v4634 = vmul.f32 %v4489, %v4633
    %v4635 = vsub.f32 1.0, %v4634
    %v4636 = vmul.f32 %v4633, %v4635
    %v4637 = vadd.f32 %v4633, %v4636
    %vm4638 = vweird.f32 %v4489
    %vm4639 = vweird.f32 %v4633
    %vm4640 = vmor %vm4638, %vm4639
    %v4641 = vsel %vm4640, %v4633, %v4637
    %v4642 = vand.u32 2147483647, %v4489
    %vm4643 = vcmp.eq.f32.partialorder %v4642, 8.507059e+37
    %v4644 = vand.u32 %v4489, 2147483648
    %v4645 = vor.u32 1.1754944e-38, %v4644
    %v4646 = vsel %vm4643, %v4645, %v4641
    %v4647 = vmul.f32 1.0, %v4646
    %v4648 = vrcp.pop %v4490
    %v4649 = vmul.f32 %v4490, %v4648
    %v4650 = vsub.f32 1.0, %v4649
    %v4651 = vmul.f32 %v4648, %v4650
    %v4652 = vadd.f32 %v4648, %v4651
    %vm4653 = vweird.f32 %v4490
    %vm4654 = vweird.f32 %v4648
    %vm4655 = vmor %vm4653, %vm4654
    %v4656 = vsel %vm4655, %v4648, %v4652
    %v4657 = vand.u32 2147483647, %v4490
    %vm4658 = vcmp.eq.f32.partialorder %v4657, 8.507059e+37
    %v4659 = vand.u32 %v4490, 2147483648
    %v4660 = vor.u32 1.1754944e-38, %v4659
    %v4661 = vsel %vm4658, %v4660, %v4656
    %v4662 = vmul.f32 1.0, %v4661
    %v4663 = vrcp.pop %v4491
    %v4664 = vmul.f32 %v4491, %v4663
    %v4665 = vsub.f32 1.0, %v4664
    %v4666 = vmul.f32 %v4663, %v4665
    %v4667 = vadd.f32 %v4663, %v4666
    %vm4668 = vweird.f32 %v4491
    %vm4669 = vweird.f32 %v4663
    %vm4670 = vmor %vm4668, %vm4669
    %v4671 = vsel %vm4670, %v4663, %v4667
    %v4672 = vand.u32 2147483647, %v4491
    %vm4673 = vcmp.eq.f32.partialorder %v4672, 8.507059e+37
    %v4674 = vand.u32 %v4491, 2147483648
    %v4675 = vor.u32 1.1754944e-38, %v4674
    %v4676 = vsel %vm4673, %v4675, %v4671
    %v4677 = vmul.f32 1.0, %v4676
    %v4678 = vrcp.pop %v4492
    %v4679 = vmul.f32 %v4492, %v4678
    %v4680 = vsub.f32 1.0, %v4679
    %v4681 = vmul.f32 %v4678, %v4680
    %v4682 = vadd.f32 %v4678, %v4681
    %vm4683 = vweird.f32 %v4492
    %vm4684 = vweird.f32 %v4678
    %vm4685 = vmor %vm4683, %vm4684
    %v4686 = vsel %vm4685, %v4678, %v4682
    %v4687 = vand.u32 2147483647, %v4492
    %vm4688 = vcmp.eq.f32.partialorder %v4687, 8.507059e+37
    %v4689 = vand.u32 %v4492, 2147483648
    %v4690 = vor.u32 1.1754944e-38, %v4689
    %v4691 = vsel %vm4688, %v4690, %v4686
    %v4692 = vmul.f32 1.0, %v4691
    %v4693 = vrcp.pop %v4493
    %v4694 = vmul.f32 %v4493, %v4693
    %v4695 = vsub.f32 1.0, %v4694
    %v4696 = vmul.f32 %v4693, %v4695
    %v4697 = vadd.f32 %v4693, %v4696
    %vm4698 = vweird.f32 %v4493
    %vm4699 = vweird.f32 %v4693
    %vm4700 = vmor %vm4698, %vm4699
    %v4701 = vsel %vm4700, %v4693, %v4697
    %v4702 = vand.u32 2147483647, %v4493
    %vm4703 = vcmp.eq.f32.partialorder %v4702, 8.507059e+37
    %v4704 = vand.u32 %v4493, 2147483648
    %v4705 = vor.u32 1.1754944e-38, %v4704
    %v4706 = vsel %vm4703, %v4705, %v4701
    %v4707 = vmul.f32 1.0, %v4706
    %v4708 = vrcp.pop %v4494
    %v4709 = vmul.f32 %v4494, %v4708
    %v4710 = vsub.f32 1.0, %v4709
    %v4711 = vmul.f32 %v4708, %v4710
    %v4712 = vadd.f32 %v4708, %v4711
    %vm4713 = vweird.f32 %v4494
    %vm4714 = vweird.f32 %v4708
    %vm4715 = vmor %vm4713, %vm4714
    %v4716 = vsel %vm4715, %v4708, %v4712
    %v4717 = vand.u32 2147483647, %v4494
    %vm4718 = vcmp.eq.f32.partialorder %v4717, 8.507059e+37
    %v4719 = vand.u32 %v4494, 2147483648
    %v4720 = vor.u32 1.1754944e-38, %v4719
    %v4721 = vsel %vm4718, %v4720, %v4716
    %v4722 = vmul.f32 1.0, %v4721
    %v4723 = vrcp.pop %v4495
    %v4724 = vmul.f32 %v4495, %v4723
    %v4725 = vsub.f32 1.0, %v4724
    %v4726 = vmul.f32 %v4723, %v4725
    %v4727 = vadd.f32 %v4723, %v4726
    %vm4728 = vweird.f32 %v4495
    %vm4729 = vweird.f32 %v4723
    %vm4730 = vmor %vm4728, %vm4729
    %v4731 = vsel %vm4730, %v4723, %v4727
    %v4732 = vand.u32 2147483647, %v4495
    %vm4733 = vcmp.eq.f32.partialorder %v4732, 8.507059e+37
    %v4734 = vand.u32 %v4495, 2147483648
    %v4735 = vor.u32 1.1754944e-38, %v4734
    %v4736 = vsel %vm4733, %v4735, %v4731
    %v4737 = vmul.f32 1.0, %v4736
    %v4738 = vrcp.pop %v4496
    %v4739 = vmul.f32 %v4496, %v4738
    %v4740 = vsub.f32 1.0, %v4739
    %v4741 = vmul.f32 %v4738, %v4740
    %v4742 = vadd.f32 %v4738, %v4741
    %vm4743 = vweird.f32 %v4496
    %vm4744 = vweird.f32 %v4738
    %vm4745 = vmor %vm4743, %vm4744
    %v4746 = vsel %vm4745, %v4738, %v4742
    %v4747 = vand.u32 2147483647, %v4496
    %vm4748 = vcmp.eq.f32.partialorder %v4747, 8.507059e+37
    %v4749 = vand.u32 %v4496, 2147483648
    %v4750 = vor.u32 1.1754944e-38, %v4749
    %v4751 = vsel %vm4748, %v4750, %v4746
    %v4752 = vmul.f32 1.0, %v4751
    %v4753 = vrcp.pop %v4497
    %v4754 = vmul.f32 %v4497, %v4753
    %v4755 = vsub.f32 1.0, %v4754
    %v4756 = vmul.f32 %v4753, %v4755
    %v4757 = vadd.f32 %v4753, %v4756
    %vm4758 = vweird.f32 %v4497
    %vm4759 = vweird.f32 %v4753
    %vm4760 = vmor %vm4758, %vm4759
    %v4761 = vsel %vm4760, %v4753, %v4757
    %v4762 = vand.u32 2147483647, %v4497
    %vm4763 = vcmp.eq.f32.partialorder %v4762, 8.507059e+37
    %v4764 = vand.u32 %v4497, 2147483648
    %v4765 = vor.u32 1.1754944e-38, %v4764
    %v4766 = vsel %vm4763, %v4765, %v4761
    %v4767 = vmul.f32 1.0, %v4766
    %v4768 = vrcp.pop %v4498
    %v4769 = vmul.f32 %v4498, %v4768
    %v4770 = vsub.f32 1.0, %v4769
    %v4771 = vmul.f32 %v4768, %v4770
    %v4772 = vadd.f32 %v4768, %v4771
    %vm4773 = vweird.f32 %v4498
    %vm4774 = vweird.f32 %v4768
    %vm4775 = vmor %vm4773, %vm4774
    %v4776 = vsel %vm4775, %v4768, %v4772
    %v4777 = vand.u32 2147483647, %v4498
    %vm4778 = vcmp.eq.f32.partialorder %v4777, 8.507059e+37
    %v4779 = vand.u32 %v4498, 2147483648
    %v4780 = vor.u32 1.1754944e-38, %v4779
    %v4781 = vsel %vm4778, %v4780, %v4776
    %v4782 = vmul.f32 1.0, %v4781
    %v4783 = vrcp.pop %v4499
    %v4784 = vmul.f32 %v4499, %v4783
    %v4785 = vsub.f32 1.0, %v4784
    %v4786 = vmul.f32 %v4783, %v4785
    %v4787 = vadd.f32 %v4783, %v4786
    %vm4788 = vweird.f32 %v4499
    %vm4789 = vweird.f32 %v4783
    %vm4790 = vmor %vm4788, %vm4789
    %v4791 = vsel %vm4790, %v4783, %v4787
    %v4792 = vand.u32 2147483647, %v4499
    %vm4793 = vcmp.eq.f32.partialorder %v4792, 8.507059e+37
    %v4794 = vand.u32 %v4499, 2147483648
    %v4795 = vor.u32 1.1754944e-38, %v4794
    %v4796 = vsel %vm4793, %v4795, %v4791
    %v4797 = vmul.f32 1.0, %v4796
    %v4798 = vrcp.pop %v4500
    %v4799 = vmul.f32 %v4500, %v4798
    %v4800 = vsub.f32 1.0, %v4799
    %v4801 = vmul.f32 %v4798, %v4800
    %v4802 = vadd.f32 %v4798, %v4801
    %vm4803 = vweird.f32 %v4500
    %vm4804 = vweird.f32 %v4798
    %vm4805 = vmor %vm4803, %vm4804
    %v4806 = vsel %vm4805, %v4798, %v4802
    %v4807 = vand.u32 2147483647, %v4500
    %vm4808 = vcmp.eq.f32.partialorder %v4807, 8.507059e+37
    %v4809 = vand.u32 %v4500, 2147483648
    %v4810 = vor.u32 1.1754944e-38, %v4809
    %v4811 = vsel %vm4808, %v4810, %v4806
    %v4812 = vmul.f32 1.0, %v4811
    %v4813 = vrcp.pop %v4501
    %v4814 = vmul.f32 %v4501, %v4813
    %v4815 = vsub.f32 1.0, %v4814
    %v4816 = vmul.f32 %v4813, %v4815
    %v4817 = vadd.f32 %v4813, %v4816
    %vm4818 = vweird.f32 %v4501
    %vm4819 = vweird.f32 %v4813
    %vm4820 = vmor %vm4818, %vm4819
    %v4821 = vsel %vm4820, %v4813, %v4817
    %v4822 = vand.u32 2147483647, %v4501
    %vm4823 = vcmp.eq.f32.partialorder %v4822, 8.507059e+37
    %v4824 = vand.u32 %v4501, 2147483648
    %v4825 = vor.u32 1.1754944e-38, %v4824
    %v4826 = vsel %vm4823, %v4825, %v4821
    %v4827 = vmul.f32 1.0, %v4826
    %v4828 = vrcp.pop %v4502
    %v4829 = vmul.f32 %v4502, %v4828
    %v4830 = vsub.f32 1.0, %v4829
    %v4831 = vmul.f32 %v4828, %v4830
    %v4832 = vadd.f32 %v4828, %v4831
    %vm4833 = vweird.f32 %v4502
    %vm4834 = vweird.f32 %v4828
    %vm4835 = vmor %vm4833, %vm4834
    %v4836 = vsel %vm4835, %v4828, %v4832
    %v4837 = vand.u32 2147483647, %v4502
    %vm4838 = vcmp.eq.f32.partialorder %v4837, 8.507059e+37
    %v4839 = vand.u32 %v4502, 2147483648
    %v4840 = vor.u32 1.1754944e-38, %v4839
    %v4841 = vsel %vm4838, %v4840, %v4836
    %v4842 = vmul.f32 1.0, %v4841
    %v4843 = vrcp.pop %v4503
    %v4844 = vmul.f32 %v4503, %v4843
    %v4845 = vsub.f32 1.0, %v4844
    %v4846 = vmul.f32 %v4843, %v4845
    %v4847 = vadd.f32 %v4843, %v4846
    %vm4848 = vweird.f32 %v4503
    %vm4849 = vweird.f32 %v4843
    %vm4850 = vmor %vm4848, %vm4849
    %v4851 = vsel %vm4850, %v4843, %v4847
    %v4852 = vand.u32 2147483647, %v4503
    %vm4853 = vcmp.eq.f32.partialorder %v4852, 8.507059e+37
    %v4854 = vand.u32 %v4503, 2147483648
    %v4855 = vor.u32 1.1754944e-38, %v4854
    %v4856 = vsel %vm4853, %v4855, %v4851
    %v4857 = vmul.f32 1.0, %v4856
    %v4858 = vrcp.pop %v4504
    %v4859 = vmul.f32 %v4504, %v4858
    %v4860 = vsub.f32 1.0, %v4859
    %v4861 = vmul.f32 %v4858, %v4860
    %v4862 = vadd.f32 %v4858, %v4861
    %vm4863 = vweird.f32 %v4504
    %vm4864 = vweird.f32 %v4858
    %vm4865 = vmor %vm4863, %vm4864
    %v4866 = vsel %vm4865, %v4858, %v4862
    %v4867 = vand.u32 2147483647, %v4504
    %vm4868 = vcmp.eq.f32.partialorder %v4867, 8.507059e+37
    %v4869 = vand.u32 %v4504, 2147483648
    %v4870 = vor.u32 1.1754944e-38, %v4869
    %v4871 = vsel %vm4868, %v4870, %v4866
    %v4872 = vmul.f32 1.0, %v4871
    %v4873 = vrcp.pop %v4505
    %v4874 = vmul.f32 %v4505, %v4873
    %v4875 = vsub.f32 1.0, %v4874
    %v4876 = vmul.f32 %v4873, %v4875
    %v4877 = vadd.f32 %v4873, %v4876
    %vm4878 = vweird.f32 %v4505
    %vm4879 = vweird.f32 %v4873
    %vm4880 = vmor %vm4878, %vm4879
    %v4881 = vsel %vm4880, %v4873, %v4877
    %v4882 = vand.u32 2147483647, %v4505
    %vm4883 = vcmp.eq.f32.partialorder %v4882, 8.507059e+37
    %v4884 = vand.u32 %v4505, 2147483648
    %v4885 = vor.u32 1.1754944e-38, %v4884
    %v4886 = vsel %vm4883, %v4885, %v4881
    %v4887 = vmul.f32 1.0, %v4886
    %v4888 = vrcp.pop %v4506
    %v4889 = vmul.f32 %v4506, %v4888
    %v4890 = vsub.f32 1.0, %v4889
    %v4891 = vmul.f32 %v4888, %v4890
    %v4892 = vadd.f32 %v4888, %v4891
    %vm4893 = vweird.f32 %v4506
    %vm4894 = vweird.f32 %v4888
    %vm4895 = vmor %vm4893, %vm4894
    %v4896 = vsel %vm4895, %v4888, %v4892
    %v4897 = vand.u32 2147483647, %v4506
    %vm4898 = vcmp.eq.f32.partialorder %v4897, 8.507059e+37
    %v4899 = vand.u32 %v4506, 2147483648
    %v4900 = vor.u32 1.1754944e-38, %v4899
    %v4901 = vsel %vm4898, %v4900, %v4896
    %v4902 = vmul.f32 1.0, %v4901
    %v4903 = vrcp.pop %v4507
    %v4904 = vmul.f32 %v4507, %v4903
    %v4905 = vsub.f32 1.0, %v4904
    %v4906 = vmul.f32 %v4903, %v4905
    %v4907 = vadd.f32 %v4903, %v4906
    %vm4908 = vweird.f32 %v4507
    %vm4909 = vweird.f32 %v4903
    %vm4910 = vmor %vm4908, %vm4909
    %v4911 = vsel %vm4910, %v4903, %v4907
    %v4912 = vand.u32 2147483647, %v4507
    %vm4913 = vcmp.eq.f32.partialorder %v4912, 8.507059e+37
    %v4914 = vand.u32 %v4507, 2147483648
    %v4915 = vor.u32 1.1754944e-38, %v4914
    %v4916 = vsel %vm4913, %v4915, %v4911
    %v4917 = vmul.f32 1.0, %v4916
    %v4918 = vrcp.pop %v4508
    %v4919 = vmul.f32 %v4508, %v4918
    %v4920 = vsub.f32 1.0, %v4919
    %v4921 = vmul.f32 %v4918, %v4920
    %v4922 = vadd.f32 %v4918, %v4921
    %vm4923 = vweird.f32 %v4508
    %vm4924 = vweird.f32 %v4918
    %vm4925 = vmor %vm4923, %vm4924
    %v4926 = vsel %vm4925, %v4918, %v4922
    %v4927 = vand.u32 2147483647, %v4508
    %vm4928 = vcmp.eq.f32.partialorder %v4927, 8.507059e+37
    %v4929 = vand.u32 %v4508, 2147483648
    %v4930 = vor.u32 1.1754944e-38, %v4929
    %v4931 = vsel %vm4928, %v4930, %v4926
    %v4932 = vmul.f32 1.0, %v4931
    %v4933 = vrcp.pop %v4509
    %v4934 = vmul.f32 %v4509, %v4933
    %v4935 = vsub.f32 1.0, %v4934
    %v4936 = vmul.f32 %v4933, %v4935
    %v4937 = vadd.f32 %v4933, %v4936
    %vm4938 = vweird.f32 %v4509
    %vm4939 = vweird.f32 %v4933
    %vm4940 = vmor %vm4938, %vm4939
    %v4941 = vsel %vm4940, %v4933, %v4937
    %v4942 = vand.u32 2147483647, %v4509
    %vm4943 = vcmp.eq.f32.partialorder %v4942, 8.507059e+37
    %v4944 = vand.u32 %v4509, 2147483648
    %v4945 = vor.u32 1.1754944e-38, %v4944
    %v4946 = vsel %vm4943, %v4945, %v4941
    %v4947 = vmul.f32 1.0, %v4946
    %v4948 = vrcp.pop %v4510
    %v4949 = vmul.f32 %v4510, %v4948
    %v4950 = vsub.f32 1.0, %v4949
    %v4951 = vmul.f32 %v4948, %v4950
    %v4952 = vadd.f32 %v4948, %v4951
    %vm4953 = vweird.f32 %v4510
    %vm4954 = vweird.f32 %v4948
    %vm4955 = vmor %vm4953, %vm4954
    %v4956 = vsel %vm4955, %v4948, %v4952
    %v4957 = vand.u32 2147483647, %v4510
    %vm4958 = vcmp.eq.f32.partialorder %v4957, 8.507059e+37
    %v4959 = vand.u32 %v4510, 2147483648
    %v4960 = vor.u32 1.1754944e-38, %v4959
    %v4961 = vsel %vm4958, %v4960, %v4956
    %v4962 = vmul.f32 1.0, %v4961
    %v4963 = vrcp.pop %v4511
    %v4964 = vmul.f32 %v4511, %v4963
    %v4965 = vsub.f32 1.0, %v4964
    %v4966 = vmul.f32 %v4963, %v4965
    %v4967 = vadd.f32 %v4963, %v4966
    %vm4968 = vweird.f32 %v4511
    %vm4969 = vweird.f32 %v4963
    %vm4970 = vmor %vm4968, %vm4969
    %v4971 = vsel %vm4970, %v4963, %v4967
    %v4972 = vand.u32 2147483647, %v4511
    %vm4973 = vcmp.eq.f32.partialorder %v4972, 8.507059e+37
    %v4974 = vand.u32 %v4511, 2147483648
    %v4975 = vor.u32 1.1754944e-38, %v4974
    %v4976 = vsel %vm4973, %v4975, %v4971
    %v4977 = vmul.f32 1.0, %v4976
    %v4978 = vrcp.pop %v4512
    %v4979 = vmul.f32 %v4512, %v4978
    %v4980 = vsub.f32 1.0, %v4979
    %v4981 = vmul.f32 %v4978, %v4980
    %v4982 = vadd.f32 %v4978, %v4981
    %vm4983 = vweird.f32 %v4512
    %vm4984 = vweird.f32 %v4978
    %vm4985 = vmor %vm4983, %vm4984
    %v4986 = vsel %vm4985, %v4978, %v4982
    %v4987 = vand.u32 2147483647, %v4512
    %vm4988 = vcmp.eq.f32.partialorder %v4987, 8.507059e+37
    %v4989 = vand.u32 %v4512, 2147483648
    %v4990 = vor.u32 1.1754944e-38, %v4989
    %v4991 = vsel %vm4988, %v4990, %v4986
    %v4992 = vmul.f32 1.0, %v4991
    %4994 = vset.pattern.permute.xlu0 0
    %4995 = vperm.xlu0 %4994, %v4527
    %v4996 = vpop.permute.xlu0 %4995
    %4999 = vset.pattern.permute.xlu0 0
    %5000 = vperm.xlu0 %4999, %v4542
    %v5001 = vpop.permute.xlu0 %5000
    %5004 = vset.pattern.permute.xlu0 0
    %5005 = vperm.xlu0 %5004, %v4557
    %v5006 = vpop.permute.xlu0 %5005
    %5009 = vset.pattern.permute.xlu0 0
    %5010 = vperm.xlu0 %5009, %v4572
    %v5011 = vpop.permute.xlu0 %5010
    %5014 = vset.pattern.permute.xlu0 0
    %5015 = vperm.xlu0 %5014, %v4587
    %v5016 = vpop.permute.xlu0 %5015
    %5019 = vset.pattern.permute.xlu0 0
    %5020 = vperm.xlu0 %5019, %v4602
    %v5021 = vpop.permute.xlu0 %5020
    %5024 = vset.pattern.permute.xlu0 0
    %5025 = vperm.xlu0 %5024, %v4617
    %v5026 = vpop.permute.xlu0 %5025
    %5029 = vset.pattern.permute.xlu0 0
    %5030 = vperm.xlu0 %5029, %v4632
    %v5031 = vpop.permute.xlu0 %5030
    %5034 = vset.pattern.permute.xlu0 0
    %5035 = vperm.xlu0 %5034, %v4647
    %v5036 = vpop.permute.xlu0 %5035
    %5039 = vset.pattern.permute.xlu0 0
    %5040 = vperm.xlu0 %5039, %v4662
    %v5041 = vpop.permute.xlu0 %5040
    %5044 = vset.pattern.permute.xlu0 0
    %5045 = vperm.xlu0 %5044, %v4677
    %v5046 = vpop.permute.xlu0 %5045
    %5049 = vset.pattern.permute.xlu0 0
    %5050 = vperm.xlu0 %5049, %v4692
    %v5051 = vpop.permute.xlu0 %5050
    %5054 = vset.pattern.permute.xlu0 0
    %5055 = vperm.xlu0 %5054, %v4707
    %v5056 = vpop.permute.xlu0 %5055
    %5059 = vset.pattern.permute.xlu0 0
    %5060 = vperm.xlu0 %5059, %v4722
    %v5061 = vpop.permute.xlu0 %5060
    %5064 = vset.pattern.permute.xlu0 0
    %5065 = vperm.xlu0 %5064, %v4737
    %v5066 = vpop.permute.xlu0 %5065
    %5069 = vset.pattern.permute.xlu0 0
    %5070 = vperm.xlu0 %5069, %v4752
    %v5071 = vpop.permute.xlu0 %5070
    %5074 = vset.pattern.permute.xlu0 0
    %5075 = vperm.xlu0 %5074, %v4767
    %v5076 = vpop.permute.xlu0 %5075
    %5079 = vset.pattern.permute.xlu0 0
    %5080 = vperm.xlu0 %5079, %v4782
    %v5081 = vpop.permute.xlu0 %5080
    %5084 = vset.pattern.permute.xlu0 0
    %5085 = vperm.xlu0 %5084, %v4797
    %v5086 = vpop.permute.xlu0 %5085
    %5089 = vset.pattern.permute.xlu0 0
    %5090 = vperm.xlu0 %5089, %v4812
    %v5091 = vpop.permute.xlu0 %5090
    %5094 = vset.pattern.permute.xlu0 0
    %5095 = vperm.xlu0 %5094, %v4827
    %v5096 = vpop.permute.xlu0 %5095
    %5099 = vset.pattern.permute.xlu0 0
    %5100 = vperm.xlu0 %5099, %v4842
    %v5101 = vpop.permute.xlu0 %5100
    %5104 = vset.pattern.permute.xlu0 0
    %5105 = vperm.xlu0 %5104, %v4857
    %v5106 = vpop.permute.xlu0 %5105
    %5109 = vset.pattern.permute.xlu0 0
    %5110 = vperm.xlu0 %5109, %v4872
    %v5111 = vpop.permute.xlu0 %5110
    %5114 = vset.pattern.permute.xlu0 0
    %5115 = vperm.xlu0 %5114, %v4887
    %v5116 = vpop.permute.xlu0 %5115
    %5119 = vset.pattern.permute.xlu0 0
    %5120 = vperm.xlu0 %5119, %v4902
    %v5121 = vpop.permute.xlu0 %5120
    %5124 = vset.pattern.permute.xlu0 0
    %5125 = vperm.xlu0 %5124, %v4917
    %v5126 = vpop.permute.xlu0 %5125
    %5129 = vset.pattern.permute.xlu0 0
    %5130 = vperm.xlu0 %5129, %v4932
    %v5131 = vpop.permute.xlu0 %5130
    %5134 = vset.pattern.permute.xlu0 0
    %5135 = vperm.xlu0 %5134, %v4947
    %v5136 = vpop.permute.xlu0 %5135
    %5139 = vset.pattern.permute.xlu0 0
    %5140 = vperm.xlu0 %5139, %v4962
    %v5141 = vpop.permute.xlu0 %5140
    %5144 = vset.pattern.permute.xlu0 0
    %5145 = vperm.xlu0 %5144, %v4977
    %v5146 = vpop.permute.xlu0 %5145
    %5149 = vset.pattern.permute.xlu0 0
    %5150 = vperm.xlu0 %5149, %v4992
    %v5151 = vpop.permute.xlu0 %5150
    %v5153 = vmul.f32 %v4996, %v4170
    %v5154 = vmul.f32 %v5001, %v4172
    %v5155 = vmul.f32 %v5006, %v4175
    %v5156 = vmul.f32 %v5011, %v4177
    %v5157 = vmul.f32 %v5016, %v4180
    %v5158 = vmul.f32 %v5021, %v4182
    %v5159 = vmul.f32 %v5026, %v4185
    %v5160 = vmul.f32 %v5031, %v4187
    %v5161 = vmul.f32 %v5036, %v4190
    %v5162 = vmul.f32 %v5041, %v4192
    %v5163 = vmul.f32 %v5046, %v4195
    %v5164 = vmul.f32 %v5051, %v4197
    %v5165 = vmul.f32 %v5056, %v4200
    %v5166 = vmul.f32 %v5061, %v4202
    %v5167 = vmul.f32 %v5066, %v4205
    %v5168 = vmul.f32 %v5071, %v4207
    %v5169 = vmul.f32 %v5076, %v4210
    %v5170 = vmul.f32 %v5081, %v4212
    %v5171 = vmul.f32 %v5086, %v4215
    %v5172 = vmul.f32 %v5091, %v4217
    %v5173 = vmul.f32 %v5096, %v4220
    %v5174 = vmul.f32 %v5101, %v4222
    %v5175 = vmul.f32 %v5106, %v4225
    %v5176 = vmul.f32 %v5111, %v4227
    %v5177 = vmul.f32 %v5116, %v4230
    %v5178 = vmul.f32 %v5121, %v4232
    %v5179 = vmul.f32 %v5126, %v4235
    %v5180 = vmul.f32 %v5131, %v4237
    %v5181 = vmul.f32 %v5136, %v4240
    %v5182 = vmul.f32 %v5141, %v4242
    %v5183 = vmul.f32 %v5146, %v4245
    %v5184 = vmul.f32 %v5151, %v4247
    %v5185 = vsub.f32 1.0, %v4527
    %v5186 = vsub.f32 1.0, %v4542
    %v5187 = vsub.f32 1.0, %v4557
    %v5188 = vsub.f32 1.0, %v4572
    %v5189 = vsub.f32 1.0, %v4587
    %v5190 = vsub.f32 1.0, %v4602
    %v5191 = vsub.f32 1.0, %v4617
    %v5192 = vsub.f32 1.0, %v4632
    %v5193 = vsub.f32 1.0, %v4647
    %v5194 = vsub.f32 1.0, %v4662
    %v5195 = vsub.f32 1.0, %v4677
    %v5196 = vsub.f32 1.0, %v4692
    %v5197 = vsub.f32 1.0, %v4707
    %v5198 = vsub.f32 1.0, %v4722
    %v5199 = vsub.f32 1.0, %v4737
    %v5200 = vsub.f32 1.0, %v4752
    %v5201 = vsub.f32 1.0, %v4767
    %v5202 = vsub.f32 1.0, %v4782
    %v5203 = vsub.f32 1.0, %v4797
    %v5204 = vsub.f32 1.0, %v4812
    %v5205 = vsub.f32 1.0, %v4827
    %v5206 = vsub.f32 1.0, %v4842
    %v5207 = vsub.f32 1.0, %v4857
    %v5208 = vsub.f32 1.0, %v4872
    %v5209 = vsub.f32 1.0, %v4887
    %v5210 = vsub.f32 1.0, %v4902
    %v5211 = vsub.f32 1.0, %v4917
    %v5212 = vsub.f32 1.0, %v4932
    %v5213 = vsub.f32 1.0, %v4947
    %v5214 = vsub.f32 1.0, %v4962
    %v5215 = vsub.f32 1.0, %v4977
    %v5216 = vsub.f32 1.0, %v4992
    %5218 = vset.pattern.permute.xlu0 0
    %5219 = vperm.xlu0 %5218, %v5185
    %v5220 = vpop.permute.xlu0 %5219
    %5223 = vset.pattern.permute.xlu0 0
    %5224 = vperm.xlu0 %5223, %v5186
    %v5225 = vpop.permute.xlu0 %5224
    %5228 = vset.pattern.permute.xlu0 0
    %5229 = vperm.xlu0 %5228, %v5187
    %v5230 = vpop.permute.xlu0 %5229
    %5233 = vset.pattern.permute.xlu0 0
    %5234 = vperm.xlu0 %5233, %v5188
    %v5235 = vpop.permute.xlu0 %5234
    %5238 = vset.pattern.permute.xlu0 0
    %5239 = vperm.xlu0 %5238, %v5189
    %v5240 = vpop.permute.xlu0 %5239
    %5243 = vset.pattern.permute.xlu0 0
    %5244 = vperm.xlu0 %5243, %v5190
    %v5245 = vpop.permute.xlu0 %5244
    %5248 = vset.pattern.permute.xlu0 0
    %5249 = vperm.xlu0 %5248, %v5191
    %v5250 = vpop.permute.xlu0 %5249
    %5253 = vset.pattern.permute.xlu0 0
    %5254 = vperm.xlu0 %5253, %v5192
    %v5255 = vpop.permute.xlu0 %5254
    %5258 = vset.pattern.permute.xlu0 0
    %5259 = vperm.xlu0 %5258, %v5193
    %v5260 = vpop.permute.xlu0 %5259
    %5263 = vset.pattern.permute.xlu0 0
    %5264 = vperm.xlu0 %5263, %v5194
    %v5265 = vpop.permute.xlu0 %5264
    %5268 = vset.pattern.permute.xlu0 0
    %5269 = vperm.xlu0 %5268, %v5195
    %v5270 = vpop.permute.xlu0 %5269
    %5273 = vset.pattern.permute.xlu0 0
    %5274 = vperm.xlu0 %5273, %v5196
    %v5275 = vpop.permute.xlu0 %5274
    %5278 = vset.pattern.permute.xlu0 0
    %5279 = vperm.xlu0 %5278, %v5197
    %v5280 = vpop.permute.xlu0 %5279
    %5283 = vset.pattern.permute.xlu0 0
    %5284 = vperm.xlu0 %5283, %v5198
    %v5285 = vpop.permute.xlu0 %5284
    %5288 = vset.pattern.permute.xlu0 0
    %5289 = vperm.xlu0 %5288, %v5199
    %v5290 = vpop.permute.xlu0 %5289
    %5293 = vset.pattern.permute.xlu0 0
    %5294 = vperm.xlu0 %5293, %v5200
    %v5295 = vpop.permute.xlu0 %5294
    %5298 = vset.pattern.permute.xlu0 0
    %5299 = vperm.xlu0 %5298, %v5201
    %v5300 = vpop.permute.xlu0 %5299
    %5303 = vset.pattern.permute.xlu0 0
    %5304 = vperm.xlu0 %5303, %v5202
    %v5305 = vpop.permute.xlu0 %5304
    %5308 = vset.pattern.permute.xlu0 0
    %5309 = vperm.xlu0 %5308, %v5203
    %v5310 = vpop.permute.xlu0 %5309
    %5313 = vset.pattern.permute.xlu0 0
    %5314 = vperm.xlu0 %5313, %v5204
    %v5315 = vpop.permute.xlu0 %5314
    %5318 = vset.pattern.permute.xlu0 0
    %5319 = vperm.xlu0 %5318, %v5205
    %v5320 = vpop.permute.xlu0 %5319
    %5323 = vset.pattern.permute.xlu0 0
    %5324 = vperm.xlu0 %5323, %v5206
    %v5325 = vpop.permute.xlu0 %5324
    %5328 = vset.pattern.permute.xlu0 0
    %5329 = vperm.xlu0 %5328, %v5207
    %v5330 = vpop.permute.xlu0 %5329
    %5333 = vset.pattern.permute.xlu0 0
    %5334 = vperm.xlu0 %5333, %v5208
    %v5335 = vpop.permute.xlu0 %5334
    %5338 = vset.pattern.permute.xlu0 0
    %5339 = vperm.xlu0 %5338, %v5209
    %v5340 = vpop.permute.xlu0 %5339
    %5343 = vset.pattern.permute.xlu0 0
    %5344 = vperm.xlu0 %5343, %v5210
    %v5345 = vpop.permute.xlu0 %5344
    %5348 = vset.pattern.permute.xlu0 0
    %5349 = vperm.xlu0 %5348, %v5211
    %v5350 = vpop.permute.xlu0 %5349
    %5353 = vset.pattern.permute.xlu0 0
    %5354 = vperm.xlu0 %5353, %v5212
    %v5355 = vpop.permute.xlu0 %5354
    %5358 = vset.pattern.permute.xlu0 0
    %5359 = vperm.xlu0 %5358, %v5213
    %v5360 = vpop.permute.xlu0 %5359
    %5363 = vset.pattern.permute.xlu0 0
    %5364 = vperm.xlu0 %5363, %v5214
    %v5365 = vpop.permute.xlu0 %5364
    %5368 = vset.pattern.permute.xlu0 0
    %5369 = vperm.xlu0 %5368, %v5215
    %v5370 = vpop.permute.xlu0 %5369
    %5373 = vset.pattern.permute.xlu0 0
    %5374 = vperm.xlu0 %5373, %v5216
    %v5375 = vpop.permute.xlu0 %5374
    %v5377 = vmul.f32 %v5220, %v3429
    %v5378 = vmul.f32 %v5225, %v3430
    %v5379 = vmul.f32 %v5230, %v3431
    %v5380 = vmul.f32 %v5235, %v3432
    %v5381 = vmul.f32 %v5240, %v3433
    %v5382 = vmul.f32 %v5245, %v3434
    %v5383 = vmul.f32 %v5250, %v3435
    %v5384 = vmul.f32 %v5255, %v3436
    %v5385 = vmul.f32 %v5260, %v3437
    %v5386 = vmul.f32 %v5265, %v3438
    %v5387 = vmul.f32 %v5270, %v3439
    %v5388 = vmul.f32 %v5275, %v3440
    %v5389 = vmul.f32 %v5280, %v3441
    %v5390 = vmul.f32 %v5285, %v3442
    %v5391 = vmul.f32 %v5290, %v3443
    %v5392 = vmul.f32 %v5295, %v3444
    %v5393 = vmul.f32 %v5300, %v3445
    %v5394 = vmul.f32 %v5305, %v3446
    %v5395 = vmul.f32 %v5310, %v3447
    %v5396 = vmul.f32 %v5315, %v3448
    %v5397 = vmul.f32 %v5320, %v3449
    %v5398 = vmul.f32 %v5325, %v3450
    %v5399 = vmul.f32 %v5330, %v3451
    %v5400 = vmul.f32 %v5335, %v3452
    %v5401 = vmul.f32 %v5340, %v3453
    %v5402 = vmul.f32 %v5345, %v3454
    %v5403 = vmul.f32 %v5350, %v3455
    %v5404 = vmul.f32 %v5355, %v3456
    %v5405 = vmul.f32 %v5360, %v3457
    %v5406 = vmul.f32 %v5365, %v3458
    %v5407 = vmul.f32 %v5370, %v3459
    %v5408 = vmul.f32 %v5375, %v3460
    %v5409 = vadd.f32 %v5153, %v5377
    %v5410 = vadd.f32 %v5154, %v5378
    %v5411 = vadd.f32 %v5155, %v5379
    %v5412 = vadd.f32 %v5156, %v5380
    %v5413 = vadd.f32 %v5157, %v5381
    %v5414 = vadd.f32 %v5158, %v5382
    %v5415 = vadd.f32 %v5159, %v5383
    %v5416 = vadd.f32 %v5160, %v5384
    %v5417 = vadd.f32 %v5161, %v5385
    %v5418 = vadd.f32 %v5162, %v5386
    %v5419 = vadd.f32 %v5163, %v5387
    %v5420 = vadd.f32 %v5164, %v5388
    %v5421 = vadd.f32 %v5165, %v5389
    %v5422 = vadd.f32 %v5166, %v5390
    %v5423 = vadd.f32 %v5167, %v5391
    %v5424 = vadd.f32 %v5168, %v5392
    %v5425 = vadd.f32 %v5169, %v5393
    %v5426 = vadd.f32 %v5170, %v5394
    %v5427 = vadd.f32 %v5171, %v5395
    %v5428 = vadd.f32 %v5172, %v5396
    %v5429 = vadd.f32 %v5173, %v5397
    %v5430 = vadd.f32 %v5174, %v5398
    %v5431 = vadd.f32 %v5175, %v5399
    %v5432 = vadd.f32 %v5176, %v5400
    %v5433 = vadd.f32 %v5177, %v5401
    %v5434 = vadd.f32 %v5178, %v5402
    %v5435 = vadd.f32 %v5179, %v5403
    %v5436 = vadd.f32 %v5180, %v5404
    %v5437 = vadd.f32 %v5181, %v5405
    %v5438 = vadd.f32 %v5182, %v5406
    %v5439 = vadd.f32 %v5183, %v5407
    %v5440 = vadd.f32 %v5184, %v5408
    %v5441 = vpack.c.bf16 %v5410, %v5409
    %v5442 = vpack.c.bf16 %v5412, %v5411
    %v5443 = vpack.c.bf16 %v5414, %v5413
    %v5444 = vpack.c.bf16 %v5416, %v5415
    %v5445 = vpack.c.bf16 %v5418, %v5417
    %v5446 = vpack.c.bf16 %v5420, %v5419
    %v5447 = vpack.c.bf16 %v5422, %v5421
    %v5448 = vpack.c.bf16 %v5424, %v5423
    %v5449 = vpack.c.bf16 %v5426, %v5425
    %v5450 = vpack.c.bf16 %v5428, %v5427
    %v5451 = vpack.c.bf16 %v5430, %v5429
    %v5452 = vpack.c.bf16 %v5432, %v5431
    %v5453 = vpack.c.bf16 %v5434, %v5433
    %v5454 = vpack.c.bf16 %v5436, %v5435
    %v5455 = vpack.c.bf16 %v5438, %v5437
    %v5456 = vpack.c.bf16 %v5440, %v5439
    %v5457 = vld [vmem:[%s7] sm:$0xf]
    %v5458 = vld [vmem:[%s7 + $0x4] sm:$0xf]
    %v5459 = vld [vmem:[%s7 + $0x8] sm:$0xf]
    %v5460 = vld [vmem:[%s7 + $0xc] sm:$0xf]
    %v5461 = vld [vmem:[%s7 + $0x10] sm:$0xf]
    %v5462 = vld [vmem:[%s7 + $0x14] sm:$0xf]
    %v5463 = vld [vmem:[%s7 + $0x18] sm:$0xf]
    %v5464 = vld [vmem:[%s7 + $0x1c] sm:$0xf]
    %v5465 = vld [vmem:[%s7 + $0x20] sm:$0xf]
    %v5466 = vld [vmem:[%s7 + $0x24] sm:$0xf]
    %v5467 = vld [vmem:[%s7 + $0x28] sm:$0xf]
    %v5468 = vld [vmem:[%s7 + $0x2c] sm:$0xf]
    %v5469 = vld [vmem:[%s7 + $0x30] sm:$0xf]
    %v5470 = vld [vmem:[%s7 + $0x34] sm:$0xf]
    %v5471 = vld [vmem:[%s7 + $0x38] sm:$0xf]
    %v5472 = vld [vmem:[%s7 + $0x3c] sm:$0xf]
    %v5473 = vld [vmem:[%s8] sm:$0x1]
    %v5475 = vperm.slane %v5473, 0
    %v5493 = vunpack.c.l.b16 %v5457
    %v5494 = vunpack.c.l.b16 %v5458
    %v5495 = vunpack.c.l.b16 %v5459
    %v5496 = vunpack.c.l.b16 %v5460
    %v5497 = vunpack.c.l.b16 %v5461
    %v5498 = vunpack.c.l.b16 %v5462
    %v5499 = vunpack.c.l.b16 %v5463
    %v5500 = vunpack.c.l.b16 %v5464
    %v5501 = vunpack.c.l.b16 %v5465
    %v5502 = vunpack.c.l.b16 %v5466
    %v5503 = vunpack.c.l.b16 %v5467
    %v5504 = vunpack.c.l.b16 %v5468
    %v5505 = vunpack.c.l.b16 %v5469
    %v5506 = vunpack.c.l.b16 %v5470
    %v5507 = vunpack.c.l.b16 %v5471
    %v5508 = vunpack.c.l.b16 %v5472
    %v5509 = vpack.c.b16 %v5494, %v5493
    %v5510 = vpack.c.b16 %v5496, %v5495
    %v5511 = vpack.c.b16 %v5498, %v5497
    %v5512 = vpack.c.b16 %v5500, %v5499
    %v5513 = vpack.c.b16 %v5502, %v5501
    %v5514 = vpack.c.b16 %v5504, %v5503
    %v5515 = vpack.c.b16 %v5506, %v5505
    %v5516 = vpack.c.b16 %v5508, %v5507
    %5525 = vmatpush.bf16.msra.mxu0 %v5516
    %5526 = vmatpush.bf16.msra.mxu0 %v5515
    %5527 = vmatpush.bf16.msra.mxu0 %v5514
    %5528 = vmatpush.bf16.msra.mxu0 %v5513
    %5529 = vmatpush.bf16.msra.mxu0 %v5512
    %5530 = vmatpush.bf16.msra.mxu0 %v5511
    %5531 = vmatpush.bf16.msra.mxu0 %v5510
    %5532 = vmatpush.bf16.msra.mxu0 %v5509
    %5533 = vmatmul.bf16.gmra.mxu0 %v5441
    %v5534 = vpop.f32.mrf.mxu0
    %v5535 = vadd.f32 %v5475, %v5534
    %v5536 = vpop.f32.mrf.mxu0
    %v5537 = vadd.f32 %v5475, %v5536
    %5538 = vmatmul.bf16.gmra.mxu0 %v5442
    %v5539 = vpop.f32.mrf.mxu0
    %v5540 = vadd.f32 %v5475, %v5539
    %v5541 = vpop.f32.mrf.mxu0
    %v5542 = vadd.f32 %v5475, %v5541
    %5543 = vmatmul.bf16.gmra.mxu0 %v5443
    %v5544 = vpop.f32.mrf.mxu0
    %v5545 = vadd.f32 %v5475, %v5544
    %v5546 = vpop.f32.mrf.mxu0
    %v5547 = vadd.f32 %v5475, %v5546
    %5548 = vmatmul.bf16.gmra.mxu0 %v5444
    %v5549 = vpop.f32.mrf.mxu0
    %v5550 = vadd.f32 %v5475, %v5549
    %v5551 = vpop.f32.mrf.mxu0
    %v5552 = vadd.f32 %v5475, %v5551
    %5553 = vmatmul.bf16.gmra.mxu0 %v5445
    %v5554 = vpop.f32.mrf.mxu0
    %v5555 = vadd.f32 %v5475, %v5554
    %v5556 = vpop.f32.mrf.mxu0
    %v5557 = vadd.f32 %v5475, %v5556
    %5558 = vmatmul.bf16.gmra.mxu0 %v5446
    %v5559 = vpop.f32.mrf.mxu0
    %v5560 = vadd.f32 %v5475, %v5559
    %v5561 = vpop.f32.mrf.mxu0
    %v5562 = vadd.f32 %v5475, %v5561
    %5563 = vmatmul.bf16.gmra.mxu0 %v5447
    %v5564 = vpop.f32.mrf.mxu0
    %v5565 = vadd.f32 %v5475, %v5564
    %v5566 = vpop.f32.mrf.mxu0
    %v5567 = vadd.f32 %v5475, %v5566
    %5568 = vmatmul.bf16.gmra.mxu0 %v5448
    %v5569 = vpop.f32.mrf.mxu0
    %v5570 = vadd.f32 %v5475, %v5569
    %v5571 = vpop.f32.mrf.mxu0
    %v5572 = vadd.f32 %v5475, %v5571
    %5573 = vmatmul.bf16.gmra.mxu0 %v5449
    %v5574 = vpop.f32.mrf.mxu0
    %v5575 = vadd.f32 %v5475, %v5574
    %v5576 = vpop.f32.mrf.mxu0
    %v5577 = vadd.f32 %v5475, %v5576
    %5578 = vmatmul.bf16.gmra.mxu0 %v5450
    %v5579 = vpop.f32.mrf.mxu0
    %v5580 = vadd.f32 %v5475, %v5579
    %v5581 = vpop.f32.mrf.mxu0
    %v5582 = vadd.f32 %v5475, %v5581
    %5583 = vmatmul.bf16.gmra.mxu0 %v5451
    %v5584 = vpop.f32.mrf.mxu0
    %v5585 = vadd.f32 %v5475, %v5584
    %v5586 = vpop.f32.mrf.mxu0
    %v5587 = vadd.f32 %v5475, %v5586
    %5588 = vmatmul.bf16.gmra.mxu0 %v5452
    %v5589 = vpop.f32.mrf.mxu0
    %v5590 = vadd.f32 %v5475, %v5589
    %v5591 = vpop.f32.mrf.mxu0
    %v5592 = vadd.f32 %v5475, %v5591
    %5593 = vmatmul.bf16.gmra.mxu0 %v5453
    %v5594 = vpop.f32.mrf.mxu0
    %v5595 = vadd.f32 %v5475, %v5594
    %v5596 = vpop.f32.mrf.mxu0
    %v5597 = vadd.f32 %v5475, %v5596
    %5598 = vmatmul.bf16.gmra.mxu0 %v5454
    %v5599 = vpop.f32.mrf.mxu0
    %v5600 = vadd.f32 %v5475, %v5599
    %v5601 = vpop.f32.mrf.mxu0
    %v5602 = vadd.f32 %v5475, %v5601
    %5603 = vmatmul.bf16.gmra.mxu0 %v5455
    %v5604 = vpop.f32.mrf.mxu0
    %v5605 = vadd.f32 %v5475, %v5604
    %v5606 = vpop.f32.mrf.mxu0
    %v5607 = vadd.f32 %v5475, %v5606
    %5608 = vmatmul.bf16.gmra.mxu0 %v5456
    %v5609 = vpop.f32.mrf.mxu0
    %v5610 = vadd.f32 %v5475, %v5609
    %v5611 = vpop.f32.mrf.mxu0
    %v5612 = vadd.f32 %v5475, %v5611
    %5613 = vdwg.mxu0
    %v5614 = vmax.f32 %v5535, 0.0
    %v5615 = vmax.f32 %v5537, 0.0
    %v5616 = vmax.f32 %v5540, 0.0
    %v5617 = vmax.f32 %v5542, 0.0
    %v5618 = vmax.f32 %v5545, 0.0
    %v5619 = vmax.f32 %v5547, 0.0
    %v5620 = vmax.f32 %v5550, 0.0
    %v5621 = vmax.f32 %v5552, 0.0
    %v5622 = vmax.f32 %v5555, 0.0
    %v5623 = vmax.f32 %v5557, 0.0
    %v5624 = vmax.f32 %v5560, 0.0
    %v5625 = vmax.f32 %v5562, 0.0
    %v5626 = vmax.f32 %v5565, 0.0
    %v5627 = vmax.f32 %v5567, 0.0
    %v5628 = vmax.f32 %v5570, 0.0
    %v5629 = vmax.f32 %v5572, 0.0
    %v5630 = vmax.f32 %v5575, 0.0
    %v5631 = vmax.f32 %v5577, 0.0
    %v5632 = vmax.f32 %v5580, 0.0
    %v5633 = vmax.f32 %v5582, 0.0
    %v5634 = vmax.f32 %v5585, 0.0
    %v5635 = vmax.f32 %v5587, 0.0
    %v5636 = vmax.f32 %v5590, 0.0
    %v5637 = vmax.f32 %v5592, 0.0
    %v5638 = vmax.f32 %v5595, 0.0
    %v5639 = vmax.f32 %v5597, 0.0
    %v5640 = vmax.f32 %v5600, 0.0
    %v5641 = vmax.f32 %v5602, 0.0
    %v5642 = vmax.f32 %v5605, 0.0
    %v5643 = vmax.f32 %v5607, 0.0
    %v5644 = vmax.f32 %v5610, 0.0
    %v5645 = vmax.f32 %v5612, 0.0
    %v5646 = vpack.c.bf16 %v5615, %v5614
    %v5647 = vpack.c.bf16 %v5617, %v5616
    %v5648 = vpack.c.bf16 %v5619, %v5618
    %v5649 = vpack.c.bf16 %v5621, %v5620
    %v5650 = vpack.c.bf16 %v5623, %v5622
    %v5651 = vpack.c.bf16 %v5625, %v5624
    %v5652 = vpack.c.bf16 %v5627, %v5626
    %v5653 = vpack.c.bf16 %v5629, %v5628
    %v5654 = vpack.c.bf16 %v5631, %v5630
    %v5655 = vpack.c.bf16 %v5633, %v5632
    %v5656 = vpack.c.bf16 %v5635, %v5634
    %v5657 = vpack.c.bf16 %v5637, %v5636
    %v5658 = vpack.c.bf16 %v5639, %v5638
    %v5659 = vpack.c.bf16 %v5641, %v5640
    %v5660 = vpack.c.bf16 %v5643, %v5642
    %v5661 = vpack.c.bf16 %v5645, %v5644
    %v5662 = vld [vmem:[%s9] sm:$0xf]
    %v5663 = vld [vmem:[%s9 + $0x4] sm:$0xf]
    %v5664 = vld [vmem:[%s9 + $0x8] sm:$0xf]
    %v5665 = vld [vmem:[%s9 + $0xc] sm:$0xf]
    %v5666 = vld [vmem:[%s9 + $0x10] sm:$0xf]
    %v5667 = vld [vmem:[%s9 + $0x14] sm:$0xf]
    %v5668 = vld [vmem:[%s9 + $0x18] sm:$0xf]
    %v5669 = vld [vmem:[%s9 + $0x1c] sm:$0xf]
    %v5670 = vld [vmem:[%s9 + $0x20] sm:$0xf]
    %v5671 = vld [vmem:[%s9 + $0x24] sm:$0xf]
    %v5672 = vld [vmem:[%s9 + $0x28] sm:$0xf]
    %v5673 = vld [vmem:[%s9 + $0x2c] sm:$0xf]
    %v5674 = vld [vmem:[%s9 + $0x30] sm:$0xf]
    %v5675 = vld [vmem:[%s9 + $0x34] sm:$0xf]
    %v5676 = vld [vmem:[%s9 + $0x38] sm:$0xf]
    %v5677 = vld [vmem:[%s9 + $0x3c] sm:$0xf]
    %v5678 = vld [vmem:[%s10] sm:$0x1]
    %v5680 = vperm.slane %v5678, 0
    %v5698 = vunpack.c.l.b16 %v5662
    %v5699 = vunpack.c.l.b16 %v5663
    %v5700 = vunpack.c.l.b16 %v5664
    %v5701 = vunpack.c.l.b16 %v5665
    %v5702 = vunpack.c.l.b16 %v5666
    %v5703 = vunpack.c.l.b16 %v5667
    %v5704 = vunpack.c.l.b16 %v5668
    %v5705 = vunpack.c.l.b16 %v5669
    %v5706 = vunpack.c.l.b16 %v5670
    %v5707 = vunpack.c.l.b16 %v5671
    %v5708 = vunpack.c.l.b16 %v5672
    %v5709 = vunpack.c.l.b16 %v5673
    %v5710 = vunpack.c.l.b16 %v5674
    %v5711 = vunpack.c.l.b16 %v5675
    %v5712 = vunpack.c.l.b16 %v5676
    %v5713 = vunpack.c.l.b16 %v5677
    %v5714 = vpack.c.b16 %v5699, %v5698
    %v5715 = vpack.c.b16 %v5701, %v5700
    %v5716 = vpack.c.b16 %v5703, %v5702
    %v5717 = vpack.c.b16 %v5705, %v5704
    %v5718 = vpack.c.b16 %v5707, %v5706
    %v5719 = vpack.c.b16 %v5709, %v5708
    %v5720 = vpack.c.b16 %v5711, %v5710
    %v5721 = vpack.c.b16 %v5713, %v5712
    %5730 = vmatpush.bf16.msra.mxu0 %v5721
    %5731 = vmatpush.bf16.msra.mxu0 %v5720
    %5732 = vmatpush.bf16.msra.mxu0 %v5719
    %5733 = vmatpush.bf16.msra.mxu0 %v5718
    %5734 = vmatpush.bf16.msra.mxu0 %v5717
    %5735 = vmatpush.bf16.msra.mxu0 %v5716
    %5736 = vmatpush.bf16.msra.mxu0 %v5715
    %5737 = vmatpush.bf16.msra.mxu0 %v5714
    %5738 = vmatmul.bf16.gmra.mxu0 %v5646
    %v5739 = vpop.f32.mrf.mxu0
    %v5740 = vadd.f32 %v5680, %v5739
    %v5741 = vpop.f32.mrf.mxu0
    %v5742 = vadd.f32 %v5680, %v5741
    %5743 = vmatmul.bf16.gmra.mxu0 %v5647
    %v5744 = vpop.f32.mrf.mxu0
    %v5745 = vadd.f32 %v5680, %v5744
    %v5746 = vpop.f32.mrf.mxu0
    %v5747 = vadd.f32 %v5680, %v5746
    %5748 = vmatmul.bf16.gmra.mxu0 %v5648
    %v5749 = vpop.f32.mrf.mxu0
    %v5750 = vadd.f32 %v5680, %v5749
    %v5751 = vpop.f32.mrf.mxu0
    %v5752 = vadd.f32 %v5680, %v5751
    %5753 = vmatmul.bf16.gmra.mxu0 %v5649
    %v5754 = vpop.f32.mrf.mxu0
    %v5755 = vadd.f32 %v5680, %v5754
    %v5756 = vpop.f32.mrf.mxu0
    %v5757 = vadd.f32 %v5680, %v5756
    %5758 = vmatmul.bf16.gmra.mxu0 %v5650
    %v5759 = vpop.f32.mrf.mxu0
    %v5760 = vadd.f32 %v5680, %v5759
    %v5761 = vpop.f32.mrf.mxu0
    %v5762 = vadd.f32 %v5680, %v5761
    %5763 = vmatmul.bf16.gmra.mxu0 %v5651
    %v5764 = vpop.f32.mrf.mxu0
    %v5765 = vadd.f32 %v5680, %v5764
    %v5766 = vpop.f32.mrf.mxu0
    %v5767 = vadd.f32 %v5680, %v5766
    %5768 = vmatmul.bf16.gmra.mxu0 %v5652
    %v5769 = vpop.f32.mrf.mxu0
    %v5770 = vadd.f32 %v5680, %v5769
    %v5771 = vpop.f32.mrf.mxu0
    %v5772 = vadd.f32 %v5680, %v5771
    %5773 = vmatmul.bf16.gmra.mxu0 %v5653
    %v5774 = vpop.f32.mrf.mxu0
    %v5775 = vadd.f32 %v5680, %v5774
    %v5776 = vpop.f32.mrf.mxu0
    %v5777 = vadd.f32 %v5680, %v5776
    %5778 = vmatmul.bf16.gmra.mxu0 %v5654
    %v5779 = vpop.f32.mrf.mxu0
    %v5780 = vadd.f32 %v5680, %v5779
    %v5781 = vpop.f32.mrf.mxu0
    %v5782 = vadd.f32 %v5680, %v5781
    %5783 = vmatmul.bf16.gmra.mxu0 %v5655
    %v5784 = vpop.f32.mrf.mxu0
    %v5785 = vadd.f32 %v5680, %v5784
    %v5786 = vpop.f32.mrf.mxu0
    %v5787 = vadd.f32 %v5680, %v5786
    %5788 = vmatmul.bf16.gmra.mxu0 %v5656
    %v5789 = vpop.f32.mrf.mxu0
    %v5790 = vadd.f32 %v5680, %v5789
    %v5791 = vpop.f32.mrf.mxu0
    %v5792 = vadd.f32 %v5680, %v5791
    %5793 = vmatmul.bf16.gmra.mxu0 %v5657
    %v5794 = vpop.f32.mrf.mxu0
    %v5795 = vadd.f32 %v5680, %v5794
    %v5796 = vpop.f32.mrf.mxu0
    %v5797 = vadd.f32 %v5680, %v5796
    %5798 = vmatmul.bf16.gmra.mxu0 %v5658
    %v5799 = vpop.f32.mrf.mxu0
    %v5800 = vadd.f32 %v5680, %v5799
    %v5801 = vpop.f32.mrf.mxu0
    %v5802 = vadd.f32 %v5680, %v5801
    %5803 = vmatmul.bf16.gmra.mxu0 %v5659
    %v5804 = vpop.f32.mrf.mxu0
    %v5805 = vadd.f32 %v5680, %v5804
    %v5806 = vpop.f32.mrf.mxu0
    %v5807 = vadd.f32 %v5680, %v5806
    %5808 = vmatmul.bf16.gmra.mxu0 %v5660
    %v5809 = vpop.f32.mrf.mxu0
    %v5810 = vadd.f32 %v5680, %v5809
    %v5811 = vpop.f32.mrf.mxu0
    %v5812 = vadd.f32 %v5680, %v5811
    %5813 = vmatmul.bf16.gmra.mxu0 %v5661
    %v5814 = vpop.f32.mrf.mxu0
    %v5815 = vadd.f32 %v5680, %v5814
    %v5816 = vpop.f32.mrf.mxu0
    %v5817 = vadd.f32 %v5680, %v5816
    %5818 = vdwg.mxu0
    %v5819 = vmax.f32 %v5740, 0.0
    %v5820 = vmax.f32 %v5742, 0.0
    %v5821 = vmax.f32 %v5745, 0.0
    %v5822 = vmax.f32 %v5747, 0.0
    %v5823 = vmax.f32 %v5750, 0.0
    %v5824 = vmax.f32 %v5752, 0.0
    %v5825 = vmax.f32 %v5755, 0.0
    %v5826 = vmax.f32 %v5757, 0.0
    %v5827 = vmax.f32 %v5760, 0.0
    %v5828 = vmax.f32 %v5762, 0.0
    %v5829 = vmax.f32 %v5765, 0.0
    %v5830 = vmax.f32 %v5767, 0.0
    %v5831 = vmax.f32 %v5770, 0.0
    %v5832 = vmax.f32 %v5772, 0.0
    %v5833 = vmax.f32 %v5775, 0.0
    %v5834 = vmax.f32 %v5777, 0.0
    %v5835 = vmax.f32 %v5780, 0.0
    %v5836 = vmax.f32 %v5782, 0.0
    %v5837 = vmax.f32 %v5785, 0.0
    %v5838 = vmax.f32 %v5787, 0.0
    %v5839 = vmax.f32 %v5790, 0.0
    %v5840 = vmax.f32 %v5792, 0.0
    %v5841 = vmax.f32 %v5795, 0.0
    %v5842 = vmax.f32 %v5797, 0.0
    %v5843 = vmax.f32 %v5800, 0.0
    %v5844 = vmax.f32 %v5802, 0.0
    %v5845 = vmax.f32 %v5805, 0.0
    %v5846 = vmax.f32 %v5807, 0.0
    %v5847 = vmax.f32 %v5810, 0.0
    %v5848 = vmax.f32 %v5812, 0.0
    %v5849 = vmax.f32 %v5815, 0.0
    %v5850 = vmax.f32 %v5817, 0.0
    %v5851 = vpack.c.bf16 %v5820, %v5819
    %v5852 = vpack.c.bf16 %v5822, %v5821
    %v5853 = vpack.c.bf16 %v5824, %v5823
    %v5854 = vpack.c.bf16 %v5826, %v5825
    %v5855 = vpack.c.bf16 %v5828, %v5827
    %v5856 = vpack.c.bf16 %v5830, %v5829
    %v5857 = vpack.c.bf16 %v5832, %v5831
    %v5858 = vpack.c.bf16 %v5834, %v5833
    %v5859 = vpack.c.bf16 %v5836, %v5835
    %v5860 = vpack.c.bf16 %v5838, %v5837
    %v5861 = vpack.c.bf16 %v5840, %v5839
    %v5862 = vpack.c.bf16 %v5842, %v5841
    %v5863 = vpack.c.bf16 %v5844, %v5843
    %v5864 = vpack.c.bf16 %v5846, %v5845
    %v5865 = vpack.c.bf16 %v5848, %v5847
    %v5866 = vpack.c.bf16 %v5850, %v5849
    %v5867 = vld [vmem:[%s11] sm:$0xff]
    %v5868 = vld [vmem:[%s11 + $0x8] sm:$0xff]
    %v5869 = vld [vmem:[%s11 + $0x10] sm:$0xff]
    %v5870 = vld [vmem:[%s11 + $0x18] sm:$0xff]
    %v5871 = vld [vmem:[%s11 + $0x20] sm:$0xff]
    %v5872 = vld [vmem:[%s11 + $0x28] sm:$0xff]
    %v5873 = vld [vmem:[%s11 + $0x30] sm:$0xff]
    %v5874 = vld [vmem:[%s11 + $0x38] sm:$0xff]
    %v5875 = vld [vmem:[%s11 + $0x40] sm:$0xff]
    %v5876 = vld [vmem:[%s11 + $0x48] sm:$0xff]
    %v5877 = vld [vmem:[%s11 + $0x50] sm:$0xff]
    %v5878 = vld [vmem:[%s11 + $0x58] sm:$0xff]
    %v5879 = vld [vmem:[%s11 + $0x60] sm:$0xff]
    %v5880 = vld [vmem:[%s11 + $0x68] sm:$0xff]
    %v5881 = vld [vmem:[%s11 + $0x70] sm:$0xff]
    %v5882 = vld [vmem:[%s11 + $0x78] sm:$0xff]
    %v5883 = vld [vmem:[%s12] sm:$0x3]
    %v5885 = vperm.slane %v5883, 0
    %v5886 = vperm.slane %v5883, 1
    %v5905 = vunpack.c.l.b16 %v5867
    %v5906 = vunpack.c.h.b16 %v5867
    %v5907 = vunpack.c.l.b16 %v5868
    %v5908 = vunpack.c.h.b16 %v5868
    %v5909 = vunpack.c.l.b16 %v5869
    %v5910 = vunpack.c.h.b16 %v5869
    %v5911 = vunpack.c.l.b16 %v5870
    %v5912 = vunpack.c.h.b16 %v5870
    %v5913 = vunpack.c.l.b16 %v5871
    %v5914 = vunpack.c.h.b16 %v5871
    %v5915 = vunpack.c.l.b16 %v5872
    %v5916 = vunpack.c.h.b16 %v5872
    %v5917 = vunpack.c.l.b16 %v5873
    %v5918 = vunpack.c.h.b16 %v5873
    %v5919 = vunpack.c.l.b16 %v5874
    %v5920 = vunpack.c.h.b16 %v5874
    %v5921 = vunpack.c.l.b16 %v5875
    %v5922 = vunpack.c.h.b16 %v5875
    %v5923 = vunpack.c.l.b16 %v5876
    %v5924 = vunpack.c.h.b16 %v5876
    %v5925 = vunpack.c.l.b16 %v5877
    %v5926 = vunpack.c.h.b16 %v5877
    %v5927 = vunpack.c.l.b16 %v5878
    %v5928 = vunpack.c.h.b16 %v5878
    %v5929 = vunpack.c.l.b16 %v5879
    %v5930 = vunpack.c.h.b16 %v5879
    %v5931 = vunpack.c.l.b16 %v5880
    %v5932 = vunpack.c.h.b16 %v5880
    %v5933 = vunpack.c.l.b16 %v5881
    %v5934 = vunpack.c.h.b16 %v5881
    %v5935 = vunpack.c.l.b16 %v5882
    %v5936 = vunpack.c.h.b16 %v5882
    %v5937 = vpack.c.b16 %v5907, %v5905
    %v5938 = vpack.c.b16 %v5908, %v5906
    %v5939 = vpack.c.b16 %v5911, %v5909
    %v5940 = vpack.c.b16 %v5912, %v5910
    %v5941 = vpack.c.b16 %v5915, %v5913
    %v5942 = vpack.c.b16 %v5916, %v5914
    %v5943 = vpack.c.b16 %v5919, %v5917
    %v5944 = vpack.c.b16 %v5920, %v5918
    %v5945 = vpack.c.b16 %v5923, %v5921
    %v5946 = vpack.c.b16 %v5924, %v5922
    %v5947 = vpack.c.b16 %v5927, %v5925
    %v5948 = vpack.c.b16 %v5928, %v5926
    %v5949 = vpack.c.b16 %v5931, %v5929
    %v5950 = vpack.c.b16 %v5932, %v5930
    %v5951 = vpack.c.b16 %v5935, %v5933
    %v5952 = vpack.c.b16 %v5936, %v5934
    %5969 = vmatpush.bf16.msra.mxu0 %v5951
    %5970 = vmatpush.bf16.msra.mxu0 %v5949
    %5971 = vmatpush.bf16.msra.mxu0 %v5947
    %5972 = vmatpush.bf16.msra.mxu0 %v5945
    %5973 = vmatpush.bf16.msra.mxu0 %v5943
    %5974 = vmatpush.bf16.msra.mxu0 %v5941
    %5975 = vmatpush.bf16.msra.mxu0 %v5939
    %5976 = vmatpush.bf16.msra.mxu0 %v5937
    %5977 = vmatmul.bf16.gmra.mxu0 %v5851
    %v5978 = vpop.f32.mrf.mxu0
    %v5979 = vadd.f32 %v5885, %v5978
    %v5980 = vpop.f32.mrf.mxu0
    %v5981 = vadd.f32 %v5885, %v5980
    %5982 = vmatmul.bf16.gmra.mxu0 %v5852
    %v5983 = vpop.f32.mrf.mxu0
    %v5984 = vadd.f32 %v5885, %v5983
    %v5985 = vpop.f32.mrf.mxu0
    %v5986 = vadd.f32 %v5885, %v5985
    %5987 = vmatmul.bf16.gmra.mxu0 %v5853
    %v5988 = vpop.f32.mrf.mxu0
    %v5989 = vadd.f32 %v5885, %v5988
    %v5990 = vpop.f32.mrf.mxu0
    %v5991 = vadd.f32 %v5885, %v5990
    %5992 = vmatmul.bf16.gmra.mxu0 %v5854
    %v5993 = vpop.f32.mrf.mxu0
    %v5994 = vadd.f32 %v5885, %v5993
    %v5995 = vpop.f32.mrf.mxu0
    %v5996 = vadd.f32 %v5885, %v5995
    %5997 = vmatmul.bf16.gmra.mxu0 %v5855
    %v5998 = vpop.f32.mrf.mxu0
    %v5999 = vadd.f32 %v5885, %v5998
    %v6000 = vpop.f32.mrf.mxu0
    %v6001 = vadd.f32 %v5885, %v6000
    %6002 = vmatmul.bf16.gmra.mxu0 %v5856
    %v6003 = vpop.f32.mrf.mxu0
    %v6004 = vadd.f32 %v5885, %v6003
    %v6005 = vpop.f32.mrf.mxu0
    %v6006 = vadd.f32 %v5885, %v6005
    %6007 = vmatmul.bf16.gmra.mxu0 %v5857
    %v6008 = vpop.f32.mrf.mxu0
    %v6009 = vadd.f32 %v5885, %v6008
    %v6010 = vpop.f32.mrf.mxu0
    %v6011 = vadd.f32 %v5885, %v6010
    %6012 = vmatmul.bf16.gmra.mxu0 %v5858
    %v6013 = vpop.f32.mrf.mxu0
    %v6014 = vadd.f32 %v5885, %v6013
    %v6015 = vpop.f32.mrf.mxu0
    %v6016 = vadd.f32 %v5885, %v6015
    %6017 = vmatmul.bf16.gmra.mxu0 %v5859
    %v6018 = vpop.f32.mrf.mxu0
    %v6019 = vadd.f32 %v5885, %v6018
    %v6020 = vpop.f32.mrf.mxu0
    %v6021 = vadd.f32 %v5885, %v6020
    %6022 = vmatmul.bf16.gmra.mxu0 %v5860
    %v6023 = vpop.f32.mrf.mxu0
    %v6024 = vadd.f32 %v5885, %v6023
    %v6025 = vpop.f32.mrf.mxu0
    %v6026 = vadd.f32 %v5885, %v6025
    %6027 = vmatmul.bf16.gmra.mxu0 %v5861
    %v6028 = vpop.f32.mrf.mxu0
    %v6029 = vadd.f32 %v5885, %v6028
    %v6030 = vpop.f32.mrf.mxu0
    %v6031 = vadd.f32 %v5885, %v6030
    %6032 = vmatmul.bf16.gmra.mxu0 %v5862
    %v6033 = vpop.f32.mrf.mxu0
    %v6034 = vadd.f32 %v5885, %v6033
    %v6035 = vpop.f32.mrf.mxu0
    %v6036 = vadd.f32 %v5885, %v6035
    %6037 = vmatmul.bf16.gmra.mxu0 %v5863
    %v6038 = vpop.f32.mrf.mxu0
    %v6039 = vadd.f32 %v5885, %v6038
    %v6040 = vpop.f32.mrf.mxu0
    %v6041 = vadd.f32 %v5885, %v6040
    %6042 = vmatmul.bf16.gmra.mxu0 %v5864
    %v6043 = vpop.f32.mrf.mxu0
    %v6044 = vadd.f32 %v5885, %v6043
    %v6045 = vpop.f32.mrf.mxu0
    %v6046 = vadd.f32 %v5885, %v6045
    %6047 = vmatmul.bf16.gmra.mxu0 %v5865
    %v6048 = vpop.f32.mrf.mxu0
    %v6049 = vadd.f32 %v5885, %v6048
    %v6050 = vpop.f32.mrf.mxu0
    %v6051 = vadd.f32 %v5885, %v6050
    %6052 = vmatmul.bf16.gmra.mxu0 %v5866
    %v6053 = vpop.f32.mrf.mxu0
    %v6054 = vadd.f32 %v5885, %v6053
    %v6055 = vpop.f32.mrf.mxu0
    %v6056 = vadd.f32 %v5885, %v6055
    %6057 = vdwg.mxu0
    %6058 = vmatpush.bf16.msra.mxu0 %v5952
    %6059 = vmatpush.bf16.msra.mxu0 %v5950
    %6060 = vmatpush.bf16.msra.mxu0 %v5948
    %6061 = vmatpush.bf16.msra.mxu0 %v5946
    %6062 = vmatpush.bf16.msra.mxu0 %v5944
    %6063 = vmatpush.bf16.msra.mxu0 %v5942
    %6064 = vmatpush.bf16.msra.mxu0 %v5940
    %6065 = vmatpush.bf16.msra.mxu0 %v5938
    %6066 = vmatmul.bf16.gmra.mxu0 %v5851
    %v6067 = vpop.f32.mrf.mxu0
    %v6068 = vadd.f32 %v5886, %v6067
    %v6069 = vpop.f32.mrf.mxu0
    %v6070 = vadd.f32 %v5886, %v6069
    %6071 = vmatmul.bf16.gmra.mxu0 %v5852
    %v6072 = vpop.f32.mrf.mxu0
    %v6073 = vadd.f32 %v5886, %v6072
    %v6074 = vpop.f32.mrf.mxu0
    %v6075 = vadd.f32 %v5886, %v6074
    %6076 = vmatmul.bf16.gmra.mxu0 %v5853
    %v6077 = vpop.f32.mrf.mxu0
    %v6078 = vadd.f32 %v5886, %v6077
    %v6079 = vpop.f32.mrf.mxu0
    %v6080 = vadd.f32 %v5886, %v6079
    %6081 = vmatmul.bf16.gmra.mxu0 %v5854
    %v6082 = vpop.f32.mrf.mxu0
    %v6083 = vadd.f32 %v5886, %v6082
    %v6084 = vpop.f32.mrf.mxu0
    %v6085 = vadd.f32 %v5886, %v6084
    %6086 = vmatmul.bf16.gmra.mxu0 %v5855
    %v6087 = vpop.f32.mrf.mxu0
    %v6088 = vadd.f32 %v5886, %v6087
    %v6089 = vpop.f32.mrf.mxu0
    %v6090 = vadd.f32 %v5886, %v6089
    %6091 = vmatmul.bf16.gmra.mxu0 %v5856
    %v6092 = vpop.f32.mrf.mxu0
    %v6093 = vadd.f32 %v5886, %v6092
    %v6094 = vpop.f32.mrf.mxu0
    %v6095 = vadd.f32 %v5886, %v6094
    %6096 = vmatmul.bf16.gmra.mxu0 %v5857
    %v6097 = vpop.f32.mrf.mxu0
    %v6098 = vadd.f32 %v5886, %v6097
    %v6099 = vpop.f32.mrf.mxu0
    %v6100 = vadd.f32 %v5886, %v6099
    %6101 = vmatmul.bf16.gmra.mxu0 %v5858
    %v6102 = vpop.f32.mrf.mxu0
    %v6103 = vadd.f32 %v5886, %v6102
    %v6104 = vpop.f32.mrf.mxu0
    %v6105 = vadd.f32 %v5886, %v6104
    %6106 = vmatmul.bf16.gmra.mxu0 %v5859
    %v6107 = vpop.f32.mrf.mxu0
    %v6108 = vadd.f32 %v5886, %v6107
    %v6109 = vpop.f32.mrf.mxu0
    %v6110 = vadd.f32 %v5886, %v6109
    %6111 = vmatmul.bf16.gmra.mxu0 %v5860
    %v6112 = vpop.f32.mrf.mxu0
    %v6113 = vadd.f32 %v5886, %v6112
    %v6114 = vpop.f32.mrf.mxu0
    %v6115 = vadd.f32 %v5886, %v6114
    %6116 = vmatmul.bf16.gmra.mxu0 %v5861
    %v6117 = vpop.f32.mrf.mxu0
    %v6118 = vadd.f32 %v5886, %v6117
    %v6119 = vpop.f32.mrf.mxu0
    %v6120 = vadd.f32 %v5886, %v6119
    %6121 = vmatmul.bf16.gmra.mxu0 %v5862
    %v6122 = vpop.f32.mrf.mxu0
    %v6123 = vadd.f32 %v5886, %v6122
    %v6124 = vpop.f32.mrf.mxu0
    %v6125 = vadd.f32 %v5886, %v6124
    %6126 = vmatmul.bf16.gmra.mxu0 %v5863
    %v6127 = vpop.f32.mrf.mxu0
    %v6128 = vadd.f32 %v5886, %v6127
    %v6129 = vpop.f32.mrf.mxu0
    %v6130 = vadd.f32 %v5886, %v6129
    %6131 = vmatmul.bf16.gmra.mxu0 %v5864
    %v6132 = vpop.f32.mrf.mxu0
    %v6133 = vadd.f32 %v5886, %v6132
    %v6134 = vpop.f32.mrf.mxu0
    %v6135 = vadd.f32 %v5886, %v6134
    %6136 = vmatmul.bf16.gmra.mxu0 %v5865
    %v6137 = vpop.f32.mrf.mxu0
    %v6138 = vadd.f32 %v5886, %v6137
    %v6139 = vpop.f32.mrf.mxu0
    %v6140 = vadd.f32 %v5886, %v6139
    %6141 = vmatmul.bf16.gmra.mxu0 %v5866
    %v6142 = vpop.f32.mrf.mxu0
    %v6143 = vadd.f32 %v5886, %v6142
    %v6144 = vpop.f32.mrf.mxu0
    %v6145 = vadd.f32 %v5886, %v6144
    %6146 = vdwg.mxu0
    %v6147 = vpack.c.bf16 %v6068, %v5979
    %v6148 = vpack.c.bf16 %v6070, %v5981
    %v6149 = vpack.c.bf16 %v6073, %v5984
    %v6150 = vpack.c.bf16 %v6075, %v5986
    %v6151 = vpack.c.bf16 %v6078, %v5989
    %v6152 = vpack.c.bf16 %v6080, %v5991
    %v6153 = vpack.c.bf16 %v6083, %v5994
    %v6154 = vpack.c.bf16 %v6085, %v5996
    %v6155 = vpack.c.bf16 %v6088, %v5999
    %v6156 = vpack.c.bf16 %v6090, %v6001
    %v6157 = vpack.c.bf16 %v6093, %v6004
    %v6158 = vpack.c.bf16 %v6095, %v6006
    %v6159 = vpack.c.bf16 %v6098, %v6009
    %v6160 = vpack.c.bf16 %v6100, %v6011
    %v6161 = vpack.c.bf16 %v6103, %v6014
    %v6162 = vpack.c.bf16 %v6105, %v6016
    %v6163 = vpack.c.bf16 %v6108, %v6019
    %v6164 = vpack.c.bf16 %v6110, %v6021
    %v6165 = vpack.c.bf16 %v6113, %v6024
    %v6166 = vpack.c.bf16 %v6115, %v6026
    %v6167 = vpack.c.bf16 %v6118, %v6029
    %v6168 = vpack.c.bf16 %v6120, %v6031
    %v6169 = vpack.c.bf16 %v6123, %v6034
    %v6170 = vpack.c.bf16 %v6125, %v6036
    %v6171 = vpack.c.bf16 %v6128, %v6039
    %v6172 = vpack.c.bf16 %v6130, %v6041
    %v6173 = vpack.c.bf16 %v6133, %v6044
    %v6174 = vpack.c.bf16 %v6135, %v6046
    %v6175 = vpack.c.bf16 %v6138, %v6049
    %v6176 = vpack.c.bf16 %v6140, %v6051
    %v6177 = vpack.c.bf16 %v6143, %v6054
    %v6178 = vpack.c.bf16 %v6145, %v6056
    %6179 = vst [vmem:[#allocation3] sm:$0xff] %v6147
    %6180 = vst [vmem:[#allocation3 + $0x8] sm:$0xff] %v6148
    %6181 = vst [vmem:[#allocation3 + $0x10] sm:$0xff] %v6149
    %6182 = vst [vmem:[#allocation3 + $0x18] sm:$0xff] %v6150
    %6183 = vst [vmem:[#allocation3 + $0x20] sm:$0xff] %v6151
    %6184 = vst [vmem:[#allocation3 + $0x28] sm:$0xff] %v6152
    %6185 = vst [vmem:[#allocation3 + $0x30] sm:$0xff] %v6153
    %6186 = vst [vmem:[#allocation3 + $0x38] sm:$0xff] %v6154
    %6187 = vst [vmem:[#allocation3 + $0x40] sm:$0xff] %v6155
    %6188 = vst [vmem:[#allocation3 + $0x48] sm:$0xff] %v6156
    %6189 = vst [vmem:[#allocation3 + $0x50] sm:$0xff] %v6157
    %6190 = vst [vmem:[#allocation3 + $0x58] sm:$0xff] %v6158
    %6191 = vst [vmem:[#allocation3 + $0x60] sm:$0xff] %v6159
    %6192 = vst [vmem:[#allocation3 + $0x68] sm:$0xff] %v6160
    %6193 = vst [vmem:[#allocation3 + $0x70] sm:$0xff] %v6161
    %6194 = vst [vmem:[#allocation3 + $0x78] sm:$0xff] %v6162
    %6195 = vst [vmem:[#allocation3 + $0x80] sm:$0xff] %v6163
    %6196 = vst [vmem:[#allocation3 + $0x88] sm:$0xff] %v6164
    %6197 = vst [vmem:[#allocation3 + $0x90] sm:$0xff] %v6165
    %6198 = vst [vmem:[#allocation3 + $0x98] sm:$0xff] %v6166
    %6199 = vst [vmem:[#allocation3 + $0xa0] sm:$0xff] %v6167
    %6200 = vst [vmem:[#allocation3 + $0xa8] sm:$0xff] %v6168
    %6201 = vst [vmem:[#allocation3 + $0xb0] sm:$0xff] %v6169
    %6202 = vst [vmem:[#allocation3 + $0xb8] sm:$0xff] %v6170
    %6203 = vst [vmem:[#allocation3 + $0xc0] sm:$0xff] %v6171
    %6204 = vst [vmem:[#allocation3 + $0xc8] sm:$0xff] %v6172
    %6205 = vst [vmem:[#allocation3 + $0xd0] sm:$0xff] %v6173
    %6206 = vst [vmem:[#allocation3 + $0xd8] sm:$0xff] %v6174
    %6207 = vst [vmem:[#allocation3 + $0xe0] sm:$0xff] %v6175
    %6208 = vst [vmem:[#allocation3 + $0xe8] sm:$0xff] %v6176
    %6209 = vst [vmem:[#allocation3 + $0xf0] sm:$0xff] %v6177
    %6210 = vst [vmem:[#allocation3 + $0xf8] sm:$0xff] %v6178
    // Predicated region
    $region114: #{full_model_forward.1} parent=1 // pred_check
      _
    $region115: #{full_model_forward.1} parent=1 // pred_check_branch
      %6212 = sbr.rel (0) target = $region117
    $region116: #{full_model_forward.1} parent=1 // pred_region
      %6214 = vsyncadd [#allocation4], 0
      %s6215 = sshll.u32 [#allocation3], 4
      %s6216 = int_to_ptr.vmem [resolvable:$true] %s6215
      %s6217 = sshll.u32 %s28, 4
      %s6218 = int_to_ptr.hbm [resolvable:$true] %s6217
      %6223 = dma.vmem_to_hbm [thread:$0]  %s6216, 4096, %s6218, [#allocation4], 128, 128, 8
    $region117: #{full_model_forward.1} parent=1 // pred_fallthru
      _
    // Predicated region
    $region118: #{full_model_forward.1} parent=1 // pred_check
      _
    $region119: #{full_model_forward.1} parent=1 // pred_check_branch
      %6225 = sbr.rel (0) target = $region121
    $region120: #{full_model_forward.1} parent=1 // pred_region
      %6227 = dma.done [#allocation4], 4096
    $region121: #{full_model_forward.1} parent=1 // pred_fallthru
      _
    %6228 = vsyncpa [#allocation4], 1

</llo_original>
